<compile_context>
chip_gen: v5e
topology: v5e:2x2
jax: 0.10.0
libtpu: 0.0.40
codegen_flags: <defaults>
</compile_context>

<pallas_src>
import math

import numpy as np
import jax
import jax.numpy as jnp
from jax import lax
from jax.experimental import pallas as pl
from jax.experimental.pallas import tpu as pltpu

# 3x3x3 kernel offsets, (df, dh, dw) with df outermost -> matches OIDHW weight layout.
OFFSETS = [(df, dh, dw) for df in (-1, 0, 1) for dh in (-1, 0, 1) for dw in (-1, 0, 1)]
CENTER = 13  # index of (0, 0, 0)


# ------------------------------- fused Pallas kernel ------------------------------

def _make_kernel(C, F, H, W, B_blk, layout):
    HW = H * W
    L = F * HW
    LL = B_blk * L                      # lanes per grid step (lane-stacked batch)
    G = B_blk * F                       # "global frames" = (sample, frame) pairs
    Gpad = ((G + 7) // 8) * 8
    lo = layout
    TBW = lo['tbw']

    def kernel(x_ref, tab_ref, lanes_ref, w_ref, small_ref, o_ref, col_ref):
        f32 = jnp.float32
        x = x_ref[0]                                     # (C, LL) residual / conv1 input
        sel = lanes_ref[0:G, :]                          # (G, LL) frame selector
        eye = small_ref[0:G, lo['eye']:lo['eye'] + G]    # (G, G) identity
        bd = small_ref[0:G, lo['bd']:lo['bd'] + G]       # (G, G) block-diag (per sample)

        def c2r(col):                                    # (G,1) -> (1,G) w/o transpose
            return jnp.sum(col * eye, axis=0, keepdims=True)

        def shift_lanes(a, s):                           # out[:, p] = a[:, (p + s) % LL]
            k = s % LL
            if k == 0:
                return a
            return jnp.concatenate([a[:, k:], a[:, :k]], axis=1)

        def conv3x3x3(src, w_row0, bias_col):
            # im2col: 27 shifted+masked copies of src stacked along sublanes,
            # then a single (C, 27C) @ (27C, LL) MXU matmul.
            for o, (df, dh, dw) in enumerate(OFFSETS):
                s = df * HW + dh * W + dw
                slab = shift_lanes(src, s)               # circular; invalid lanes masked
                if o != CENTER:
                    slab = slab * lanes_ref[Gpad + o:Gpad + o + 1, :]
                col_ref[o * C:(o + 1) * C, :] = slab
            w = w_ref[w_row0:w_row0 + C, :]              # (C, 27C) folded weights
            return jnp.dot(w, col_ref[...], preferred_element_type=f32) + bias_col

        # ---- conv1 + folded BN + ReLU ----------------------------------------------
        b1 = small_ref[0:C, lo['b1']:lo['b1'] + 1]
        h1 = jnp.maximum(conv3x3x3(x, 0, b1), 0.0)       # (C, LL)

        # ---- TemporalGate: per-(sample,frame) avg/max pool + tab embedding + MHSA ---
        ch_sum = jnp.sum(h1, axis=0, keepdims=True)      # (1, LL)
        ch_max = jnp.max(h1, axis=0, keepdims=True)      # (1, LL)
        avg_col = jnp.sum(sel * ch_sum, axis=1, keepdims=True) * (1.0 / (C * HW))  # (G,1)
        max_col = jnp.max(jnp.where(sel > 0.5, ch_max, -jnp.inf),
                          axis=1, keepdims=True)         # (G, 1)
        tw = small_ref[0:G, lo['tw']:lo['tw'] + TBW]     # block-diag tab embedding weight
        tb = small_ref[0:G, lo['tb']:lo['tb'] + 1]
        emb_col = jnp.maximum(
            jnp.sum(tw * tab_ref[0], axis=1, keepdims=True) + tb, 0.0)             # (G,1)

        wqv = small_ref[0:3, lo['wqv']:lo['wqv'] + 8]
        bqv = small_ref[0:1, lo['bqv']:lo['bqv'] + 8]
        wk = small_ref[0:4, lo['wk']:lo['wk'] + 3]
        bk = small_ref[0:4, lo['bk']:lo['bk'] + 1]
        rel = small_ref[0:1, lo['rel']:lo['rel'] + G]
        ow = small_ref[0:1, lo['ow']:lo['ow'] + 4]
        ob = small_ref[0:1, lo['ob']:lo['ob'] + 1]

        # qkv linear over input order [avg, max, emb]; q/v token-major, k feature-major.
        qv = (avg_col * wqv[0:1, :] + max_col * wqv[1:2, :]
              + emb_col * wqv[2:3, :] + bqv)             # (G, 8) = [q0,q1,v0,v1] x 2 heads
        kT = (wk[:, 0:1] * c2r(avg_col) + wk[:, 1:2] * c2r(max_col)
              + wk[:, 2:3] * c2r(emb_col) + bk + rel)    # (4, G)

        inv_sqrt_d = 1.0 / math.sqrt(2.0)                # head_dim = 2
        att = jnp.zeros((G, 1), f32)
        for hh in range(2):                              # 2 heads
            q0 = qv[:, 4 * hh + 0:4 * hh + 1]
            q1 = qv[:, 4 * hh + 1:4 * hh + 2]
            v0 = qv[:, 4 * hh + 2:4 * hh + 3]
            v1 = qv[:, 4 * hh + 3:4 * hh + 4]
            k0 = kT[2 * hh + 0:2 * hh + 1, :]
            k1 = kT[2 * hh + 1:2 * hh + 2, :]
            logits = (q0 * k0 + q1 * k1) * inv_sqrt_d    # (G, G)
            logits = jnp.where(bd > 0.5, logits, -1e30)  # block-diagonal over samples
            logits = logits - jnp.max(logits, axis=1, keepdims=True)
            e = jnp.exp(logits)
            attn = e / jnp.sum(e, axis=1, keepdims=True)
            val0 = jnp.sum(attn * c2r(v0), axis=1, keepdims=True)
            val1 = jnp.sum(attn * c2r(v1), axis=1, keepdims=True)
            att = (att + val0 * ow[:, 2 * hh:2 * hh + 1]
                   + val1 * ow[:, 2 * hh + 1:2 * hh + 2])
        gate_col = jax.nn.sigmoid(att + ob)                        # (G, 1)
        gate_row = jnp.sum(gate_col * sel, axis=0, keepdims=True)  # (1, LL)

        # ---- gate, conv2 + folded BN, residual add, ReLU -----------------------------
        b2 = small_ref[0:C, lo['b2']:lo['b2'] + 1]
        o_ref[0] = jnp.maximum(conv3x3x3(h1 * gate_row, C, b2) + x, 0.0)

    return kernel


# ------------------------------- wrapper -------------------------------------------

def fold_bn(gamma, beta, mean, var, eps=1e-5):
    s = gamma / jnp.sqrt(var + eps)
    return s, beta - mean * s


def _lane_consts(F, H, W, B_blk):
    """Frame selector (Gpad,LL), conv validity masks (27,LL), block-diag / identity."""
    HW = H * W
    L = F * HW
    LL = B_blk * L
    G = B_blk * F
    Gpad = ((G + 7) // 8) * 8
    gidx = np.arange(LL) // HW
    sel = (gidx[None, :] == np.arange(G)[:, None]).astype(np.float32)
    sel = np.concatenate([sel, np.zeros((Gpad - G, LL), np.float32)], axis=0)
    f_i, h_i, w_i = np.meshgrid(np.arange(F), np.arange(H), np.arange(W), indexing='ij')
    f_i, h_i, w_i = f_i.reshape(L), h_i.reshape(L), w_i.reshape(L)
    masks = np.zeros((27, L), np.float32)
    for o, (df, dh, dw) in enumerate(OFFSETS):
        valid = ((f_i + df >= 0) & (f_i + df < F)
                 & (h_i + dh >= 0) & (h_i + dh < H)
                 & (w_i + dw >= 0) & (w_i + dw < W))
        masks[o] = valid.astype(np.float32)
    masks = np.tile(masks, (1, B_blk))
    lanes_const = np.concatenate([sel, masks], axis=0)        # (Gpad + 27, LL)
    g = np.arange(G)
    bd = (g[:, None] // F == g[None, :] // F).astype(np.float32)
    eye = np.eye(G, dtype=np.float32)
    return jnp.asarray(lanes_const), jnp.asarray(bd), jnp.asarray(eye)


def basic_block_forward(x, tab, p, block_batch=2):
    """Pallas-backed BasicBlock+CBAM forward.  x: (N,C,F,H,W) f32, tab: (N,n_tab) f32."""
    N, C, F, H, W = x.shape
    planes = p['w1'].shape[0]
    n_tab = tab.shape[-1]
    assert planes == C, "identity residual requires inplanes == planes"
    HW = H * W
    L = F * HW
    assert L % 128 == 0 and C % 8 == 0, "tile assumptions: F*H*W % 128 == 0, C % 8 == 0"

    # Batch blocking: lane-stack B_blk samples per grid step, keep >= 2 grid steps
    # (both v7x TensorCores) whenever N >= 2.
    B_blk = max(1, min(block_batch, N // 2)) if N >= 2 else 1
    while N % B_blk:
        B_blk -= 1
    NB = N // B_blk
    LL = B_blk * L
    G = B_blk * F
    TBW = B_blk * n_tab

    # Fold BN scale into the conv weights; keep only a per-channel bias.
    s1, b1 = fold_bn(p['bn1_gamma'], p['bn1_beta'], p['bn1_mean'], p['bn1_var'])
    s2, b2 = fold_bn(p['bn2_gamma'], p['bn2_beta'], p['bn2_mean'], p['bn2_var'])
    w1f = jnp.transpose(p['w1'] * s1[:, None, None, None, None],
                        (0, 2, 3, 4, 1)).reshape(planes, 27 * C)
    w2f = jnp.transpose(p['w2'] * s2[:, None, None, None, None],
                        (0, 2, 3, 4, 1)).reshape(planes, 27 * planes)
    wconst = jnp.concatenate([w1f, w2f], axis=0)                  # (2C, 27C) lane-dense

    lanes_const, bd_g, eye_g = _lane_consts(F, H, W, B_blk)

    # MHSA weights pre-sliced per role (q/v token-major, k feature-major).
    idx_qv = jnp.array([0, 1, 4, 5, 6, 7, 10, 11])
    idx_k = jnp.array([2, 3, 8, 9])
    R = max(8, C, G)
    pieces = {
        'b1': b1.reshape(C, 1),
        'b2': b2.reshape(C, 1),
        'tw': jnp.kron(jnp.eye(B_blk, dtype=jnp.float32), p['tab_w']),  # (G, TBW)
        'tb': jnp.tile(p['tab_b'].reshape(F, 1), (B_blk, 1)),           # (G, 1)
        'wqv': p['qkv_w'][idx_qv, :].T,                                 # (3, 8)
        'bqv': p['qkv_b'][idx_qv].reshape(1, 8),
        'wk': p['qkv_w'][idx_k, :],                                     # (4, 3)
        'bk': p['qkv_b'][idx_k].reshape(4, 1),
        'rel': jnp.tile(p['rel'].reshape(1, F), (1, B_blk)),            # (1, G)
        'ow': p['o_w'].reshape(1, 4),
        'ob': p['o_b'].reshape(1, 1),
        'eye': eye_g,
        'bd': bd_g,
    }
    layout = {'tbw': TBW}
    cols, off = [], 0
    for name, arr in pieces.items():
        arr = arr.astype(jnp.float32)
        r, c = arr.shape
        if r < R:
            arr = jnp.concatenate([arr, jnp.zeros((R - r, c), jnp.float32)], axis=0)
        layout[name] = off
        off += c
        cols.append(arr)
    small = jnp.concatenate(cols, axis=1)                         # (R, ~68) one tile

    # Lane-stack the batch: (NB, C, B_blk*L) with lane = b_inner*L + p.
    x2 = x.reshape(NB, B_blk, C, L).transpose(0, 2, 1, 3).reshape(NB, C, LL)
    tab3 = tab.reshape(NB, 1, TBW)

    kernel = _make_kernel(C, F, H, W, B_blk, layout)
    flops = int(4 * 27 * C * C * L * N)                 # two 3x3x3 convs
    bytes_accessed = int(4 * (2 * N * C * L + tab.size + lanes_const.size
                              + wconst.size + small.size))
    transc = int(N * (2 * F * F + 2 * F))

    out = pl.pallas_call(
        kernel,
        out_shape=jax.ShapeDtypeStruct((NB, C, LL), jnp.float32),
        grid=(NB,),
        in_specs=[
            pl.BlockSpec((1, C, LL), lambda n: (n, 0, 0)),
            pl.BlockSpec((1, 1, TBW), lambda n: (n, 0, 0)),
            pl.BlockSpec(lanes_const.shape, lambda n: (0, 0)),
            pl.BlockSpec(wconst.shape, lambda n: (0, 0)),
            pl.BlockSpec(small.shape, lambda n: (0, 0)),
        ],
        out_specs=pl.BlockSpec((1, C, LL), lambda n: (n, 0, 0)),
        scratch_shapes=[pltpu.VMEM((27 * C, LL), jnp.float32)],   # im2col scratch
        compiler_params=pltpu.CompilerParams(dimension_semantics=("parallel",)),
        cost_estimate=pl.CostEstimate(flops=flops, transcendentals=transc,
                                      bytes_accessed=bytes_accessed),
    )(x2, tab3, lanes_const, wconst, small)

    out = out.reshape(NB, C, B_blk, L).transpose(0, 2, 1, 3).reshape(N, C, F, H, W)
    return out


# ------------------------------- pure-JAX reference --------------------------------

def temporal_mhsa(x, p):
    """TemporalMHSA(input_dim=3, seq_len=F, heads=2): x (B, S, 3) -> (B, S, 1)."""
    B, S, _ = x.shape
    heads, emb = 2, 4
    hd = emb // heads
    qkv = x @ p['qkv_w'].T + p['qkv_b']
    qkv = qkv.reshape(B, S, heads, 3 * hd).transpose(0, 2, 1, 3)
    q, k, v = jnp.split(qkv, 3, axis=-1)
    k = k + p['rel']
    logits = jnp.einsum('bhqd,bhkd->bhqk', q, k) / math.sqrt(hd)
    attn = jax.nn.softmax(logits, axis=-1)
    vals = jnp.einsum('bhqk,bhkd->bhqd', attn, v)
    vals = vals.transpose(0, 2, 1, 3).reshape(B, S, emb)
    return vals @ p['o_w'].T + p['o_b']


def reference_forward(x, tab, p):
    """Pure-JAX reference reproducing the PyTorch semantics (for verification)."""
    def conv3(a, w):
        return lax.conv_general_dilated(
            a, w, (1, 1, 1), [(1, 1)] * 3,
            dimension_numbers=('NCDHW', 'OIDHW', 'NCDHW'),
            precision=lax.Precision.HIGHEST)

    s1, b1 = fold_bn(p['bn1_gamma'], p['bn1_beta'], p['bn1_mean'], p['bn1_var'])
    s2, b2 = fold_bn(p['bn2_gamma'], p['bn2_beta'], p['bn2_mean'], p['bn2_var'])
    bc = lambda v: v[None, :, None, None, None]

    out = jax.nn.relu(conv3(x, p['w1']) * bc(s1) + bc(b1))
    xg = out.transpose(0, 2, 1, 3, 4)                                # (N, F, C, H, W)
    avg = xg.mean(axis=(2, 3, 4))
    mx = xg.max(axis=(2, 3, 4))
    emb = jax.nn.relu(tab @ p['tab_w'].T + p['tab_b'])
    cat = jnp.stack([avg, mx, emb], axis=2)                          # (N, F, 3)
    att = jax.nn.sigmoid(temporal_mhsa(cat, p))                      # (N, F, 1)
    xg = xg * att[:, :, :, None, None]
    out = xg.transpose(0, 2, 1, 3, 4)
    out = conv3(out, p['w2']) * bc(s2) + bc(b2)
    return jax.nn.relu(out + x)


# ------------------------------- params & main --------------------------------------

def init_params(key, planes, inplanes, frames):
    n_tab = planes  # tabular_branch=True -> CBAM sets n_tab = gate_channels
    ks = jax.random.split(key, 17)
    nrm = lambda k, shape, s: s * jax.random.normal(k, shape, jnp.float32)
    return {
        'w1': nrm(ks[0], (planes, inplanes, 3, 3, 3), 0.05),
        'bn1_gamma': 1.0 + nrm(ks[1], (planes,), 0.1),
        'bn1_beta': nrm(ks[2], (planes,), 0.1),
        'bn1_mean': nrm(ks[3], (planes,), 0.1),
        'bn1_var': jax.random.uniform(ks[4], (planes,), jnp.float32, 0.5, 1.5),
        'w2': nrm(ks[5], (planes, planes, 3, 3, 3), 0.05),
        'bn2_gamma': 1.0 + nrm(ks[6], (planes,), 0.1),
        'bn2_beta': nrm(ks[7], (planes,), 0.1),
        'bn2_mean': nrm(ks[8], (planes,), 0.1),
        'bn2_var': jax.random.uniform(ks[9], (planes,), jnp.float32, 0.5, 1.5),
        # TemporalGate.tab_embedding = Linear(n_tab, gate_frames) + ReLU
        'tab_w': nrm(ks[10], (frames, n_tab), 0.3),
        'tab_b': nrm(ks[11], (frames,), 0.1),
        # TemporalMHSA(input_dim=3, seq_len=frames, heads=2), embedding_dim=4
        'qkv_w': nrm(ks[12], (12, 3), 0.3),
        'qkv_b': nrm(ks[13], (12,), 0.1),
        'rel': nrm(ks[14], (1, 1, frames, 1), 1.0),
        'o_w': nrm(ks[15], (1, 4), 0.3),
        'o_b': nrm(ks[16], (1,), 0.1),
    }


if __name__ == "__main__":
    N, C, F, H, W = 4, 8, 4, 8, 8       # inplanes = planes = 8, gate_frames = F = 4
    planes = 8

    key = jax.random.PRNGKey(0)
    kx, kt, kp = jax.random.split(key, 3)
    x = jax.random.normal(kx, (N, C, F, H, W), jnp.float32)
    tab = jax.random.normal(kt, (N, planes), jnp.float32)   # n_tab = planes (tabular_branch)
    params = init_params(kp, planes, C, F)

    fwd = jax.jit(basic_block_forward, static_argnames=("block_batch",))
    out = fwd(x, tab, params, block_batch=2)   # 2 samples/grid step -> 2 parallel steps
    out = jax.block_until_ready(out)

    ref = reference_forward(x, tab, params)
    assert out.shape == (N, planes, F, H, W), out.shape
    err = float(jnp.max(jnp.abs(out - ref)))
    assert jnp.allclose(out, ref, atol=1e-2, rtol=1e-2), err
    print("KERNEL_OK")
</pallas_src>

<mosaic_0001>
module attributes {stable_mosaic.version = 11 : i64} {
  func.func @kernel(%arg0: i32, %arg1: memref<1x8x512xf32, #tpu.memory_space<vmem>>, %arg2: memref<1x1x16xf32, #tpu.memory_space<vmem>>, %arg3: memref<35x512xf32, #tpu.memory_space<vmem>>, %arg4: memref<16x216xf32, #tpu.memory_space<vmem>>, %arg5: memref<8x68xf32, #tpu.memory_space<vmem>>, %arg6: memref<1x8x512xf32, #tpu.memory_space<vmem>>, %arg7: memref<216x512xf32, #tpu.memory_space<vmem>>) attributes {dimension_semantics = [#tpu.dimension_semantics<parallel>], iteration_bounds = array<i64: 2>, scalar_prefetch = 0 : i64, scratch_operands = 1 : i64, tpu.core_type = #tpu.core_type<tc>, window_params = [{transform_indices = @transform_0, window_bounds = array<i64: 1, 8, 512>}, {transform_indices = @transform_1, window_bounds = array<i64: 1, 1, 16>}, {pipeline_mode = #tpu.pipeline_mode<synchronous>, transform_indices = @transform_2, window_bounds = array<i64: 35, 512>}, {pipeline_mode = #tpu.pipeline_mode<synchronous>, transform_indices = @transform_3, window_bounds = array<i64: 16, 216>}, {pipeline_mode = #tpu.pipeline_mode<synchronous>, transform_indices = @transform_4, window_bounds = array<i64: 8, 68>}, {transform_indices = @transform_5, window_bounds = array<i64: 1, 8, 512>}]} {
    %c0 = arith.constant 0 : index
    %c0_0 = arith.constant 0 : index
    %c0_1 = arith.constant 0 : index
    %0 = vector.load %arg1[%c0, %c0_0, %c0_1] : memref<1x8x512xf32, #tpu.memory_space<vmem>>, vector<1x8x512xf32>
    %1 = vector.shape_cast %0 : vector<1x8x512xf32> to vector<8x512xf32>
    %c0_2 = arith.constant 0 : index
    %c0_3 = arith.constant 0 : index
    %2 = vector.load %arg3[%c0_2, %c0_3] : memref<35x512xf32, #tpu.memory_space<vmem>>, vector<8x512xf32>
    %c0_4 = arith.constant 0 : index
    %c52 = arith.constant 52 : index
    %3 = vector.load %arg5[%c0_4, %c52] : memref<8x68xf32, #tpu.memory_space<vmem>>, vector<8x8xf32>
    %c0_5 = arith.constant 0 : index
    %c60 = arith.constant 60 : index
    %4 = vector.load %arg5[%c0_5, %c60] : memref<8x68xf32, #tpu.memory_space<vmem>>, vector<8x8xf32>
    %c0_6 = arith.constant 0 : index
    %c0_7 = arith.constant 0 : index
    %5 = vector.load %arg5[%c0_6, %c0_7] : memref<8x68xf32, #tpu.memory_space<vmem>>, vector<8x1xf32>
    %6 = vector.extract_strided_slice %1 {offsets = [0, 439], sizes = [8, 73], strides = [1, 1]} : vector<8x512xf32> to vector<8x73xf32>
    %7 = vector.extract_strided_slice %1 {offsets = [0, 0], sizes = [8, 439], strides = [1, 1]} : vector<8x512xf32> to vector<8x439xf32>
    %8 = tpu.concatenate %6, %7 in 1 : vector<8x73xf32>, vector<8x439xf32> -> vector<8x512xf32>
    %c8 = arith.constant 8 : index
    %c0_8 = arith.constant 0 : index
    %9 = vector.load %arg3[%c8, %c0_8] : memref<35x512xf32, #tpu.memory_space<vmem>>, vector<1x512xf32>
    %10 = vector.broadcast %9 : vector<1x512xf32> to vector<8x512xf32>
    %11 = arith.mulf %8, %10 : vector<8x512xf32>
    %c0_9 = arith.constant 0 : index
    %c0_10 = arith.constant 0 : index
    %12 = vector.load %arg7[%c0_9, %c0_10] : memref<216x512xf32, #tpu.memory_space<vmem>>, vector<8x512xf32>
    tpu.vector_store %arg7[%c0_9, %c0_10], %11 {strides = array<i32>} : memref<216x512xf32, #tpu.memory_space<vmem>>, vector<8x512xf32>,
    %13 = vector.extract_strided_slice %1 {offsets = [0, 440], sizes = [8, 72], strides = [1, 1]} : vector<8x512xf32> to vector<8x72xf32>
    %14 = vector.extract_strided_slice %1 {offsets = [0, 0], sizes = [8, 440], strides = [1, 1]} : vector<8x512xf32> to vector<8x440xf32>
    %15 = tpu.concatenate %13, %14 in 1 : vector<8x72xf32>, vector<8x440xf32> -> vector<8x512xf32>
    %c9 = arith.constant 9 : index
    %c0_11 = arith.constant 0 : index
    %16 = vector.load %arg3[%c9, %c0_11] : memref<35x512xf32, #tpu.memory_space<vmem>>, vector<1x512xf32>
    %17 = vector.broadcast %16 : vector<1x512xf32> to vector<8x512xf32>
    %18 = arith.mulf %15, %17 : vector<8x512xf32>
    %c8_12 = arith.constant 8 : index
    %c0_13 = arith.constant 0 : index
    %19 = vector.load %arg7[%c8_12, %c0_13] : memref<216x512xf32, #tpu.memory_space<vmem>>, vector<8x512xf32>
    tpu.vector_store %arg7[%c8_12, %c0_13], %18 {strides = array<i32>} : memref<216x512xf32, #tpu.memory_space<vmem>>, vector<8x512xf32>,
    %20 = vector.extract_strided_slice %1 {offsets = [0, 441], sizes = [8, 71], strides = [1, 1]} : vector<8x512xf32> to vector<8x71xf32>
    %21 = vector.extract_strided_slice %1 {offsets = [0, 0], sizes = [8, 441], strides = [1, 1]} : vector<8x512xf32> to vector<8x441xf32>
    %22 = tpu.concatenate %20, %21 in 1 : vector<8x71xf32>, vector<8x441xf32> -> vector<8x512xf32>
    %c10 = arith.constant 10 : index
    %c0_14 = arith.constant 0 : index
    %23 = vector.load %arg3[%c10, %c0_14] : memref<35x512xf32, #tpu.memory_space<vmem>>, vector<1x512xf32>
    %24 = vector.broadcast %23 : vector<1x512xf32> to vector<8x512xf32>
    %25 = arith.mulf %22, %24 : vector<8x512xf32>
    %c16 = arith.constant 16 : index
    %c0_15 = arith.constant 0 : index
    %26 = vector.load %arg7[%c16, %c0_15] : memref<216x512xf32, #tpu.memory_space<vmem>>, vector<8x512xf32>
    tpu.vector_store %arg7[%c16, %c0_15], %25 {strides = array<i32>} : memref<216x512xf32, #tpu.memory_space<vmem>>, vector<8x512xf32>,
    %27 = vector.extract_strided_slice %1 {offsets = [0, 447], sizes = [8, 65], strides = [1, 1]} : vector<8x512xf32> to vector<8x65xf32>
    %28 = vector.extract_strided_slice %1 {offsets = [0, 0], sizes = [8, 447], strides = [1, 1]} : vector<8x512xf32> to vector<8x447xf32>
    %29 = tpu.concatenate %27, %28 in 1 : vector<8x65xf32>, vector<8x447xf32> -> vector<8x512xf32>
    %c11 = arith.constant 11 : index
    %c0_16 = arith.constant 0 : index
    %30 = vector.load %arg3[%c11, %c0_16] : memref<35x512xf32, #tpu.memory_space<vmem>>, vector<1x512xf32>
    %31 = vector.broadcast %30 : vector<1x512xf32> to vector<8x512xf32>
    %32 = arith.mulf %29, %31 : vector<8x512xf32>
    %c24 = arith.constant 24 : index
    %c0_17 = arith.constant 0 : index
    %33 = vector.load %arg7[%c24, %c0_17] : memref<216x512xf32, #tpu.memory_space<vmem>>, vector<8x512xf32>
    tpu.vector_store %arg7[%c24, %c0_17], %32 {strides = array<i32>} : memref<216x512xf32, #tpu.memory_space<vmem>>, vector<8x512xf32>,
    %34 = vector.extract_strided_slice %1 {offsets = [0, 448], sizes = [8, 64], strides = [1, 1]} : vector<8x512xf32> to vector<8x64xf32>
    %35 = vector.extract_strided_slice %1 {offsets = [0, 0], sizes = [8, 448], strides = [1, 1]} : vector<8x512xf32> to vector<8x448xf32>
    %36 = tpu.concatenate %34, %35 in 1 : vector<8x64xf32>, vector<8x448xf32> -> vector<8x512xf32>
    %c12 = arith.constant 12 : index
    %c0_18 = arith.constant 0 : index
    %37 = vector.load %arg3[%c12, %c0_18] : memref<35x512xf32, #tpu.memory_space<vmem>>, vector<1x512xf32>
    %38 = vector.broadcast %37 : vector<1x512xf32> to vector<8x512xf32>
    %39 = arith.mulf %36, %38 : vector<8x512xf32>
    %c32 = arith.constant 32 : index
    %c0_19 = arith.constant 0 : index
    %40 = vector.load %arg7[%c32, %c0_19] : memref<216x512xf32, #tpu.memory_space<vmem>>, vector<8x512xf32>
    tpu.vector_store %arg7[%c32, %c0_19], %39 {strides = array<i32>} : memref<216x512xf32, #tpu.memory_space<vmem>>, vector<8x512xf32>,
    %41 = vector.extract_strided_slice %1 {offsets = [0, 449], sizes = [8, 63], strides = [1, 1]} : vector<8x512xf32> to vector<8x63xf32>
    %42 = vector.extract_strided_slice %1 {offsets = [0, 0], sizes = [8, 449], strides = [1, 1]} : vector<8x512xf32> to vector<8x449xf32>
    %43 = tpu.concatenate %41, %42 in 1 : vector<8x63xf32>, vector<8x449xf32> -> vector<8x512xf32>
    %c13 = arith.constant 13 : index
    %c0_20 = arith.constant 0 : index
    %44 = vector.load %arg3[%c13, %c0_20] : memref<35x512xf32, #tpu.memory_space<vmem>>, vector<1x512xf32>
    %45 = vector.broadcast %44 : vector<1x512xf32> to vector<8x512xf32>
    %46 = arith.mulf %43, %45 : vector<8x512xf32>
    %c40 = arith.constant 40 : index
    %c0_21 = arith.constant 0 : index
    %47 = vector.load %arg7[%c40, %c0_21] : memref<216x512xf32, #tpu.memory_space<vmem>>, vector<8x512xf32>
    tpu.vector_store %arg7[%c40, %c0_21], %46 {strides = array<i32>} : memref<216x512xf32, #tpu.memory_space<vmem>>, vector<8x512xf32>,
    %48 = vector.extract_strided_slice %1 {offsets = [0, 455], sizes = [8, 57], strides = [1, 1]} : vector<8x512xf32> to vector<8x57xf32>
    %49 = vector.extract_strided_slice %1 {offsets = [0, 0], sizes = [8, 455], strides = [1, 1]} : vector<8x512xf32> to vector<8x455xf32>
    %50 = tpu.concatenate %48, %49 in 1 : vector<8x57xf32>, vector<8x455xf32> -> vector<8x512xf32>
    %c14 = arith.constant 14 : index
    %c0_22 = arith.constant 0 : index
    %51 = vector.load %arg3[%c14, %c0_22] : memref<35x512xf32, #tpu.memory_space<vmem>>, vector<1x512xf32>
    %52 = vector.broadcast %51 : vector<1x512xf32> to vector<8x512xf32>
    %53 = arith.mulf %50, %52 : vector<8x512xf32>
    %c48 = arith.constant 48 : index
    %c0_23 = arith.constant 0 : index
    %54 = vector.load %arg7[%c48, %c0_23] : memref<216x512xf32, #tpu.memory_space<vmem>>, vector<8x512xf32>
    tpu.vector_store %arg7[%c48, %c0_23], %53 {strides = array<i32>} : memref<216x512xf32, #tpu.memory_space<vmem>>, vector<8x512xf32>,
    %55 = vector.extract_strided_slice %1 {offsets = [0, 456], sizes = [8, 56], strides = [1, 1]} : vector<8x512xf32> to vector<8x56xf32>
    %56 = vector.extract_strided_slice %1 {offsets = [0, 0], sizes = [8, 456], strides = [1, 1]} : vector<8x512xf32> to vector<8x456xf32>
    %57 = tpu.concatenate %55, %56 in 1 : vector<8x56xf32>, vector<8x456xf32> -> vector<8x512xf32>
    %c15 = arith.constant 15 : index
    %c0_24 = arith.constant 0 : index
    %58 = vector.load %arg3[%c15, %c0_24] : memref<35x512xf32, #tpu.memory_space<vmem>>, vector<1x512xf32>
    %59 = vector.broadcast %58 : vector<1x512xf32> to vector<8x512xf32>
    %60 = arith.mulf %57, %59 : vector<8x512xf32>
    %c56 = arith.constant 56 : index
    %c0_25 = arith.constant 0 : index
    %61 = vector.load %arg7[%c56, %c0_25] : memref<216x512xf32, #tpu.memory_space<vmem>>, vector<8x512xf32>
    tpu.vector_store %arg7[%c56, %c0_25], %60 {strides = array<i32>} : memref<216x512xf32, #tpu.memory_space<vmem>>, vector<8x512xf32>,
    %62 = vector.extract_strided_slice %1 {offsets = [0, 457], sizes = [8, 55], strides = [1, 1]} : vector<8x512xf32> to vector<8x55xf32>
    %63 = vector.extract_strided_slice %1 {offsets = [0, 0], sizes = [8, 457], strides = [1, 1]} : vector<8x512xf32> to vector<8x457xf32>
    %64 = tpu.concatenate %62, %63 in 1 : vector<8x55xf32>, vector<8x457xf32> -> vector<8x512xf32>
    %c16_26 = arith.constant 16 : index
    %c0_27 = arith.constant 0 : index
    %65 = vector.load %arg3[%c16_26, %c0_27] : memref<35x512xf32, #tpu.memory_space<vmem>>, vector<1x512xf32>
    %66 = vector.broadcast %65 : vector<1x512xf32> to vector<8x512xf32>
    %67 = arith.mulf %64, %66 : vector<8x512xf32>
    %c64 = arith.constant 64 : index
    %c0_28 = arith.constant 0 : index
    %68 = vector.load %arg7[%c64, %c0_28] : memref<216x512xf32, #tpu.memory_space<vmem>>, vector<8x512xf32>
    tpu.vector_store %arg7[%c64, %c0_28], %67 {strides = array<i32>} : memref<216x512xf32, #tpu.memory_space<vmem>>, vector<8x512xf32>,
    %69 = vector.extract_strided_slice %1 {offsets = [0, 503], sizes = [8, 9], strides = [1, 1]} : vector<8x512xf32> to vector<8x9xf32>
    %70 = vector.extract_strided_slice %1 {offsets = [0, 0], sizes = [8, 503], strides = [1, 1]} : vector<8x512xf32> to vector<8x503xf32>
    %71 = tpu.concatenate %69, %70 in 1 : vector<8x9xf32>, vector<8x503xf32> -> vector<8x512xf32>
    %c17 = arith.constant 17 : index
    %c0_29 = arith.constant 0 : index
    %72 = vector.load %arg3[%c17, %c0_29] : memref<35x512xf32, #tpu.memory_space<vmem>>, vector<1x512xf32>
    %73 = vector.broadcast %72 : vector<1x512xf32> to vector<8x512xf32>
    %74 = arith.mulf %71, %73 : vector<8x512xf32>
    %c72 = arith.constant 72 : index
    %c0_30 = arith.constant 0 : index
    %75 = vector.load %arg7[%c72, %c0_30] : memref<216x512xf32, #tpu.memory_space<vmem>>, vector<8x512xf32>
    tpu.vector_store %arg7[%c72, %c0_30], %74 {strides = array<i32>} : memref<216x512xf32, #tpu.memory_space<vmem>>, vector<8x512xf32>,
    %76 = vector.extract_strided_slice %1 {offsets = [0, 504], sizes = [8, 8], strides = [1, 1]} : vector<8x512xf32> to vector<8x8xf32>
    %77 = vector.extract_strided_slice %1 {offsets = [0, 0], sizes = [8, 504], strides = [1, 1]} : vector<8x512xf32> to vector<8x504xf32>
    %78 = tpu.concatenate %76, %77 in 1 : vector<8x8xf32>, vector<8x504xf32> -> vector<8x512xf32>
    %c18 = arith.constant 18 : index
    %c0_31 = arith.constant 0 : index
    %79 = vector.load %arg3[%c18, %c0_31] : memref<35x512xf32, #tpu.memory_space<vmem>>, vector<1x512xf32>
    %80 = vector.broadcast %79 : vector<1x512xf32> to vector<8x512xf32>
    %81 = arith.mulf %78, %80 : vector<8x512xf32>
    %c80 = arith.constant 80 : index
    %c0_32 = arith.constant 0 : index
    %82 = vector.load %arg7[%c80, %c0_32] : memref<216x512xf32, #tpu.memory_space<vmem>>, vector<8x512xf32>
    tpu.vector_store %arg7[%c80, %c0_32], %81 {strides = array<i32>} : memref<216x512xf32, #tpu.memory_space<vmem>>, vector<8x512xf32>,
    %83 = vector.extract_strided_slice %1 {offsets = [0, 505], sizes = [8, 7], strides = [1, 1]} : vector<8x512xf32> to vector<8x7xf32>
    %84 = vector.extract_strided_slice %1 {offsets = [0, 0], sizes = [8, 505], strides = [1, 1]} : vector<8x512xf32> to vector<8x505xf32>
    %85 = tpu.concatenate %83, %84 in 1 : vector<8x7xf32>, vector<8x505xf32> -> vector<8x512xf32>
    %c19 = arith.constant 19 : index
    %c0_33 = arith.constant 0 : index
    %86 = vector.load %arg3[%c19, %c0_33] : memref<35x512xf32, #tpu.memory_space<vmem>>, vector<1x512xf32>
    %87 = vector.broadcast %86 : vector<1x512xf32> to vector<8x512xf32>
    %88 = arith.mulf %85, %87 : vector<8x512xf32>
    %c88 = arith.constant 88 : index
    %c0_34 = arith.constant 0 : index
    %89 = vector.load %arg7[%c88, %c0_34] : memref<216x512xf32, #tpu.memory_space<vmem>>, vector<8x512xf32>
    tpu.vector_store %arg7[%c88, %c0_34], %88 {strides = array<i32>} : memref<216x512xf32, #tpu.memory_space<vmem>>, vector<8x512xf32>,
    %90 = vector.extract_strided_slice %1 {offsets = [0, 511], sizes = [8, 1], strides = [1, 1]} : vector<8x512xf32> to vector<8x1xf32>
    %91 = vector.extract_strided_slice %1 {offsets = [0, 0], sizes = [8, 511], strides = [1, 1]} : vector<8x512xf32> to vector<8x511xf32>
    %92 = tpu.concatenate %90, %91 in 1 : vector<8x1xf32>, vector<8x511xf32> -> vector<8x512xf32>
    %c20 = arith.constant 20 : index
    %c0_35 = arith.constant 0 : index
    %93 = vector.load %arg3[%c20, %c0_35] : memref<35x512xf32, #tpu.memory_space<vmem>>, vector<1x512xf32>
    %94 = vector.broadcast %93 : vector<1x512xf32> to vector<8x512xf32>
    %95 = arith.mulf %92, %94 : vector<8x512xf32>
    %c96 = arith.constant 96 : index
    %c0_36 = arith.constant 0 : index
    %96 = vector.load %arg7[%c96, %c0_36] : memref<216x512xf32, #tpu.memory_space<vmem>>, vector<8x512xf32>
    tpu.vector_store %arg7[%c96, %c0_36], %95 {strides = array<i32>} : memref<216x512xf32, #tpu.memory_space<vmem>>, vector<8x512xf32>,
    %c104 = arith.constant 104 : index
    %c0_37 = arith.constant 0 : index
    %97 = vector.load %arg7[%c104, %c0_37] : memref<216x512xf32, #tpu.memory_space<vmem>>, vector<8x512xf32>
    tpu.vector_store %arg7[%c104, %c0_37], %1 {strides = array<i32>} : memref<216x512xf32, #tpu.memory_space<vmem>>, vector<8x512xf32>,
    %98 = vector.extract_strided_slice %1 {offsets = [0, 1], sizes = [8, 511], strides = [1, 1]} : vector<8x512xf32> to vector<8x511xf32>
    %99 = vector.extract_strided_slice %1 {offsets = [0, 0], sizes = [8, 1], strides = [1, 1]} : vector<8x512xf32> to vector<8x1xf32>
    %100 = tpu.concatenate %98, %99 in 1 : vector<8x511xf32>, vector<8x1xf32> -> vector<8x512xf32>
    %c22 = arith.constant 22 : index
    %c0_38 = arith.constant 0 : index
    %101 = vector.load %arg3[%c22, %c0_38] : memref<35x512xf32, #tpu.memory_space<vmem>>, vector<1x512xf32>
    %102 = vector.broadcast %101 : vector<1x512xf32> to vector<8x512xf32>
    %103 = arith.mulf %100, %102 : vector<8x512xf32>
    %c112 = arith.constant 112 : index
    %c0_39 = arith.constant 0 : index
    %104 = vector.load %arg7[%c112, %c0_39] : memref<216x512xf32, #tpu.memory_space<vmem>>, vector<8x512xf32>
    tpu.vector_store %arg7[%c112, %c0_39], %103 {strides = array<i32>} : memref<216x512xf32, #tpu.memory_space<vmem>>, vector<8x512xf32>,
    %105 = vector.extract_strided_slice %1 {offsets = [0, 7], sizes = [8, 505], strides = [1, 1]} : vector<8x512xf32> to vector<8x505xf32>
    %106 = vector.extract_strided_slice %1 {offsets = [0, 0], sizes = [8, 7], strides = [1, 1]} : vector<8x512xf32> to vector<8x7xf32>
    %107 = tpu.concatenate %105, %106 in 1 : vector<8x505xf32>, vector<8x7xf32> -> vector<8x512xf32>
    %c23 = arith.constant 23 : index
    %c0_40 = arith.constant 0 : index
    %108 = vector.load %arg3[%c23, %c0_40] : memref<35x512xf32, #tpu.memory_space<vmem>>, vector<1x512xf32>
    %109 = vector.broadcast %108 : vector<1x512xf32> to vector<8x512xf32>
    %110 = arith.mulf %107, %109 : vector<8x512xf32>
    %c120 = arith.constant 120 : index
    %c0_41 = arith.constant 0 : index
    %111 = vector.load %arg7[%c120, %c0_41] : memref<216x512xf32, #tpu.memory_space<vmem>>, vector<8x512xf32>
    tpu.vector_store %arg7[%c120, %c0_41], %110 {strides = array<i32>} : memref<216x512xf32, #tpu.memory_space<vmem>>, vector<8x512xf32>,
    %112 = vector.extract_strided_slice %1 {offsets = [0, 8], sizes = [8, 504], strides = [1, 1]} : vector<8x512xf32> to vector<8x504xf32>
    %113 = vector.extract_strided_slice %1 {offsets = [0, 0], sizes = [8, 8], strides = [1, 1]} : vector<8x512xf32> to vector<8x8xf32>
    %114 = tpu.concatenate %112, %113 in 1 : vector<8x504xf32>, vector<8x8xf32> -> vector<8x512xf32>
    %c24_42 = arith.constant 24 : index
    %c0_43 = arith.constant 0 : index
    %115 = vector.load %arg3[%c24_42, %c0_43] : memref<35x512xf32, #tpu.memory_space<vmem>>, vector<1x512xf32>
    %116 = vector.broadcast %115 : vector<1x512xf32> to vector<8x512xf32>
    %117 = arith.mulf %114, %116 : vector<8x512xf32>
    %c128 = arith.constant 128 : index
    %c0_44 = arith.constant 0 : index
    %118 = vector.load %arg7[%c128, %c0_44] : memref<216x512xf32, #tpu.memory_space<vmem>>, vector<8x512xf32>
    tpu.vector_store %arg7[%c128, %c0_44], %117 {strides = array<i32>} : memref<216x512xf32, #tpu.memory_space<vmem>>, vector<8x512xf32>,
    %119 = vector.extract_strided_slice %1 {offsets = [0, 9], sizes = [8, 503], strides = [1, 1]} : vector<8x512xf32> to vector<8x503xf32>
    %120 = vector.extract_strided_slice %1 {offsets = [0, 0], sizes = [8, 9], strides = [1, 1]} : vector<8x512xf32> to vector<8x9xf32>
    %121 = tpu.concatenate %119, %120 in 1 : vector<8x503xf32>, vector<8x9xf32> -> vector<8x512xf32>
    %c25 = arith.constant 25 : index
    %c0_45 = arith.constant 0 : index
    %122 = vector.load %arg3[%c25, %c0_45] : memref<35x512xf32, #tpu.memory_space<vmem>>, vector<1x512xf32>
    %123 = vector.broadcast %122 : vector<1x512xf32> to vector<8x512xf32>
    %124 = arith.mulf %121, %123 : vector<8x512xf32>
    %c136 = arith.constant 136 : index
    %c0_46 = arith.constant 0 : index
    %125 = vector.load %arg7[%c136, %c0_46] : memref<216x512xf32, #tpu.memory_space<vmem>>, vector<8x512xf32>
    tpu.vector_store %arg7[%c136, %c0_46], %124 {strides = array<i32>} : memref<216x512xf32, #tpu.memory_space<vmem>>, vector<8x512xf32>,
    %126 = vector.extract_strided_slice %1 {offsets = [0, 55], sizes = [8, 457], strides = [1, 1]} : vector<8x512xf32> to vector<8x457xf32>
    %127 = vector.extract_strided_slice %1 {offsets = [0, 0], sizes = [8, 55], strides = [1, 1]} : vector<8x512xf32> to vector<8x55xf32>
    %128 = tpu.concatenate %126, %127 in 1 : vector<8x457xf32>, vector<8x55xf32> -> vector<8x512xf32>
    %c26 = arith.constant 26 : index
    %c0_47 = arith.constant 0 : index
    %129 = vector.load %arg3[%c26, %c0_47] : memref<35x512xf32, #tpu.memory_space<vmem>>, vector<1x512xf32>
    %130 = vector.broadcast %129 : vector<1x512xf32> to vector<8x512xf32>
    %131 = arith.mulf %128, %130 : vector<8x512xf32>
    %c144 = arith.constant 144 : index
    %c0_48 = arith.constant 0 : index
    %132 = vector.load %arg7[%c144, %c0_48] : memref<216x512xf32, #tpu.memory_space<vmem>>, vector<8x512xf32>
    tpu.vector_store %arg7[%c144, %c0_48], %131 {strides = array<i32>} : memref<216x512xf32, #tpu.memory_space<vmem>>, vector<8x512xf32>,
    %133 = vector.extract_strided_slice %1 {offsets = [0, 56], sizes = [8, 456], strides = [1, 1]} : vector<8x512xf32> to vector<8x456xf32>
    %134 = vector.extract_strided_slice %1 {offsets = [0, 0], sizes = [8, 56], strides = [1, 1]} : vector<8x512xf32> to vector<8x56xf32>
    %135 = tpu.concatenate %133, %134 in 1 : vector<8x456xf32>, vector<8x56xf32> -> vector<8x512xf32>
    %c27 = arith.constant 27 : index
    %c0_49 = arith.constant 0 : index
    %136 = vector.load %arg3[%c27, %c0_49] : memref<35x512xf32, #tpu.memory_space<vmem>>, vector<1x512xf32>
    %137 = vector.broadcast %136 : vector<1x512xf32> to vector<8x512xf32>
    %138 = arith.mulf %135, %137 : vector<8x512xf32>
    %c152 = arith.constant 152 : index
    %c0_50 = arith.constant 0 : index
    %139 = vector.load %arg7[%c152, %c0_50] : memref<216x512xf32, #tpu.memory_space<vmem>>, vector<8x512xf32>
    tpu.vector_store %arg7[%c152, %c0_50], %138 {strides = array<i32>} : memref<216x512xf32, #tpu.memory_space<vmem>>, vector<8x512xf32>,
    %140 = vector.extract_strided_slice %1 {offsets = [0, 57], sizes = [8, 455], strides = [1, 1]} : vector<8x512xf32> to vector<8x455xf32>
    %141 = vector.extract_strided_slice %1 {offsets = [0, 0], sizes = [8, 57], strides = [1, 1]} : vector<8x512xf32> to vector<8x57xf32>
    %142 = tpu.concatenate %140, %141 in 1 : vector<8x455xf32>, vector<8x57xf32> -> vector<8x512xf32>
    %c28 = arith.constant 28 : index
    %c0_51 = arith.constant 0 : index
    %143 = vector.load %arg3[%c28, %c0_51] : memref<35x512xf32, #tpu.memory_space<vmem>>, vector<1x512xf32>
    %144 = vector.broadcast %143 : vector<1x512xf32> to vector<8x512xf32>
    %145 = arith.mulf %142, %144 : vector<8x512xf32>
    %c160 = arith.constant 160 : index
    %c0_52 = arith.constant 0 : index
    %146 = vector.load %arg7[%c160, %c0_52] : memref<216x512xf32, #tpu.memory_space<vmem>>, vector<8x512xf32>
    tpu.vector_store %arg7[%c160, %c0_52], %145 {strides = array<i32>} : memref<216x512xf32, #tpu.memory_space<vmem>>, vector<8x512xf32>,
    %147 = vector.extract_strided_slice %1 {offsets = [0, 63], sizes = [8, 449], strides = [1, 1]} : vector<8x512xf32> to vector<8x449xf32>
    %148 = vector.extract_strided_slice %1 {offsets = [0, 0], sizes = [8, 63], strides = [1, 1]} : vector<8x512xf32> to vector<8x63xf32>
    %149 = tpu.concatenate %147, %148 in 1 : vector<8x449xf32>, vector<8x63xf32> -> vector<8x512xf32>
    %c29 = arith.constant 29 : index
    %c0_53 = arith.constant 0 : index
    %150 = vector.load %arg3[%c29, %c0_53] : memref<35x512xf32, #tpu.memory_space<vmem>>, vector<1x512xf32>
    %151 = vector.broadcast %150 : vector<1x512xf32> to vector<8x512xf32>
    %152 = arith.mulf %149, %151 : vector<8x512xf32>
    %c168 = arith.constant 168 : index
    %c0_54 = arith.constant 0 : index
    %153 = vector.load %arg7[%c168, %c0_54] : memref<216x512xf32, #tpu.memory_space<vmem>>, vector<8x512xf32>
    tpu.vector_store %arg7[%c168, %c0_54], %152 {strides = array<i32>} : memref<216x512xf32, #tpu.memory_space<vmem>>, vector<8x512xf32>,
    %154 = vector.extract_strided_slice %1 {offsets = [0, 64], sizes = [8, 448], strides = [1, 1]} : vector<8x512xf32> to vector<8x448xf32>
    %155 = vector.extract_strided_slice %1 {offsets = [0, 0], sizes = [8, 64], strides = [1, 1]} : vector<8x512xf32> to vector<8x64xf32>
    %156 = tpu.concatenate %154, %155 in 1 : vector<8x448xf32>, vector<8x64xf32> -> vector<8x512xf32>
    %c30 = arith.constant 30 : index
    %c0_55 = arith.constant 0 : index
    %157 = vector.load %arg3[%c30, %c0_55] : memref<35x512xf32, #tpu.memory_space<vmem>>, vector<1x512xf32>
    %158 = vector.broadcast %157 : vector<1x512xf32> to vector<8x512xf32>
    %159 = arith.mulf %156, %158 : vector<8x512xf32>
    %c176 = arith.constant 176 : index
    %c0_56 = arith.constant 0 : index
    %160 = vector.load %arg7[%c176, %c0_56] : memref<216x512xf32, #tpu.memory_space<vmem>>, vector<8x512xf32>
    tpu.vector_store %arg7[%c176, %c0_56], %159 {strides = array<i32>} : memref<216x512xf32, #tpu.memory_space<vmem>>, vector<8x512xf32>,
    %161 = vector.extract_strided_slice %1 {offsets = [0, 65], sizes = [8, 447], strides = [1, 1]} : vector<8x512xf32> to vector<8x447xf32>
    %162 = vector.extract_strided_slice %1 {offsets = [0, 0], sizes = [8, 65], strides = [1, 1]} : vector<8x512xf32> to vector<8x65xf32>
    %163 = tpu.concatenate %161, %162 in 1 : vector<8x447xf32>, vector<8x65xf32> -> vector<8x512xf32>
    %c31 = arith.constant 31 : index
    %c0_57 = arith.constant 0 : index
    %164 = vector.load %arg3[%c31, %c0_57] : memref<35x512xf32, #tpu.memory_space<vmem>>, vector<1x512xf32>
    %165 = vector.broadcast %164 : vector<1x512xf32> to vector<8x512xf32>
    %166 = arith.mulf %163, %165 : vector<8x512xf32>
    %c184 = arith.constant 184 : index
    %c0_58 = arith.constant 0 : index
    %167 = vector.load %arg7[%c184, %c0_58] : memref<216x512xf32, #tpu.memory_space<vmem>>, vector<8x512xf32>
    tpu.vector_store %arg7[%c184, %c0_58], %166 {strides = array<i32>} : memref<216x512xf32, #tpu.memory_space<vmem>>, vector<8x512xf32>,
    %168 = vector.extract_strided_slice %1 {offsets = [0, 71], sizes = [8, 441], strides = [1, 1]} : vector<8x512xf32> to vector<8x441xf32>
    %169 = vector.extract_strided_slice %1 {offsets = [0, 0], sizes = [8, 71], strides = [1, 1]} : vector<8x512xf32> to vector<8x71xf32>
    %170 = tpu.concatenate %168, %169 in 1 : vector<8x441xf32>, vector<8x71xf32> -> vector<8x512xf32>
    %c32_59 = arith.constant 32 : index
    %c0_60 = arith.constant 0 : index
    %171 = vector.load %arg3[%c32_59, %c0_60] : memref<35x512xf32, #tpu.memory_space<vmem>>, vector<1x512xf32>
    %172 = vector.broadcast %171 : vector<1x512xf32> to vector<8x512xf32>
    %173 = arith.mulf %170, %172 : vector<8x512xf32>
    %c192 = arith.constant 192 : index
    %c0_61 = arith.constant 0 : index
    %174 = vector.load %arg7[%c192, %c0_61] : memref<216x512xf32, #tpu.memory_space<vmem>>, vector<8x512xf32>
    tpu.vector_store %arg7[%c192, %c0_61], %173 {strides = array<i32>} : memref<216x512xf32, #tpu.memory_space<vmem>>, vector<8x512xf32>,
    %175 = vector.extract_strided_slice %1 {offsets = [0, 72], sizes = [8, 440], strides = [1, 1]} : vector<8x512xf32> to vector<8x440xf32>
    %176 = vector.extract_strided_slice %1 {offsets = [0, 0], sizes = [8, 72], strides = [1, 1]} : vector<8x512xf32> to vector<8x72xf32>
    %177 = tpu.concatenate %175, %176 in 1 : vector<8x440xf32>, vector<8x72xf32> -> vector<8x512xf32>
    %c33 = arith.constant 33 : index
    %c0_62 = arith.constant 0 : index
    %178 = vector.load %arg3[%c33, %c0_62] : memref<35x512xf32, #tpu.memory_space<vmem>>, vector<1x512xf32>
    %179 = vector.broadcast %178 : vector<1x512xf32> to vector<8x512xf32>
    %180 = arith.mulf %177, %179 : vector<8x512xf32>
    %c200 = arith.constant 200 : index
    %c0_63 = arith.constant 0 : index
    %181 = vector.load %arg7[%c200, %c0_63] : memref<216x512xf32, #tpu.memory_space<vmem>>, vector<8x512xf32>
    tpu.vector_store %arg7[%c200, %c0_63], %180 {strides = array<i32>} : memref<216x512xf32, #tpu.memory_space<vmem>>, vector<8x512xf32>,
    %182 = vector.extract_strided_slice %1 {offsets = [0, 73], sizes = [8, 439], strides = [1, 1]} : vector<8x512xf32> to vector<8x439xf32>
    %183 = vector.extract_strided_slice %1 {offsets = [0, 0], sizes = [8, 73], strides = [1, 1]} : vector<8x512xf32> to vector<8x73xf32>
    %184 = tpu.concatenate %182, %183 in 1 : vector<8x439xf32>, vector<8x73xf32> -> vector<8x512xf32>
    %c34 = arith.constant 34 : index
    %c0_64 = arith.constant 0 : index
    %185 = vector.load %arg3[%c34, %c0_64] : memref<35x512xf32, #tpu.memory_space<vmem>>, vector<1x512xf32>
    %186 = vector.broadcast %185 : vector<1x512xf32> to vector<8x512xf32>
    %187 = arith.mulf %184, %186 : vector<8x512xf32>
    %c208 = arith.constant 208 : index
    %c0_65 = arith.constant 0 : index
    %188 = vector.load %arg7[%c208, %c0_65] : memref<216x512xf32, #tpu.memory_space<vmem>>, vector<8x512xf32>
    tpu.vector_store %arg7[%c208, %c0_65], %187 {strides = array<i32>} : memref<216x512xf32, #tpu.memory_space<vmem>>, vector<8x512xf32>,
    %c0_66 = arith.constant 0 : index
    %c0_67 = arith.constant 0 : index
    %189 = vector.load %arg4[%c0_66, %c0_67] : memref<16x216xf32, #tpu.memory_space<vmem>>, vector<8x216xf32>
    %c0_68 = arith.constant 0 : index
    %c0_69 = arith.constant 0 : index
    %190 = vector.load %arg7[%c0_68, %c0_69] : memref<216x512xf32, #tpu.memory_space<vmem>>, vector<216x512xf32>
    %cst = arith.constant dense<0.000000e+00> : vector<8x512xf32>
    %191 = tpu.matmul %189, %190, %cst {dimension_numbers = #tpu.dot_dimension_numbers<[1], [0], [0], [1], [0, 0, 1, 1], [], []>} : vector<8x216xf32>, vector<216x512xf32>, vector<8x512xf32> -> vector<8x512xf32>
    %192 = vector.broadcast %5 : vector<8x1xf32> to vector<8x512xf32>
    %193 = arith.addf %191, %192 : vector<8x512xf32>
    %cst_70 = arith.constant 0.000000e+00 : f32
    %194 = vector.broadcast %cst_70 : f32 to vector<8x512xf32>
    %195 = arith.maximumf %193, %194 : vector<8x512xf32>
    %cst_71 = arith.constant dense<0.000000e+00> : vector<512xf32>
    %196 = vector.multi_reduction <add>, %195, %cst_71 [0] : vector<8x512xf32> to vector<512xf32>
    %197 = vector.shape_cast %196 : vector<512xf32> to vector<1x512xf32>
    %cst_72 = arith.constant dense<0xFF800000> : vector<512xf32>
    %198 = vector.multi_reduction <maximumf>, %195, %cst_72 [0] : vector<8x512xf32> to vector<512xf32>
    %199 = vector.shape_cast %198 : vector<512xf32> to vector<1x512xf32>
    %200 = vector.broadcast %197 : vector<1x512xf32> to vector<8x512xf32>
    %201 = arith.mulf %2, %200 : vector<8x512xf32>
    %cst_73 = arith.constant dense<0.000000e+00> : vector<8xf32>
    %202 = vector.multi_reduction <add>, %201, %cst_73 [1] : vector<8x512xf32> to vector<8xf32>
    %203 = vector.shape_cast %202 : vector<8xf32> to vector<8x1xf32>
    %cst_74 = arith.constant 0.001953125 : f32
    %204 = vector.broadcast %cst_74 : f32 to vector<8x1xf32>
    %205 = arith.mulf %203, %204 : vector<8x1xf32>
    %cst_75 = arith.constant 5.000000e-01 : f32
    %206 = vector.broadcast %cst_75 : f32 to vector<8x512xf32>
    %207 = arith.cmpf ogt, %2, %206 : vector<8x512xf32>
    %cst_76 = arith.constant 0xFF800000 : f32
    %208 = vector.shape_cast %199 : vector<1x512xf32> to vector<1x512xf32>
    %209 = vector.broadcast %208 : vector<1x512xf32> to vector<8x512xf32>
    %210 = vector.broadcast %cst_76 : f32 to vector<8x512xf32>
    %211 = arith.select %207, %209, %210 : vector<8x512xi1>, vector<8x512xf32>
    %cst_77 = arith.constant dense<0xFF800000> : vector<8xf32>
    %212 = vector.multi_reduction <maximumf>, %211, %cst_77 [1] : vector<8x512xf32> to vector<8xf32>
    %213 = vector.shape_cast %212 : vector<8xf32> to vector<8x1xf32>
    %c0_78 = arith.constant 0 : index
    %c2 = arith.constant 2 : index
    %214 = vector.load %arg5[%c0_78, %c2] : memref<8x68xf32, #tpu.memory_space<vmem>>, vector<8x16xf32>
    %c0_79 = arith.constant 0 : index
    %c18_80 = arith.constant 18 : index
    %215 = vector.load %arg5[%c0_79, %c18_80] : memref<8x68xf32, #tpu.memory_space<vmem>>, vector<8x1xf32>
    %c0_81 = arith.constant 0 : index
    %c0_82 = arith.constant 0 : index
    %c0_83 = arith.constant 0 : index
    %216 = vector.load %arg2[%c0_81, %c0_82, %c0_83] : memref<1x1x16xf32, #tpu.memory_space<vmem>>, vector<1x1x16xf32>
    %217 = vector.shape_cast %216 : vector<1x1x16xf32> to vector<1x16xf32>
    %218 = vector.broadcast %217 : vector<1x16xf32> to vector<8x16xf32>
    %219 = arith.mulf %214, %218 : vector<8x16xf32>
    %cst_84 = arith.constant dense<0.000000e+00> : vector<8xf32>
    %220 = vector.multi_reduction <add>, %219, %cst_84 [1] : vector<8x16xf32> to vector<8xf32>
    %221 = vector.shape_cast %220 : vector<8xf32> to vector<8x1xf32>
    %222 = arith.addf %221, %215 : vector<8x1xf32>
    %cst_85 = arith.constant 0.000000e+00 : f32
    %223 = vector.broadcast %cst_85 : f32 to vector<8x1xf32>
    %224 = arith.maximumf %222, %223 : vector<8x1xf32>
    %c0_86 = arith.constant 0 : index
    %c19_87 = arith.constant 19 : index
    %225 = vector.load %arg5[%c0_86, %c19_87] : memref<8x68xf32, #tpu.memory_space<vmem>>, vector<3x8xf32>
    %c0_88 = arith.constant 0 : index
    %c27_89 = arith.constant 27 : index
    %226 = vector.load %arg5[%c0_88, %c27_89] : memref<8x68xf32, #tpu.memory_space<vmem>>, vector<1x8xf32>
    %c0_90 = arith.constant 0 : index
    %c35 = arith.constant 35 : index
    %227 = vector.load %arg5[%c0_90, %c35] : memref<8x68xf32, #tpu.memory_space<vmem>>, vector<4x3xf32>
    %c0_91 = arith.constant 0 : index
    %c38 = arith.constant 38 : index
    %228 = vector.load %arg5[%c0_91, %c38] : memref<8x68xf32, #tpu.memory_space<vmem>>, vector<4x1xf32>
    %c0_92 = arith.constant 0 : index
    %c39 = arith.constant 39 : index
    %229 = vector.load %arg5[%c0_92, %c39] : memref<8x68xf32, #tpu.memory_space<vmem>>, vector<1x8xf32>
    %c0_93 = arith.constant 0 : index
    %c47 = arith.constant 47 : index
    %230 = vector.load %arg5[%c0_93, %c47] : memref<8x68xf32, #tpu.memory_space<vmem>>, vector<1x4xf32>
    %c0_94 = arith.constant 0 : index
    %c51 = arith.constant 51 : index
    %231 = vector.load %arg5[%c0_94, %c51] : memref<8x68xf32, #tpu.memory_space<vmem>>, vector<1x1xf32>
    %232 = vector.extract_strided_slice %225 {offsets = [0, 0], sizes = [1, 8], strides = [1, 1]} : vector<3x8xf32> to vector<1x8xf32>
    %233 = vector.broadcast %205 : vector<8x1xf32> to vector<8x8xf32>
    %234 = vector.broadcast %232 : vector<1x8xf32> to vector<8x8xf32>
    %235 = arith.mulf %233, %234 : vector<8x8xf32>
    %236 = vector.extract_strided_slice %225 {offsets = [1, 0], sizes = [1, 8], strides = [1, 1]} : vector<3x8xf32> to vector<1x8xf32>
    %237 = vector.broadcast %213 : vector<8x1xf32> to vector<8x8xf32>
    %238 = vector.broadcast %236 : vector<1x8xf32> to vector<8x8xf32>
    %239 = arith.mulf %237, %238 : vector<8x8xf32>
    %240 = arith.addf %235, %239 : vector<8x8xf32>
    %241 = vector.extract_strided_slice %225 {offsets = [2, 0], sizes = [1, 8], strides = [1, 1]} : vector<3x8xf32> to vector<1x8xf32>
    %242 = vector.broadcast %224 : vector<8x1xf32> to vector<8x8xf32>
    %243 = vector.broadcast %241 : vector<1x8xf32> to vector<8x8xf32>
    %244 = arith.mulf %242, %243 : vector<8x8xf32>
    %245 = arith.addf %240, %244 : vector<8x8xf32>
    %246 = vector.broadcast %226 : vector<1x8xf32> to vector<8x8xf32>
    %247 = arith.addf %245, %246 : vector<8x8xf32>
    %248 = vector.extract_strided_slice %227 {offsets = [0, 0], sizes = [4, 1], strides = [1, 1]} : vector<4x3xf32> to vector<4x1xf32>
    %249 = vector.broadcast %205 : vector<8x1xf32> to vector<8x8xf32>
    %250 = arith.mulf %249, %3 : vector<8x8xf32>
    %cst_95 = arith.constant dense<0.000000e+00> : vector<8xf32>
    %251 = vector.multi_reduction <add>, %250, %cst_95 [0] : vector<8x8xf32> to vector<8xf32>
    %252 = vector.shape_cast %251 : vector<8xf32> to vector<1x8xf32>
    %253 = vector.broadcast %248 : vector<4x1xf32> to vector<4x8xf32>
    %254 = vector.broadcast %252 : vector<1x8xf32> to vector<4x8xf32>
    %255 = arith.mulf %253, %254 : vector<4x8xf32>
    %256 = vector.extract_strided_slice %227 {offsets = [0, 1], sizes = [4, 1], strides = [1, 1]} : vector<4x3xf32> to vector<4x1xf32>
    %257 = vector.broadcast %213 : vector<8x1xf32> to vector<8x8xf32>
    %258 = arith.mulf %257, %3 : vector<8x8xf32>
    %cst_96 = arith.constant dense<0.000000e+00> : vector<8xf32>
    %259 = vector.multi_reduction <add>, %258, %cst_96 [0] : vector<8x8xf32> to vector<8xf32>
    %260 = vector.shape_cast %259 : vector<8xf32> to vector<1x8xf32>
    %261 = vector.broadcast %256 : vector<4x1xf32> to vector<4x8xf32>
    %262 = vector.broadcast %260 : vector<1x8xf32> to vector<4x8xf32>
    %263 = arith.mulf %261, %262 : vector<4x8xf32>
    %264 = arith.addf %255, %263 : vector<4x8xf32>
    %265 = vector.extract_strided_slice %227 {offsets = [0, 2], sizes = [4, 1], strides = [1, 1]} : vector<4x3xf32> to vector<4x1xf32>
    %266 = vector.broadcast %224 : vector<8x1xf32> to vector<8x8xf32>
    %267 = arith.mulf %266, %3 : vector<8x8xf32>
    %cst_97 = arith.constant dense<0.000000e+00> : vector<8xf32>
    %268 = vector.multi_reduction <add>, %267, %cst_97 [0] : vector<8x8xf32> to vector<8xf32>
    %269 = vector.shape_cast %268 : vector<8xf32> to vector<1x8xf32>
    %270 = vector.broadcast %265 : vector<4x1xf32> to vector<4x8xf32>
    %271 = vector.broadcast %269 : vector<1x8xf32> to vector<4x8xf32>
    %272 = arith.mulf %270, %271 : vector<4x8xf32>
    %273 = arith.addf %264, %272 : vector<4x8xf32>
    %274 = vector.broadcast %228 : vector<4x1xf32> to vector<4x8xf32>
    %275 = arith.addf %273, %274 : vector<4x8xf32>
    %276 = vector.broadcast %229 : vector<1x8xf32> to vector<4x8xf32>
    %277 = arith.addf %275, %276 : vector<4x8xf32>
    %cst_98 = arith.constant 0.000000e+00 : f32
    %278 = vector.broadcast %cst_98 : f32 to vector<8x1xf32>
    %279 = vector.extract_strided_slice %247 {offsets = [0, 0], sizes = [8, 1], strides = [1, 1]} : vector<8x8xf32> to vector<8x1xf32>
    %280 = vector.extract_strided_slice %247 {offsets = [0, 1], sizes = [8, 1], strides = [1, 1]} : vector<8x8xf32> to vector<8x1xf32>
    %281 = vector.extract_strided_slice %247 {offsets = [0, 2], sizes = [8, 1], strides = [1, 1]} : vector<8x8xf32> to vector<8x1xf32>
    %282 = vector.extract_strided_slice %247 {offsets = [0, 3], sizes = [8, 1], strides = [1, 1]} : vector<8x8xf32> to vector<8x1xf32>
    %283 = vector.extract_strided_slice %277 {offsets = [0, 0], sizes = [1, 8], strides = [1, 1]} : vector<4x8xf32> to vector<1x8xf32>
    %284 = vector.extract_strided_slice %277 {offsets = [1, 0], sizes = [1, 8], strides = [1, 1]} : vector<4x8xf32> to vector<1x8xf32>
    %285 = vector.broadcast %279 : vector<8x1xf32> to vector<8x8xf32>
    %286 = vector.broadcast %283 : vector<1x8xf32> to vector<8x8xf32>
    %287 = arith.mulf %285, %286 : vector<8x8xf32>
    %288 = vector.broadcast %280 : vector<8x1xf32> to vector<8x8xf32>
    %289 = vector.broadcast %284 : vector<1x8xf32> to vector<8x8xf32>
    %290 = arith.mulf %288, %289 : vector<8x8xf32>
    %291 = arith.addf %287, %290 : vector<8x8xf32>
    %cst_99 = arith.constant 0.707106769 : f32
    %292 = vector.broadcast %cst_99 : f32 to vector<8x8xf32>
    %293 = arith.mulf %291, %292 : vector<8x8xf32>
    %cst_100 = arith.constant 5.000000e-01 : f32
    %294 = vector.broadcast %cst_100 : f32 to vector<8x8xf32>
    %295 = arith.cmpf ogt, %4, %294 : vector<8x8xf32>
    %cst_101 = arith.constant -1.000000e+30 : f32
    %296 = vector.broadcast %cst_101 : f32 to vector<8x8xf32>
    %297 = arith.select %295, %293, %296 : vector<8x8xi1>, vector<8x8xf32>
    %cst_102 = arith.constant dense<0xFF800000> : vector<8xf32>
    %298 = vector.multi_reduction <maximumf>, %297, %cst_102 [1] : vector<8x8xf32> to vector<8xf32>
    %299 = vector.shape_cast %298 : vector<8xf32> to vector<8x1xf32>
    %300 = vector.broadcast %299 : vector<8x1xf32> to vector<8x8xf32>
    %301 = arith.subf %297, %300 : vector<8x8xf32>
    %302 = math.exp %301 : vector<8x8xf32>
    %cst_103 = arith.constant dense<0.000000e+00> : vector<8xf32>
    %303 = vector.multi_reduction <add>, %302, %cst_103 [1] : vector<8x8xf32> to vector<8xf32>
    %304 = vector.shape_cast %303 : vector<8xf32> to vector<8x1xf32>
    %305 = vector.broadcast %304 : vector<8x1xf32> to vector<8x8xf32>
    %306 = arith.divf %302, %305 : vector<8x8xf32>
    %307 = vector.broadcast %281 : vector<8x1xf32> to vector<8x8xf32>
    %308 = arith.mulf %307, %3 : vector<8x8xf32>
    %cst_104 = arith.constant dense<0.000000e+00> : vector<8xf32>
    %309 = vector.multi_reduction <add>, %308, %cst_104 [0] : vector<8x8xf32> to vector<8xf32>
    %310 = vector.shape_cast %309 : vector<8xf32> to vector<1x8xf32>
    %311 = vector.broadcast %310 : vector<1x8xf32> to vector<8x8xf32>
    %312 = arith.mulf %306, %311 : vector<8x8xf32>
    %cst_105 = arith.constant dense<0.000000e+00> : vector<8xf32>
    %313 = vector.multi_reduction <add>, %312, %cst_105 [1] : vector<8x8xf32> to vector<8xf32>
    %314 = vector.shape_cast %313 : vector<8xf32> to vector<8x1xf32>
    %315 = vector.broadcast %282 : vector<8x1xf32> to vector<8x8xf32>
    %316 = arith.mulf %315, %3 : vector<8x8xf32>
    %cst_106 = arith.constant dense<0.000000e+00> : vector<8xf32>
    %317 = vector.multi_reduction <add>, %316, %cst_106 [0] : vector<8x8xf32> to vector<8xf32>
    %318 = vector.shape_cast %317 : vector<8xf32> to vector<1x8xf32>
    %319 = vector.broadcast %318 : vector<1x8xf32> to vector<8x8xf32>
    %320 = arith.mulf %306, %319 : vector<8x8xf32>
    %cst_107 = arith.constant dense<0.000000e+00> : vector<8xf32>
    %321 = vector.multi_reduction <add>, %320, %cst_107 [1] : vector<8x8xf32> to vector<8xf32>
    %322 = vector.shape_cast %321 : vector<8xf32> to vector<8x1xf32>
    %323 = vector.extract_strided_slice %230 {offsets = [0, 0], sizes = [1, 1], strides = [1, 1]} : vector<1x4xf32> to vector<1x1xf32>
    %324 = vector.broadcast %323 : vector<1x1xf32> to vector<8x1xf32>
    %325 = arith.mulf %314, %324 : vector<8x1xf32>
    %326 = arith.addf %278, %325 : vector<8x1xf32>
    %327 = vector.extract_strided_slice %230 {offsets = [0, 1], sizes = [1, 1], strides = [1, 1]} : vector<1x4xf32> to vector<1x1xf32>
    %328 = vector.broadcast %327 : vector<1x1xf32> to vector<8x1xf32>
    %329 = arith.mulf %322, %328 : vector<8x1xf32>
    %330 = arith.addf %326, %329 : vector<8x1xf32>
    %331 = vector.extract_strided_slice %247 {offsets = [0, 4], sizes = [8, 1], strides = [1, 1]} : vector<8x8xf32> to vector<8x1xf32>
    %332 = vector.extract_strided_slice %247 {offsets = [0, 5], sizes = [8, 1], strides = [1, 1]} : vector<8x8xf32> to vector<8x1xf32>
    %333 = vector.extract_strided_slice %247 {offsets = [0, 6], sizes = [8, 1], strides = [1, 1]} : vector<8x8xf32> to vector<8x1xf32>
    %334 = vector.extract_strided_slice %247 {offsets = [0, 7], sizes = [8, 1], strides = [1, 1]} : vector<8x8xf32> to vector<8x1xf32>
    %335 = vector.extract_strided_slice %277 {offsets = [2, 0], sizes = [1, 8], strides = [1, 1]} : vector<4x8xf32> to vector<1x8xf32>
    %336 = vector.extract_strided_slice %277 {offsets = [3, 0], sizes = [1, 8], strides = [1, 1]} : vector<4x8xf32> to vector<1x8xf32>
    %337 = vector.broadcast %331 : vector<8x1xf32> to vector<8x8xf32>
    %338 = vector.broadcast %335 : vector<1x8xf32> to vector<8x8xf32>
    %339 = arith.mulf %337, %338 : vector<8x8xf32>
    %340 = vector.broadcast %332 : vector<8x1xf32> to vector<8x8xf32>
    %341 = vector.broadcast %336 : vector<1x8xf32> to vector<8x8xf32>
    %342 = arith.mulf %340, %341 : vector<8x8xf32>
    %343 = arith.addf %339, %342 : vector<8x8xf32>
    %cst_108 = arith.constant 0.707106769 : f32
    %344 = vector.broadcast %cst_108 : f32 to vector<8x8xf32>
    %345 = arith.mulf %343, %344 : vector<8x8xf32>
    %cst_109 = arith.constant 5.000000e-01 : f32
    %346 = vector.broadcast %cst_109 : f32 to vector<8x8xf32>
    %347 = arith.cmpf ogt, %4, %346 : vector<8x8xf32>
    %cst_110 = arith.constant -1.000000e+30 : f32
    %348 = vector.broadcast %cst_110 : f32 to vector<8x8xf32>
    %349 = arith.select %347, %345, %348 : vector<8x8xi1>, vector<8x8xf32>
    %cst_111 = arith.constant dense<0xFF800000> : vector<8xf32>
    %350 = vector.multi_reduction <maximumf>, %349, %cst_111 [1] : vector<8x8xf32> to vector<8xf32>
    %351 = vector.shape_cast %350 : vector<8xf32> to vector<8x1xf32>
    %352 = vector.broadcast %351 : vector<8x1xf32> to vector<8x8xf32>
    %353 = arith.subf %349, %352 : vector<8x8xf32>
    %354 = math.exp %353 : vector<8x8xf32>
    %cst_112 = arith.constant dense<0.000000e+00> : vector<8xf32>
    %355 = vector.multi_reduction <add>, %354, %cst_112 [1] : vector<8x8xf32> to vector<8xf32>
    %356 = vector.shape_cast %355 : vector<8xf32> to vector<8x1xf32>
    %357 = vector.broadcast %356 : vector<8x1xf32> to vector<8x8xf32>
    %358 = arith.divf %354, %357 : vector<8x8xf32>
    %359 = vector.broadcast %333 : vector<8x1xf32> to vector<8x8xf32>
    %360 = arith.mulf %359, %3 : vector<8x8xf32>
    %cst_113 = arith.constant dense<0.000000e+00> : vector<8xf32>
    %361 = vector.multi_reduction <add>, %360, %cst_113 [0] : vector<8x8xf32> to vector<8xf32>
    %362 = vector.shape_cast %361 : vector<8xf32> to vector<1x8xf32>
    %363 = vector.broadcast %362 : vector<1x8xf32> to vector<8x8xf32>
    %364 = arith.mulf %358, %363 : vector<8x8xf32>
    %cst_114 = arith.constant dense<0.000000e+00> : vector<8xf32>
    %365 = vector.multi_reduction <add>, %364, %cst_114 [1] : vector<8x8xf32> to vector<8xf32>
    %366 = vector.shape_cast %365 : vector<8xf32> to vector<8x1xf32>
    %367 = vector.broadcast %334 : vector<8x1xf32> to vector<8x8xf32>
    %368 = arith.mulf %367, %3 : vector<8x8xf32>
    %cst_115 = arith.constant dense<0.000000e+00> : vector<8xf32>
    %369 = vector.multi_reduction <add>, %368, %cst_115 [0] : vector<8x8xf32> to vector<8xf32>
    %370 = vector.shape_cast %369 : vector<8xf32> to vector<1x8xf32>
    %371 = vector.broadcast %370 : vector<1x8xf32> to vector<8x8xf32>
    %372 = arith.mulf %358, %371 : vector<8x8xf32>
    %cst_116 = arith.constant dense<0.000000e+00> : vector<8xf32>
    %373 = vector.multi_reduction <add>, %372, %cst_116 [1] : vector<8x8xf32> to vector<8xf32>
    %374 = vector.shape_cast %373 : vector<8xf32> to vector<8x1xf32>
    %375 = vector.extract_strided_slice %230 {offsets = [0, 2], sizes = [1, 1], strides = [1, 1]} : vector<1x4xf32> to vector<1x1xf32>
    %376 = vector.broadcast %375 : vector<1x1xf32> to vector<8x1xf32>
    %377 = arith.mulf %366, %376 : vector<8x1xf32>
    %378 = arith.addf %330, %377 : vector<8x1xf32>
    %379 = vector.extract_strided_slice %230 {offsets = [0, 3], sizes = [1, 1], strides = [1, 1]} : vector<1x4xf32> to vector<1x1xf32>
    %380 = vector.broadcast %379 : vector<1x1xf32> to vector<8x1xf32>
    %381 = arith.mulf %374, %380 : vector<8x1xf32>
    %382 = arith.addf %378, %381 : vector<8x1xf32>
    %383 = vector.broadcast %231 : vector<1x1xf32> to vector<8x1xf32>
    %384 = arith.addf %382, %383 : vector<8x1xf32>
    %385 = arith.negf %384 : vector<8x1xf32>
    %386 = math.exp %385 : vector<8x1xf32>
    %cst_117 = arith.constant 1.000000e+00 : f32
    %387 = vector.broadcast %cst_117 : f32 to vector<8x1xf32>
    %388 = arith.addf %387, %386 : vector<8x1xf32>
    %389 = arith.divf %387, %388 : vector<8x1xf32>
    %390 = vector.broadcast %389 : vector<8x1xf32> to vector<8x512xf32>
    %391 = arith.mulf %390, %2 : vector<8x512xf32>
    %cst_118 = arith.constant dense<0.000000e+00> : vector<512xf32>
    %392 = vector.multi_reduction <add>, %391, %cst_118 [0] : vector<8x512xf32> to vector<512xf32>
    %393 = vector.shape_cast %392 : vector<512xf32> to vector<1x512xf32>
    %c0_119 = arith.constant 0 : index
    %c1 = arith.constant 1 : index
    %394 = vector.load %arg5[%c0_119, %c1] : memref<8x68xf32, #tpu.memory_space<vmem>>, vector<8x1xf32>
    %395 = vector.broadcast %393 : vector<1x512xf32> to vector<8x512xf32>
    %396 = arith.mulf %195, %395 : vector<8x512xf32>
    %397 = vector.extract_strided_slice %396 {offsets = [0, 439], sizes = [8, 73], strides = [1, 1]} : vector<8x512xf32> to vector<8x73xf32>
    %398 = vector.extract_strided_slice %396 {offsets = [0, 0], sizes = [8, 439], strides = [1, 1]} : vector<8x512xf32> to vector<8x439xf32>
    %399 = tpu.concatenate %397, %398 in 1 : vector<8x73xf32>, vector<8x439xf32> -> vector<8x512xf32>
    %c8_120 = arith.constant 8 : index
    %c0_121 = arith.constant 0 : index
    %400 = vector.load %arg3[%c8_120, %c0_121] : memref<35x512xf32, #tpu.memory_space<vmem>>, vector<1x512xf32>
    %401 = vector.broadcast %400 : vector<1x512xf32> to vector<8x512xf32>
    %402 = arith.mulf %399, %401 : vector<8x512xf32>
    %c0_122 = arith.constant 0 : index
    %c0_123 = arith.constant 0 : index
    %403 = vector.load %arg7[%c0_122, %c0_123] : memref<216x512xf32, #tpu.memory_space<vmem>>, vector<8x512xf32>
    tpu.vector_store %arg7[%c0_122, %c0_123], %402 {strides = array<i32>} : memref<216x512xf32, #tpu.memory_space<vmem>>, vector<8x512xf32>,
    %404 = vector.extract_strided_slice %396 {offsets = [0, 440], sizes = [8, 72], strides = [1, 1]} : vector<8x512xf32> to vector<8x72xf32>
    %405 = vector.extract_strided_slice %396 {offsets = [0, 0], sizes = [8, 440], strides = [1, 1]} : vector<8x512xf32> to vector<8x440xf32>
    %406 = tpu.concatenate %404, %405 in 1 : vector<8x72xf32>, vector<8x440xf32> -> vector<8x512xf32>
    %c9_124 = arith.constant 9 : index
    %c0_125 = arith.constant 0 : index
    %407 = vector.load %arg3[%c9_124, %c0_125] : memref<35x512xf32, #tpu.memory_space<vmem>>, vector<1x512xf32>
    %408 = vector.broadcast %407 : vector<1x512xf32> to vector<8x512xf32>
    %409 = arith.mulf %406, %408 : vector<8x512xf32>
    %c8_126 = arith.constant 8 : index
    %c0_127 = arith.constant 0 : index
    %410 = vector.load %arg7[%c8_126, %c0_127] : memref<216x512xf32, #tpu.memory_space<vmem>>, vector<8x512xf32>
    tpu.vector_store %arg7[%c8_126, %c0_127], %409 {strides = array<i32>} : memref<216x512xf32, #tpu.memory_space<vmem>>, vector<8x512xf32>,
    %411 = vector.extract_strided_slice %396 {offsets = [0, 441], sizes = [8, 71], strides = [1, 1]} : vector<8x512xf32> to vector<8x71xf32>
    %412 = vector.extract_strided_slice %396 {offsets = [0, 0], sizes = [8, 441], strides = [1, 1]} : vector<8x512xf32> to vector<8x441xf32>
    %413 = tpu.concatenate %411, %412 in 1 : vector<8x71xf32>, vector<8x441xf32> -> vector<8x512xf32>
    %c10_128 = arith.constant 10 : index
    %c0_129 = arith.constant 0 : index
    %414 = vector.load %arg3[%c10_128, %c0_129] : memref<35x512xf32, #tpu.memory_space<vmem>>, vector<1x512xf32>
    %415 = vector.broadcast %414 : vector<1x512xf32> to vector<8x512xf32>
    %416 = arith.mulf %413, %415 : vector<8x512xf32>
    %c16_130 = arith.constant 16 : index
    %c0_131 = arith.constant 0 : index
    %417 = vector.load %arg7[%c16_130, %c0_131] : memref<216x512xf32, #tpu.memory_space<vmem>>, vector<8x512xf32>
    tpu.vector_store %arg7[%c16_130, %c0_131], %416 {strides = array<i32>} : memref<216x512xf32, #tpu.memory_space<vmem>>, vector<8x512xf32>,
    %418 = vector.extract_strided_slice %396 {offsets = [0, 447], sizes = [8, 65], strides = [1, 1]} : vector<8x512xf32> to vector<8x65xf32>
    %419 = vector.extract_strided_slice %396 {offsets = [0, 0], sizes = [8, 447], strides = [1, 1]} : vector<8x512xf32> to vector<8x447xf32>
    %420 = tpu.concatenate %418, %419 in 1 : vector<8x65xf32>, vector<8x447xf32> -> vector<8x512xf32>
    %c11_132 = arith.constant 11 : index
    %c0_133 = arith.constant 0 : index
    %421 = vector.load %arg3[%c11_132, %c0_133] : memref<35x512xf32, #tpu.memory_space<vmem>>, vector<1x512xf32>
    %422 = vector.broadcast %421 : vector<1x512xf32> to vector<8x512xf32>
    %423 = arith.mulf %420, %422 : vector<8x512xf32>
    %c24_134 = arith.constant 24 : index
    %c0_135 = arith.constant 0 : index
    %424 = vector.load %arg7[%c24_134, %c0_135] : memref<216x512xf32, #tpu.memory_space<vmem>>, vector<8x512xf32>
    tpu.vector_store %arg7[%c24_134, %c0_135], %423 {strides = array<i32>} : memref<216x512xf32, #tpu.memory_space<vmem>>, vector<8x512xf32>,
    %425 = vector.extract_strided_slice %396 {offsets = [0, 448], sizes = [8, 64], strides = [1, 1]} : vector<8x512xf32> to vector<8x64xf32>
    %426 = vector.extract_strided_slice %396 {offsets = [0, 0], sizes = [8, 448], strides = [1, 1]} : vector<8x512xf32> to vector<8x448xf32>
    %427 = tpu.concatenate %425, %426 in 1 : vector<8x64xf32>, vector<8x448xf32> -> vector<8x512xf32>
    %c12_136 = arith.constant 12 : index
    %c0_137 = arith.constant 0 : index
    %428 = vector.load %arg3[%c12_136, %c0_137] : memref<35x512xf32, #tpu.memory_space<vmem>>, vector<1x512xf32>
    %429 = vector.broadcast %428 : vector<1x512xf32> to vector<8x512xf32>
    %430 = arith.mulf %427, %429 : vector<8x512xf32>
    %c32_138 = arith.constant 32 : index
    %c0_139 = arith.constant 0 : index
    %431 = vector.load %arg7[%c32_138, %c0_139] : memref<216x512xf32, #tpu.memory_space<vmem>>, vector<8x512xf32>
    tpu.vector_store %arg7[%c32_138, %c0_139], %430 {strides = array<i32>} : memref<216x512xf32, #tpu.memory_space<vmem>>, vector<8x512xf32>,
    %432 = vector.extract_strided_slice %396 {offsets = [0, 449], sizes = [8, 63], strides = [1, 1]} : vector<8x512xf32> to vector<8x63xf32>
    %433 = vector.extract_strided_slice %396 {offsets = [0, 0], sizes = [8, 449], strides = [1, 1]} : vector<8x512xf32> to vector<8x449xf32>
    %434 = tpu.concatenate %432, %433 in 1 : vector<8x63xf32>, vector<8x449xf32> -> vector<8x512xf32>
    %c13_140 = arith.constant 13 : index
    %c0_141 = arith.constant 0 : index
    %435 = vector.load %arg3[%c13_140, %c0_141] : memref<35x512xf32, #tpu.memory_space<vmem>>, vector<1x512xf32>
    %436 = vector.broadcast %435 : vector<1x512xf32> to vector<8x512xf32>
    %437 = arith.mulf %434, %436 : vector<8x512xf32>
    %c40_142 = arith.constant 40 : index
    %c0_143 = arith.constant 0 : index
    %438 = vector.load %arg7[%c40_142, %c0_143] : memref<216x512xf32, #tpu.memory_space<vmem>>, vector<8x512xf32>
    tpu.vector_store %arg7[%c40_142, %c0_143], %437 {strides = array<i32>} : memref<216x512xf32, #tpu.memory_space<vmem>>, vector<8x512xf32>,
    %439 = vector.extract_strided_slice %396 {offsets = [0, 455], sizes = [8, 57], strides = [1, 1]} : vector<8x512xf32> to vector<8x57xf32>
    %440 = vector.extract_strided_slice %396 {offsets = [0, 0], sizes = [8, 455], strides = [1, 1]} : vector<8x512xf32> to vector<8x455xf32>
    %441 = tpu.concatenate %439, %440 in 1 : vector<8x57xf32>, vector<8x455xf32> -> vector<8x512xf32>
    %c14_144 = arith.constant 14 : index
    %c0_145 = arith.constant 0 : index
    %442 = vector.load %arg3[%c14_144, %c0_145] : memref<35x512xf32, #tpu.memory_space<vmem>>, vector<1x512xf32>
    %443 = vector.broadcast %442 : vector<1x512xf32> to vector<8x512xf32>
    %444 = arith.mulf %441, %443 : vector<8x512xf32>
    %c48_146 = arith.constant 48 : index
    %c0_147 = arith.constant 0 : index
    %445 = vector.load %arg7[%c48_146, %c0_147] : memref<216x512xf32, #tpu.memory_space<vmem>>, vector<8x512xf32>
    tpu.vector_store %arg7[%c48_146, %c0_147], %444 {strides = array<i32>} : memref<216x512xf32, #tpu.memory_space<vmem>>, vector<8x512xf32>,
    %446 = vector.extract_strided_slice %396 {offsets = [0, 456], sizes = [8, 56], strides = [1, 1]} : vector<8x512xf32> to vector<8x56xf32>
    %447 = vector.extract_strided_slice %396 {offsets = [0, 0], sizes = [8, 456], strides = [1, 1]} : vector<8x512xf32> to vector<8x456xf32>
    %448 = tpu.concatenate %446, %447 in 1 : vector<8x56xf32>, vector<8x456xf32> -> vector<8x512xf32>
    %c15_148 = arith.constant 15 : index
    %c0_149 = arith.constant 0 : index
    %449 = vector.load %arg3[%c15_148, %c0_149] : memref<35x512xf32, #tpu.memory_space<vmem>>, vector<1x512xf32>
    %450 = vector.broadcast %449 : vector<1x512xf32> to vector<8x512xf32>
    %451 = arith.mulf %448, %450 : vector<8x512xf32>
    %c56_150 = arith.constant 56 : index
    %c0_151 = arith.constant 0 : index
    %452 = vector.load %arg7[%c56_150, %c0_151] : memref<216x512xf32, #tpu.memory_space<vmem>>, vector<8x512xf32>
    tpu.vector_store %arg7[%c56_150, %c0_151], %451 {strides = array<i32>} : memref<216x512xf32, #tpu.memory_space<vmem>>, vector<8x512xf32>,
    %453 = vector.extract_strided_slice %396 {offsets = [0, 457], sizes = [8, 55], strides = [1, 1]} : vector<8x512xf32> to vector<8x55xf32>
    %454 = vector.extract_strided_slice %396 {offsets = [0, 0], sizes = [8, 457], strides = [1, 1]} : vector<8x512xf32> to vector<8x457xf32>
    %455 = tpu.concatenate %453, %454 in 1 : vector<8x55xf32>, vector<8x457xf32> -> vector<8x512xf32>
    %c16_152 = arith.constant 16 : index
    %c0_153 = arith.constant 0 : index
    %456 = vector.load %arg3[%c16_152, %c0_153] : memref<35x512xf32, #tpu.memory_space<vmem>>, vector<1x512xf32>
    %457 = vector.broadcast %456 : vector<1x512xf32> to vector<8x512xf32>
    %458 = arith.mulf %455, %457 : vector<8x512xf32>
    %c64_154 = arith.constant 64 : index
    %c0_155 = arith.constant 0 : index
    %459 = vector.load %arg7[%c64_154, %c0_155] : memref<216x512xf32, #tpu.memory_space<vmem>>, vector<8x512xf32>
    tpu.vector_store %arg7[%c64_154, %c0_155], %458 {strides = array<i32>} : memref<216x512xf32, #tpu.memory_space<vmem>>, vector<8x512xf32>,
    %460 = vector.extract_strided_slice %396 {offsets = [0, 503], sizes = [8, 9], strides = [1, 1]} : vector<8x512xf32> to vector<8x9xf32>
    %461 = vector.extract_strided_slice %396 {offsets = [0, 0], sizes = [8, 503], strides = [1, 1]} : vector<8x512xf32> to vector<8x503xf32>
    %462 = tpu.concatenate %460, %461 in 1 : vector<8x9xf32>, vector<8x503xf32> -> vector<8x512xf32>
    %c17_156 = arith.constant 17 : index
    %c0_157 = arith.constant 0 : index
    %463 = vector.load %arg3[%c17_156, %c0_157] : memref<35x512xf32, #tpu.memory_space<vmem>>, vector<1x512xf32>
    %464 = vector.broadcast %463 : vector<1x512xf32> to vector<8x512xf32>
    %465 = arith.mulf %462, %464 : vector<8x512xf32>
    %c72_158 = arith.constant 72 : index
    %c0_159 = arith.constant 0 : index
    %466 = vector.load %arg7[%c72_158, %c0_159] : memref<216x512xf32, #tpu.memory_space<vmem>>, vector<8x512xf32>
    tpu.vector_store %arg7[%c72_158, %c0_159], %465 {strides = array<i32>} : memref<216x512xf32, #tpu.memory_space<vmem>>, vector<8x512xf32>,
    %467 = vector.extract_strided_slice %396 {offsets = [0, 504], sizes = [8, 8], strides = [1, 1]} : vector<8x512xf32> to vector<8x8xf32>
    %468 = vector.extract_strided_slice %396 {offsets = [0, 0], sizes = [8, 504], strides = [1, 1]} : vector<8x512xf32> to vector<8x504xf32>
    %469 = tpu.concatenate %467, %468 in 1 : vector<8x8xf32>, vector<8x504xf32> -> vector<8x512xf32>
    %c18_160 = arith.constant 18 : index
    %c0_161 = arith.constant 0 : index
    %470 = vector.load %arg3[%c18_160, %c0_161] : memref<35x512xf32, #tpu.memory_space<vmem>>, vector<1x512xf32>
    %471 = vector.broadcast %470 : vector<1x512xf32> to vector<8x512xf32>
    %472 = arith.mulf %469, %471 : vector<8x512xf32>
    %c80_162 = arith.constant 80 : index
    %c0_163 = arith.constant 0 : index
    %473 = vector.load %arg7[%c80_162, %c0_163] : memref<216x512xf32, #tpu.memory_space<vmem>>, vector<8x512xf32>
    tpu.vector_store %arg7[%c80_162, %c0_163], %472 {strides = array<i32>} : memref<216x512xf32, #tpu.memory_space<vmem>>, vector<8x512xf32>,
    %474 = vector.extract_strided_slice %396 {offsets = [0, 505], sizes = [8, 7], strides = [1, 1]} : vector<8x512xf32> to vector<8x7xf32>
    %475 = vector.extract_strided_slice %396 {offsets = [0, 0], sizes = [8, 505], strides = [1, 1]} : vector<8x512xf32> to vector<8x505xf32>
    %476 = tpu.concatenate %474, %475 in 1 : vector<8x7xf32>, vector<8x505xf32> -> vector<8x512xf32>
    %c19_164 = arith.constant 19 : index
    %c0_165 = arith.constant 0 : index
    %477 = vector.load %arg3[%c19_164, %c0_165] : memref<35x512xf32, #tpu.memory_space<vmem>>, vector<1x512xf32>
    %478 = vector.broadcast %477 : vector<1x512xf32> to vector<8x512xf32>
    %479 = arith.mulf %476, %478 : vector<8x512xf32>
    %c88_166 = arith.constant 88 : index
    %c0_167 = arith.constant 0 : index
    %480 = vector.load %arg7[%c88_166, %c0_167] : memref<216x512xf32, #tpu.memory_space<vmem>>, vector<8x512xf32>
    tpu.vector_store %arg7[%c88_166, %c0_167], %479 {strides = array<i32>} : memref<216x512xf32, #tpu.memory_space<vmem>>, vector<8x512xf32>,
    %481 = vector.extract_strided_slice %396 {offsets = [0, 511], sizes = [8, 1], strides = [1, 1]} : vector<8x512xf32> to vector<8x1xf32>
    %482 = vector.extract_strided_slice %396 {offsets = [0, 0], sizes = [8, 511], strides = [1, 1]} : vector<8x512xf32> to vector<8x511xf32>
    %483 = tpu.concatenate %481, %482 in 1 : vector<8x1xf32>, vector<8x511xf32> -> vector<8x512xf32>
    %c20_168 = arith.constant 20 : index
    %c0_169 = arith.constant 0 : index
    %484 = vector.load %arg3[%c20_168, %c0_169] : memref<35x512xf32, #tpu.memory_space<vmem>>, vector<1x512xf32>
    %485 = vector.broadcast %484 : vector<1x512xf32> to vector<8x512xf32>
    %486 = arith.mulf %483, %485 : vector<8x512xf32>
    %c96_170 = arith.constant 96 : index
    %c0_171 = arith.constant 0 : index
    %487 = vector.load %arg7[%c96_170, %c0_171] : memref<216x512xf32, #tpu.memory_space<vmem>>, vector<8x512xf32>
    tpu.vector_store %arg7[%c96_170, %c0_171], %486 {strides = array<i32>} : memref<216x512xf32, #tpu.memory_space<vmem>>, vector<8x512xf32>,
    %c104_172 = arith.constant 104 : index
    %c0_173 = arith.constant 0 : index
    %488 = vector.load %arg7[%c104_172, %c0_173] : memref<216x512xf32, #tpu.memory_space<vmem>>, vector<8x512xf32>
    tpu.vector_store %arg7[%c104_172, %c0_173], %396 {strides = array<i32>} : memref<216x512xf32, #tpu.memory_space<vmem>>, vector<8x512xf32>,
    %489 = vector.extract_strided_slice %396 {offsets = [0, 1], sizes = [8, 511], strides = [1, 1]} : vector<8x512xf32> to vector<8x511xf32>
    %490 = vector.extract_strided_slice %396 {offsets = [0, 0], sizes = [8, 1], strides = [1, 1]} : vector<8x512xf32> to vector<8x1xf32>
    %491 = tpu.concatenate %489, %490 in 1 : vector<8x511xf32>, vector<8x1xf32> -> vector<8x512xf32>
    %c22_174 = arith.constant 22 : index
    %c0_175 = arith.constant 0 : index
    %492 = vector.load %arg3[%c22_174, %c0_175] : memref<35x512xf32, #tpu.memory_space<vmem>>, vector<1x512xf32>
    %493 = vector.broadcast %492 : vector<1x512xf32> to vector<8x512xf32>
    %494 = arith.mulf %491, %493 : vector<8x512xf32>
    %c112_176 = arith.constant 112 : index
    %c0_177 = arith.constant 0 : index
    %495 = vector.load %arg7[%c112_176, %c0_177] : memref<216x512xf32, #tpu.memory_space<vmem>>, vector<8x512xf32>
    tpu.vector_store %arg7[%c112_176, %c0_177], %494 {strides = array<i32>} : memref<216x512xf32, #tpu.memory_space<vmem>>, vector<8x512xf32>,
    %496 = vector.extract_strided_slice %396 {offsets = [0, 7], sizes = [8, 505], strides = [1, 1]} : vector<8x512xf32> to vector<8x505xf32>
    %497 = vector.extract_strided_slice %396 {offsets = [0, 0], sizes = [8, 7], strides = [1, 1]} : vector<8x512xf32> to vector<8x7xf32>
    %498 = tpu.concatenate %496, %497 in 1 : vector<8x505xf32>, vector<8x7xf32> -> vector<8x512xf32>
    %c23_178 = arith.constant 23 : index
    %c0_179 = arith.constant 0 : index
    %499 = vector.load %arg3[%c23_178, %c0_179] : memref<35x512xf32, #tpu.memory_space<vmem>>, vector<1x512xf32>
    %500 = vector.broadcast %499 : vector<1x512xf32> to vector<8x512xf32>
    %501 = arith.mulf %498, %500 : vector<8x512xf32>
    %c120_180 = arith.constant 120 : index
    %c0_181 = arith.constant 0 : index
    %502 = vector.load %arg7[%c120_180, %c0_181] : memref<216x512xf32, #tpu.memory_space<vmem>>, vector<8x512xf32>
    tpu.vector_store %arg7[%c120_180, %c0_181], %501 {strides = array<i32>} : memref<216x512xf32, #tpu.memory_space<vmem>>, vector<8x512xf32>,
    %503 = vector.extract_strided_slice %396 {offsets = [0, 8], sizes = [8, 504], strides = [1, 1]} : vector<8x512xf32> to vector<8x504xf32>
    %504 = vector.extract_strided_slice %396 {offsets = [0, 0], sizes = [8, 8], strides = [1, 1]} : vector<8x512xf32> to vector<8x8xf32>
    %505 = tpu.concatenate %503, %504 in 1 : vector<8x504xf32>, vector<8x8xf32> -> vector<8x512xf32>
    %c24_182 = arith.constant 24 : index
    %c0_183 = arith.constant 0 : index
    %506 = vector.load %arg3[%c24_182, %c0_183] : memref<35x512xf32, #tpu.memory_space<vmem>>, vector<1x512xf32>
    %507 = vector.broadcast %506 : vector<1x512xf32> to vector<8x512xf32>
    %508 = arith.mulf %505, %507 : vector<8x512xf32>
    %c128_184 = arith.constant 128 : index
    %c0_185 = arith.constant 0 : index
    %509 = vector.load %arg7[%c128_184, %c0_185] : memref<216x512xf32, #tpu.memory_space<vmem>>, vector<8x512xf32>
    tpu.vector_store %arg7[%c128_184, %c0_185], %508 {strides = array<i32>} : memref<216x512xf32, #tpu.memory_space<vmem>>, vector<8x512xf32>,
    %510 = vector.extract_strided_slice %396 {offsets = [0, 9], sizes = [8, 503], strides = [1, 1]} : vector<8x512xf32> to vector<8x503xf32>
    %511 = vector.extract_strided_slice %396 {offsets = [0, 0], sizes = [8, 9], strides = [1, 1]} : vector<8x512xf32> to vector<8x9xf32>
    %512 = tpu.concatenate %510, %511 in 1 : vector<8x503xf32>, vector<8x9xf32> -> vector<8x512xf32>
    %c25_186 = arith.constant 25 : index
    %c0_187 = arith.constant 0 : index
    %513 = vector.load %arg3[%c25_186, %c0_187] : memref<35x512xf32, #tpu.memory_space<vmem>>, vector<1x512xf32>
    %514 = vector.broadcast %513 : vector<1x512xf32> to vector<8x512xf32>
    %515 = arith.mulf %512, %514 : vector<8x512xf32>
    %c136_188 = arith.constant 136 : index
    %c0_189 = arith.constant 0 : index
    %516 = vector.load %arg7[%c136_188, %c0_189] : memref<216x512xf32, #tpu.memory_space<vmem>>, vector<8x512xf32>
    tpu.vector_store %arg7[%c136_188, %c0_189], %515 {strides = array<i32>} : memref<216x512xf32, #tpu.memory_space<vmem>>, vector<8x512xf32>,
    %517 = vector.extract_strided_slice %396 {offsets = [0, 55], sizes = [8, 457], strides = [1, 1]} : vector<8x512xf32> to vector<8x457xf32>
    %518 = vector.extract_strided_slice %396 {offsets = [0, 0], sizes = [8, 55], strides = [1, 1]} : vector<8x512xf32> to vector<8x55xf32>
    %519 = tpu.concatenate %517, %518 in 1 : vector<8x457xf32>, vector<8x55xf32> -> vector<8x512xf32>
    %c26_190 = arith.constant 26 : index
    %c0_191 = arith.constant 0 : index
    %520 = vector.load %arg3[%c26_190, %c0_191] : memref<35x512xf32, #tpu.memory_space<vmem>>, vector<1x512xf32>
    %521 = vector.broadcast %520 : vector<1x512xf32> to vector<8x512xf32>
    %522 = arith.mulf %519, %521 : vector<8x512xf32>
    %c144_192 = arith.constant 144 : index
    %c0_193 = arith.constant 0 : index
    %523 = vector.load %arg7[%c144_192, %c0_193] : memref<216x512xf32, #tpu.memory_space<vmem>>, vector<8x512xf32>
    tpu.vector_store %arg7[%c144_192, %c0_193], %522 {strides = array<i32>} : memref<216x512xf32, #tpu.memory_space<vmem>>, vector<8x512xf32>,
    %524 = vector.extract_strided_slice %396 {offsets = [0, 56], sizes = [8, 456], strides = [1, 1]} : vector<8x512xf32> to vector<8x456xf32>
    %525 = vector.extract_strided_slice %396 {offsets = [0, 0], sizes = [8, 56], strides = [1, 1]} : vector<8x512xf32> to vector<8x56xf32>
    %526 = tpu.concatenate %524, %525 in 1 : vector<8x456xf32>, vector<8x56xf32> -> vector<8x512xf32>
    %c27_194 = arith.constant 27 : index
    %c0_195 = arith.constant 0 : index
    %527 = vector.load %arg3[%c27_194, %c0_195] : memref<35x512xf32, #tpu.memory_space<vmem>>, vector<1x512xf32>
    %528 = vector.broadcast %527 : vector<1x512xf32> to vector<8x512xf32>
    %529 = arith.mulf %526, %528 : vector<8x512xf32>
    %c152_196 = arith.constant 152 : index
    %c0_197 = arith.constant 0 : index
    %530 = vector.load %arg7[%c152_196, %c0_197] : memref<216x512xf32, #tpu.memory_space<vmem>>, vector<8x512xf32>
    tpu.vector_store %arg7[%c152_196, %c0_197], %529 {strides = array<i32>} : memref<216x512xf32, #tpu.memory_space<vmem>>, vector<8x512xf32>,
    %531 = vector.extract_strided_slice %396 {offsets = [0, 57], sizes = [8, 455], strides = [1, 1]} : vector<8x512xf32> to vector<8x455xf32>
    %532 = vector.extract_strided_slice %396 {offsets = [0, 0], sizes = [8, 57], strides = [1, 1]} : vector<8x512xf32> to vector<8x57xf32>
    %533 = tpu.concatenate %531, %532 in 1 : vector<8x455xf32>, vector<8x57xf32> -> vector<8x512xf32>
    %c28_198 = arith.constant 28 : index
    %c0_199 = arith.constant 0 : index
    %534 = vector.load %arg3[%c28_198, %c0_199] : memref<35x512xf32, #tpu.memory_space<vmem>>, vector<1x512xf32>
    %535 = vector.broadcast %534 : vector<1x512xf32> to vector<8x512xf32>
    %536 = arith.mulf %533, %535 : vector<8x512xf32>
    %c160_200 = arith.constant 160 : index
    %c0_201 = arith.constant 0 : index
    %537 = vector.load %arg7[%c160_200, %c0_201] : memref<216x512xf32, #tpu.memory_space<vmem>>, vector<8x512xf32>
    tpu.vector_store %arg7[%c160_200, %c0_201], %536 {strides = array<i32>} : memref<216x512xf32, #tpu.memory_space<vmem>>, vector<8x512xf32>,
    %538 = vector.extract_strided_slice %396 {offsets = [0, 63], sizes = [8, 449], strides = [1, 1]} : vector<8x512xf32> to vector<8x449xf32>
    %539 = vector.extract_strided_slice %396 {offsets = [0, 0], sizes = [8, 63], strides = [1, 1]} : vector<8x512xf32> to vector<8x63xf32>
    %540 = tpu.concatenate %538, %539 in 1 : vector<8x449xf32>, vector<8x63xf32> -> vector<8x512xf32>
    %c29_202 = arith.constant 29 : index
    %c0_203 = arith.constant 0 : index
    %541 = vector.load %arg3[%c29_202, %c0_203] : memref<35x512xf32, #tpu.memory_space<vmem>>, vector<1x512xf32>
    %542 = vector.broadcast %541 : vector<1x512xf32> to vector<8x512xf32>
    %543 = arith.mulf %540, %542 : vector<8x512xf32>
    %c168_204 = arith.constant 168 : index
    %c0_205 = arith.constant 0 : index
    %544 = vector.load %arg7[%c168_204, %c0_205] : memref<216x512xf32, #tpu.memory_space<vmem>>, vector<8x512xf32>
    tpu.vector_store %arg7[%c168_204, %c0_205], %543 {strides = array<i32>} : memref<216x512xf32, #tpu.memory_space<vmem>>, vector<8x512xf32>,
    %545 = vector.extract_strided_slice %396 {offsets = [0, 64], sizes = [8, 448], strides = [1, 1]} : vector<8x512xf32> to vector<8x448xf32>
    %546 = vector.extract_strided_slice %396 {offsets = [0, 0], sizes = [8, 64], strides = [1, 1]} : vector<8x512xf32> to vector<8x64xf32>
    %547 = tpu.concatenate %545, %546 in 1 : vector<8x448xf32>, vector<8x64xf32> -> vector<8x512xf32>
    %c30_206 = arith.constant 30 : index
    %c0_207 = arith.constant 0 : index
    %548 = vector.load %arg3[%c30_206, %c0_207] : memref<35x512xf32, #tpu.memory_space<vmem>>, vector<1x512xf32>
    %549 = vector.broadcast %548 : vector<1x512xf32> to vector<8x512xf32>
    %550 = arith.mulf %547, %549 : vector<8x512xf32>
    %c176_208 = arith.constant 176 : index
    %c0_209 = arith.constant 0 : index
    %551 = vector.load %arg7[%c176_208, %c0_209] : memref<216x512xf32, #tpu.memory_space<vmem>>, vector<8x512xf32>
    tpu.vector_store %arg7[%c176_208, %c0_209], %550 {strides = array<i32>} : memref<216x512xf32, #tpu.memory_space<vmem>>, vector<8x512xf32>,
    %552 = vector.extract_strided_slice %396 {offsets = [0, 65], sizes = [8, 447], strides = [1, 1]} : vector<8x512xf32> to vector<8x447xf32>
    %553 = vector.extract_strided_slice %396 {offsets = [0, 0], sizes = [8, 65], strides = [1, 1]} : vector<8x512xf32> to vector<8x65xf32>
    %554 = tpu.concatenate %552, %553 in 1 : vector<8x447xf32>, vector<8x65xf32> -> vector<8x512xf32>
    %c31_210 = arith.constant 31 : index
    %c0_211 = arith.constant 0 : index
    %555 = vector.load %arg3[%c31_210, %c0_211] : memref<35x512xf32, #tpu.memory_space<vmem>>, vector<1x512xf32>
    %556 = vector.broadcast %555 : vector<1x512xf32> to vector<8x512xf32>
    %557 = arith.mulf %554, %556 : vector<8x512xf32>
    %c184_212 = arith.constant 184 : index
    %c0_213 = arith.constant 0 : index
    %558 = vector.load %arg7[%c184_212, %c0_213] : memref<216x512xf32, #tpu.memory_space<vmem>>, vector<8x512xf32>
    tpu.vector_store %arg7[%c184_212, %c0_213], %557 {strides = array<i32>} : memref<216x512xf32, #tpu.memory_space<vmem>>, vector<8x512xf32>,
    %559 = vector.extract_strided_slice %396 {offsets = [0, 71], sizes = [8, 441], strides = [1, 1]} : vector<8x512xf32> to vector<8x441xf32>
    %560 = vector.extract_strided_slice %396 {offsets = [0, 0], sizes = [8, 71], strides = [1, 1]} : vector<8x512xf32> to vector<8x71xf32>
    %561 = tpu.concatenate %559, %560 in 1 : vector<8x441xf32>, vector<8x71xf32> -> vector<8x512xf32>
    %c32_214 = arith.constant 32 : index
    %c0_215 = arith.constant 0 : index
    %562 = vector.load %arg3[%c32_214, %c0_215] : memref<35x512xf32, #tpu.memory_space<vmem>>, vector<1x512xf32>
    %563 = vector.broadcast %562 : vector<1x512xf32> to vector<8x512xf32>
    %564 = arith.mulf %561, %563 : vector<8x512xf32>
    %c192_216 = arith.constant 192 : index
    %c0_217 = arith.constant 0 : index
    %565 = vector.load %arg7[%c192_216, %c0_217] : memref<216x512xf32, #tpu.memory_space<vmem>>, vector<8x512xf32>
    tpu.vector_store %arg7[%c192_216, %c0_217], %564 {strides = array<i32>} : memref<216x512xf32, #tpu.memory_space<vmem>>, vector<8x512xf32>,
    %566 = vector.extract_strided_slice %396 {offsets = [0, 72], sizes = [8, 440], strides = [1, 1]} : vector<8x512xf32> to vector<8x440xf32>
    %567 = vector.extract_strided_slice %396 {offsets = [0, 0], sizes = [8, 72], strides = [1, 1]} : vector<8x512xf32> to vector<8x72xf32>
    %568 = tpu.concatenate %566, %567 in 1 : vector<8x440xf32>, vector<8x72xf32> -> vector<8x512xf32>
    %c33_218 = arith.constant 33 : index
    %c0_219 = arith.constant 0 : index
    %569 = vector.load %arg3[%c33_218, %c0_219] : memref<35x512xf32, #tpu.memory_space<vmem>>, vector<1x512xf32>
    %570 = vector.broadcast %569 : vector<1x512xf32> to vector<8x512xf32>
    %571 = arith.mulf %568, %570 : vector<8x512xf32>
    %c200_220 = arith.constant 200 : index
    %c0_221 = arith.constant 0 : index
    %572 = vector.load %arg7[%c200_220, %c0_221] : memref<216x512xf32, #tpu.memory_space<vmem>>, vector<8x512xf32>
    tpu.vector_store %arg7[%c200_220, %c0_221], %571 {strides = array<i32>} : memref<216x512xf32, #tpu.memory_space<vmem>>, vector<8x512xf32>,
    %573 = vector.extract_strided_slice %396 {offsets = [0, 73], sizes = [8, 439], strides = [1, 1]} : vector<8x512xf32> to vector<8x439xf32>
    %574 = vector.extract_strided_slice %396 {offsets = [0, 0], sizes = [8, 73], strides = [1, 1]} : vector<8x512xf32> to vector<8x73xf32>
    %575 = tpu.concatenate %573, %574 in 1 : vector<8x439xf32>, vector<8x73xf32> -> vector<8x512xf32>
    %c34_222 = arith.constant 34 : index
    %c0_223 = arith.constant 0 : index
    %576 = vector.load %arg3[%c34_222, %c0_223] : memref<35x512xf32, #tpu.memory_space<vmem>>, vector<1x512xf32>
    %577 = vector.broadcast %576 : vector<1x512xf32> to vector<8x512xf32>
    %578 = arith.mulf %575, %577 : vector<8x512xf32>
    %c208_224 = arith.constant 208 : index
    %c0_225 = arith.constant 0 : index
    %579 = vector.load %arg7[%c208_224, %c0_225] : memref<216x512xf32, #tpu.memory_space<vmem>>, vector<8x512xf32>
    tpu.vector_store %arg7[%c208_224, %c0_225], %578 {strides = array<i32>} : memref<216x512xf32, #tpu.memory_space<vmem>>, vector<8x512xf32>,
    %c8_226 = arith.constant 8 : index
    %c0_227 = arith.constant 0 : index
    %580 = vector.load %arg4[%c8_226, %c0_227] : memref<16x216xf32, #tpu.memory_space<vmem>>, vector<8x216xf32>
    %c0_228 = arith.constant 0 : index
    %c0_229 = arith.constant 0 : index
    %581 = vector.load %arg7[%c0_228, %c0_229] : memref<216x512xf32, #tpu.memory_space<vmem>>, vector<216x512xf32>
    %cst_230 = arith.constant dense<0.000000e+00> : vector<8x512xf32>
    %582 = tpu.matmul %580, %581, %cst_230 {dimension_numbers = #tpu.dot_dimension_numbers<[1], [0], [0], [1], [0, 0, 1, 1], [], []>} : vector<8x216xf32>, vector<216x512xf32>, vector<8x512xf32> -> vector<8x512xf32>
    %583 = vector.broadcast %394 : vector<8x1xf32> to vector<8x512xf32>
    %584 = arith.addf %582, %583 : vector<8x512xf32>
    %585 = arith.addf %584, %1 : vector<8x512xf32>
    %cst_231 = arith.constant 0.000000e+00 : f32
    %586 = vector.broadcast %cst_231 : f32 to vector<8x512xf32>
    %587 = arith.maximumf %585, %586 : vector<8x512xf32>
    %c0_232 = arith.constant 0 : index
    %c0_233 = arith.constant 0 : index
    %c0_234 = arith.constant 0 : index
    %588 = vector.load %arg6[%c0_232, %c0_233, %c0_234] : memref<1x8x512xf32, #tpu.memory_space<vmem>>, vector<1x8x512xf32>
    %589 = vector.shape_cast %588 : vector<1x8x512xf32> to vector<8x512xf32>
    %590 = vector.shape_cast %587 : vector<8x512xf32> to vector<1x8x512xf32>
    tpu.vector_store %arg6[%c0_232, %c0_233, %c0_234], %590 {strides = array<i32>} : memref<1x8x512xf32, #tpu.memory_space<vmem>>, vector<1x8x512xf32>,
    return
  }
  func.func @transform_0(%arg0: i32) -> (i32, i32, i32) {
    %c0_i32 = arith.constant 0 : i32
    %c0_i32_0 = arith.constant 0 : i32
    %c0_i32_1 = arith.constant 0 : i32
    return %arg0, %c0_i32, %c0_i32_0 : i32, i32, i32
  }
  func.func @transform_1(%arg0: i32) -> (i32, i32, i32) {
    %c0_i32 = arith.constant 0 : i32
    %c0_i32_0 = arith.constant 0 : i32
    %c0_i32_1 = arith.constant 0 : i32
    return %arg0, %c0_i32, %c0_i32_0 : i32, i32, i32
  }
  func.func @transform_2(%arg0: i32) -> (i32, i32) {
    %c0_i32 = arith.constant 0 : i32
    %c0_i32_0 = arith.constant 0 : i32
    %c0_i32_1 = arith.constant 0 : i32
    return %c0_i32, %c0_i32_0 : i32, i32
  }
  func.func @transform_3(%arg0: i32) -> (i32, i32) {
    %c0_i32 = arith.constant 0 : i32
    %c0_i32_0 = arith.constant 0 : i32
    %c0_i32_1 = arith.constant 0 : i32
    return %c0_i32, %c0_i32_0 : i32, i32
  }
  func.func @transform_4(%arg0: i32) -> (i32, i32) {
    %c0_i32 = arith.constant 0 : i32
    %c0_i32_0 = arith.constant 0 : i32
    %c0_i32_1 = arith.constant 0 : i32
    return %c0_i32, %c0_i32_0 : i32, i32
  }
  func.func @transform_5(%arg0: i32) -> (i32, i32, i32) {
    %c0_i32 = arith.constant 0 : i32
    %c0_i32_0 = arith.constant 0 : i32
    %c0_i32_1 = arith.constant 0 : i32
    return %arg0, %c0_i32, %c0_i32_0 : i32, i32, i32
  }
}

</mosaic_0001>

<llo_original>
// kernel: basic_block_forward.1
$region0: #{basic_block_forward.1}
  #allocation0 [shape = 'u32[]', space=smem, size = 0x4, offset = 0x4, fixed_abs, tag = 'smem constant byte address 0x4 - core index']
  #allocation1 [shape = 'u32[72,128]{1,0:T(1,128)}', space=vmem, size = 0x9000, scoped, tag = 'internal scratch']
  #allocation2 [shape = 'f32[216,512]{1,0:T(8,128)}', space=vmem, size = 0x6c000, scoped, tag = 'scratch operand']
  %s0 = inlined_call_operand.vmem [shape: f32[2,8,512], index: 0, kind: input, shape index: {}]
  %s1 = inlined_call_operand.vmem [shape: f32[2,1,16], index: 1, kind: input, shape index: {}]
  %s2 = inlined_call_operand.vmem [shape: f32[35,512], index: 2, kind: input, shape index: {}]
  %s3 = inlined_call_operand.vmem [shape: f32[16,216], index: 3, kind: input, shape index: {}]
  %s4 = inlined_call_operand.vmem [shape: f32[8,68], index: 4, kind: input, shape index: {}]
  %s5 = inlined_call_operand.vmem [shape: f32[2,8,512], index: 5, kind: output, shape index: {}]
  %s6 = sld [smem:[#allocation0]]
  $region53: #{basic_block_forward.1} parent=0
    _
  %s8 = ssub.s32 1, %s6
  %s9 = scalar_select 0, %s8, %s6
  loop: start=0, step=1, limit=4
  $region2: #{basic_block_forward.1} parent=0 // loop_pre_header
    _
  $region3: #{basic_block_forward.1} parent=0 // loop_header
    %s11 = sphi 0, %s15
    %p12 = scmp.ge.s32.totalorder %s11, 4
    %s21 = sphi 0, %s23
    %s24 = sphi 0, %s21
    %s25 = sphi 0, %s24
    %s41 = sphi 0, %s25
    %s47 = sphi 0, %s49
    %s50 = sphi 0, %s47
    %s51 = sphi 0, %s50
    %s67 = sphi 0, %s51
    %s71 = sphi 0, %s71
    %s73 = sphi 0, %s71
    %s74 = sphi 0, %s73
    %s88 = sphi 0, %s74
    %s92 = sphi 0, %s92
    %s94 = sphi 0, %s92
    %s95 = sphi 0, %s94
    %s109 = sphi 0, %s95
    %s113 = sphi 0, %s113
    %s115 = sphi 0, %s113
    %s116 = sphi 0, %s115
    %s130 = sphi 0, %s116
    %s136 = sphi 0, %s138
    %s139 = sphi 0, %s136
    %s140 = sphi 0, %s139
    %s156 = sphi 0, %s140
  $region4: #{basic_block_forward.1} parent=0 // loop_header_branch
    %14 = sbr.rel (%p12) target = $region8
  $region5: #{basic_block_forward.1} parent=0 // loop_body
    %s16 = ssub.s32 %s11, 1
    %s17 = ssub.s32 %s11, 2
    %s18 = sadd.s32 %s11, 1
    %s19 = ssub.s32 %s11, %s18
    %p20 = scmp.eq.s32.totalorder %s19, 0
    %s22 = sadd.s32 %s21, 1
    %s23 = scalar_select %p20, %s21, %s22
    %p26 = pneg %p20
    %p27 = scmp.eq.s32.totalorder %s11, 1
    %p28 = por %p26, %p27
    %p29 = scmp.ne.s32.totalorder %s21, %s24
    %p30 = scmp.eq.s32.totalorder %s11, 0
    %p31 = por %p29, %p30
    %p32 = scmp.ne.s32.totalorder %s21, %s24
    %p33 = scmp.eq.s32.totalorder %s16, 1
    %p34 = por %p32, %p33
    %p35 = scmp.ne.s32.totalorder %s24, %s25
    %p36 = scmp.eq.s32.totalorder %s16, 0
    %p37 = por %p35, %p36
    %p38 = scmp.ne.s32.totalorder %s24, %s25
    %p39 = scmp.eq.s32.totalorder %s17, 1
    %p40 = por %p38, %p39
    %p42 = scmp.ne.s32.totalorder %s25, %s41
    %p43 = scmp.eq.s32.totalorder %s17, 0
    %p44 = por %p42, %p43
    %s45 = ssub.s32 %s11, %s18
    %p46 = scmp.eq.s32.totalorder %s45, 0
    %s48 = sadd.s32 %s47, 1
    %s49 = scalar_select %p46, %s47, %s48
    %p52 = pneg %p46
    %p53 = scmp.eq.s32.totalorder %s11, 1
    %p54 = por %p52, %p53
    %p55 = scmp.ne.s32.totalorder %s47, %s50
    %p56 = scmp.eq.s32.totalorder %s11, 0
    %p57 = por %p55, %p56
    %p58 = scmp.ne.s32.totalorder %s47, %s50
    %p59 = scmp.eq.s32.totalorder %s16, 1
    %p60 = por %p58, %p59
    %p61 = scmp.ne.s32.totalorder %s50, %s51
    %p62 = scmp.eq.s32.totalorder %s16, 0
    %p63 = por %p61, %p62
    %p64 = scmp.ne.s32.totalorder %s50, %s51
    %p65 = scmp.eq.s32.totalorder %s17, 1
    %p66 = por %p64, %p65
    %p68 = scmp.ne.s32.totalorder %s51, %s67
    %p69 = scmp.eq.s32.totalorder %s17, 0
    %p70 = por %p68, %p69
    %s72 = sadd.s32 %s71, 1
    %p75 = scmp.eq.s32.totalorder %s11, 1
    %p76 = scmp.ne.s32.totalorder %s71, %s73
    %p77 = scmp.eq.s32.totalorder %s11, 0
    %p78 = por %p76, %p77
    %p79 = scmp.ne.s32.totalorder %s71, %s73
    %p80 = scmp.eq.s32.totalorder %s16, 1
    %p81 = por %p79, %p80
    %p82 = scmp.ne.s32.totalorder %s73, %s74
    %p83 = scmp.eq.s32.totalorder %s16, 0
    %p84 = por %p82, %p83
    %p85 = scmp.ne.s32.totalorder %s73, %s74
    %p86 = scmp.eq.s32.totalorder %s17, 1
    %p87 = por %p85, %p86
    %p89 = scmp.ne.s32.totalorder %s74, %s88
    %p90 = scmp.eq.s32.totalorder %s17, 0
    %p91 = por %p89, %p90
    %s93 = sadd.s32 %s92, 1
    %p96 = scmp.eq.s32.totalorder %s11, 1
    %p97 = scmp.ne.s32.totalorder %s92, %s94
    %p98 = scmp.eq.s32.totalorder %s11, 0
    %p99 = por %p97, %p98
    %p100 = scmp.ne.s32.totalorder %s92, %s94
    %p101 = scmp.eq.s32.totalorder %s16, 1
    %p102 = por %p100, %p101
    %p103 = scmp.ne.s32.totalorder %s94, %s95
    %p104 = scmp.eq.s32.totalorder %s16, 0
    %p105 = por %p103, %p104
    %p106 = scmp.ne.s32.totalorder %s94, %s95
    %p107 = scmp.eq.s32.totalorder %s17, 1
    %p108 = por %p106, %p107
    %p110 = scmp.ne.s32.totalorder %s95, %s109
    %p111 = scmp.eq.s32.totalorder %s17, 0
    %p112 = por %p110, %p111
    %s114 = sadd.s32 %s113, 1
    %p117 = scmp.eq.s32.totalorder %s11, 1
    %p118 = scmp.ne.s32.totalorder %s113, %s115
    %p119 = scmp.eq.s32.totalorder %s11, 0
    %p120 = por %p118, %p119
    %p121 = scmp.ne.s32.totalorder %s113, %s115
    %p122 = scmp.eq.s32.totalorder %s16, 1
    %p123 = por %p121, %p122
    %p124 = scmp.ne.s32.totalorder %s115, %s116
    %p125 = scmp.eq.s32.totalorder %s16, 0
    %p126 = por %p124, %p125
    %p127 = scmp.ne.s32.totalorder %s115, %s116
    %p128 = scmp.eq.s32.totalorder %s17, 1
    %p129 = por %p127, %p128
    %p131 = scmp.ne.s32.totalorder %s116, %s130
    %p132 = scmp.eq.s32.totalorder %s17, 0
    %p133 = por %p131, %p132
    %s134 = ssub.s32 %s11, %s18
    %p135 = scmp.eq.s32.totalorder %s134, 0
    %s137 = sadd.s32 %s136, 1
    %s138 = scalar_select %p135, %s136, %s137
    %p141 = pneg %p135
    %p142 = scmp.eq.s32.totalorder %s11, 1
    %p143 = por %p141, %p142
    %p144 = scmp.ne.s32.totalorder %s136, %s139
    %p145 = scmp.eq.s32.totalorder %s11, 0
    %p146 = por %p144, %p145
    %p147 = scmp.ne.s32.totalorder %s136, %s139
    %p148 = scmp.eq.s32.totalorder %s16, 1
    %p149 = por %p147, %p148
    %p150 = scmp.ne.s32.totalorder %s139, %s140
    %p151 = scmp.eq.s32.totalorder %s16, 0
    %p152 = por %p150, %p151
    %p153 = scmp.ne.s32.totalorder %s139, %s140
    %p154 = scmp.eq.s32.totalorder %s17, 1
    %p155 = por %p153, %p154
    %p157 = scmp.ne.s32.totalorder %s140, %s156
    %p158 = scmp.eq.s32.totalorder %s17, 0
    %p159 = por %p157, %p158
    %p160 = scmp.le.s32.totalorder 1, %s11
    %p161 = scmp.lt.s32.totalorder %s11, 3
    %p162 = pnand %p160, %p161
    %p163 = pneg %p162
    // Predicated region
    $region9: #{basic_block_forward.1} parent=5 // pred_check
      _
    $region10: #{basic_block_forward.1} parent=5 // pred_check_branch
      %165 = sbr.rel (%p162) target = $region12
    $region11: #{basic_block_forward.1} parent=5 // pred_region
      %s166 = ssub.s32 %s11, 1
      // Predicated region
      $region13: #{basic_block_forward.1} parent=11 // pred_check
        %p167 = pneg %p84
      $region14: #{basic_block_forward.1} parent=11 // pred_check_branch
        %169 = sbr.rel (%p167) target = $region16
      $region15: #{basic_block_forward.1} parent=11 // pred_region
        _
      $region16: #{basic_block_forward.1} parent=11 // pred_fallthru
        _
      // Predicated region
      $region17: #{basic_block_forward.1} parent=11 // pred_check
        %p170 = pneg %p105
      $region18: #{basic_block_forward.1} parent=11 // pred_check_branch
        %172 = sbr.rel (%p170) target = $region20
      $region19: #{basic_block_forward.1} parent=11 // pred_region
        _
      $region20: #{basic_block_forward.1} parent=11 // pred_fallthru
        _
      // Predicated region
      $region21: #{basic_block_forward.1} parent=11 // pred_check
        %p173 = pneg %p126
      $region22: #{basic_block_forward.1} parent=11 // pred_check_branch
        %175 = sbr.rel (%p173) target = $region24
      $region23: #{basic_block_forward.1} parent=11 // pred_region
        _
      $region24: #{basic_block_forward.1} parent=11 // pred_fallthru
        _
    $region12: #{basic_block_forward.1} parent=5 // pred_fallthru
      _
    %p176 = scmp.lt.s32.totalorder %s11, 2
    // Predicated region
    $region25: #{basic_block_forward.1} parent=5 // pred_check
      %p177 = pneg %p176
    $region26: #{basic_block_forward.1} parent=5 // pred_check_branch
      %179 = sbr.rel (%p177) target = $region28
    $region27: #{basic_block_forward.1} parent=5 // pred_region
      // Predicated region
      $region29: #{basic_block_forward.1} parent=27 // pred_check
        %p180 = pneg %p31
      $region30: #{basic_block_forward.1} parent=27 // pred_check_branch
        %182 = sbr.rel (%p180) target = $region32
      $region31: #{basic_block_forward.1} parent=27 // pred_region
        %p183 = scmp.lt.s32.totalorder %s11, 1
        %s184 = scalar_select %p183, %s11, 1
        %s185 = smul.addr %s184, 4
        %s186 = smul.addr %s185, 8
        %s187 = scalar_lea.vmem %s0, %s186
      $region32: #{basic_block_forward.1} parent=27 // pred_fallthru
        _
      // Predicated region
      $region33: #{basic_block_forward.1} parent=27 // pred_check
        %p188 = pneg %p57
      $region34: #{basic_block_forward.1} parent=27 // pred_check_branch
        %190 = sbr.rel (%p188) target = $region36
      $region35: #{basic_block_forward.1} parent=27 // pred_region
        %p191 = scmp.lt.s32.totalorder %s11, 1
        %s192 = scalar_select %p191, %s11, 1
        %s193 = scalar_lea.vmem %s1, %s192
      $region36: #{basic_block_forward.1} parent=27 // pred_fallthru
        _
    $region28: #{basic_block_forward.1} parent=5 // pred_fallthru
      _
    %p194 = scmp.le.s32.totalorder 1, %s11
    %p195 = scmp.lt.s32.totalorder %s11, 3
    %p196 = pnand %p194, %p195
    %p197 = pneg %p196
    // Predicated region
    $region37: #{basic_block_forward.1} parent=5 // pred_check
      _
    $region38: #{basic_block_forward.1} parent=5 // pred_check_branch
      %199 = sbr.rel (%p196) target = $region40
    $region39: #{basic_block_forward.1} parent=5 // pred_region
      %s200 = ssub.s32 %s11, 1
      %p201 = scmp.lt.s32.totalorder %s16, 1
      %s202 = scalar_select %p201, %s16, 1
      %s203 = smul.addr %s202, 4
      %s204 = smul.addr %s203, 8
      %s205 = scalar_lea.vmem %s0, %s204
      %p206 = pneg %p37
      %p207 = pneg %p34
      %p208 = scmp.lt.s32.totalorder %s16, 1
      %s209 = scalar_select %p208, %s16, 1
      %s210 = scalar_lea.vmem %s1, %s209
      %p211 = pneg %p63
      %p212 = pneg %p60
      %p213 = pneg %p84
      %p214 = pneg %p81
      %p215 = pneg %p105
      %p216 = pneg %p102
      %p217 = pneg %p126
      %p218 = pneg %p123
      %p219 = pneg %p152
      %p220 = pneg %p149
      %p221 = scmp.lt.s32.totalorder %s16, 1
      %s222 = scalar_select %p221, %s16, 1
      %s223 = smul.addr %s222, 4
      %s224 = smul.addr %s223, 8
      %s225 = scalar_lea.vmem %s5, %s224
      %p226 = scmp.lt.s32.totalorder %s16, 1
      %s227 = scalar_select %p226, %s16, 1
      %s228 = smul.addr %s227, 4
      %s229 = smul.addr %s228, 8
      %s230 = scalar_lea.vmem %s0, %s229
      %p231 = scmp.lt.s32.totalorder %s16, 1
      %s232 = scalar_select %p231, %s16, 1
      %s233 = scalar_lea.vmem %s1, %s232
      %p234 = scmp.lt.s32.totalorder %s16, 1
      %s235 = scalar_select %p234, %s16, 1
      %s236 = smul.addr %s235, 4
      %s237 = smul.addr %s236, 8
      %s238 = scalar_lea.vmem %s5, %s237
      %v239 = vld [vmem:[%s230] sm:$0xff]
      %v240 = vld [vmem:[%s230 + $0x8] sm:$0xff]
      %v241 = vld [vmem:[%s230 + $0x10] sm:$0xff]
      %v242 = vld [vmem:[%s230 + $0x18] sm:$0xff]
      %v243 = vld [vmem:[%s2] sm:$0xff]
      %v244 = vld [vmem:[%s2 + $0x8] sm:$0xff]
      %v245 = vld [vmem:[%s2 + $0x10] sm:$0xff]
      %v246 = vld [vmem:[%s2 + $0x18] sm:$0xff]
      %v247 = vld [vmem:[%s4] sm:$0xff]
      %249 = vrot.lane.b32.xlu0 %v242, 73
      %v250 = vpop.permute.xlu0 %249
      %255 = vrot.lane.b32.xlu0 %v239, 73
      %v256 = vpop.permute.xlu0 %255
      %257 = vrot.lane.b32.xlu0 %v240, 73
      %v258 = vpop.permute.xlu0 %257
      %259 = vrot.lane.b32.xlu0 %v241, 73
      %v260 = vpop.permute.xlu0 %259
      %vm261 = vcmask 596992
      %v262 = vsel %vm261, %v256, %v258
      %v263 = vsel %vm261, %v258, %v260
      %v264 = vsel %vm261, %v260, %v250
      %v269 = vsel %vm261, %v250, %v256
      %s270 = scalar_lea.vmem %s2, 32
      %v271 = vld [vmem:[%s270] ss:$8 sm:$0xf]
      %v273 = vperm.slane %v271, 0
      %v274 = vperm.slane %v271, 1
      %v275 = vperm.slane %v271, 2
      %v276 = vperm.slane %v271, 3
      %v281 = vmul.f32 %v269, %v273
      %v282 = vmul.f32 %v262, %v274
      %v283 = vmul.f32 %v263, %v275
      %v284 = vmul.f32 %v264, %v276
      %285 = vst [vmem:[#allocation2] sm:$0xff] %v281
      %286 = vst [vmem:[#allocation2 + $0x8] sm:$0xff] %v282
      %287 = vst [vmem:[#allocation2 + $0x10] sm:$0xff] %v283
      %288 = vst [vmem:[#allocation2 + $0x18] sm:$0xff] %v284
      %289 = vrot.lane.b32.xlu0 %v242, 72
      %v290 = vpop.permute.xlu0 %289
      %292 = vrot.lane.b32.xlu0 %v239, 72
      %v293 = vpop.permute.xlu0 %292
      %294 = vrot.lane.b32.xlu0 %v240, 72
      %v295 = vpop.permute.xlu0 %294
      %296 = vrot.lane.b32.xlu0 %v241, 72
      %v297 = vpop.permute.xlu0 %296
      %vm298 = vcmask 588800
      %v299 = vsel %vm298, %v293, %v295
      %v300 = vsel %vm298, %v295, %v297
      %v301 = vsel %vm298, %v297, %v290
      %v306 = vsel %vm298, %v290, %v293
      %s307 = scalar_lea.vmem %s2, 33
      %v308 = vld [vmem:[%s307] ss:$8 sm:$0xf]
      %v310 = vperm.slane %v308, 0
      %v311 = vperm.slane %v308, 1
      %v312 = vperm.slane %v308, 2
      %v313 = vperm.slane %v308, 3
      %v318 = vmul.f32 %v306, %v310
      %v319 = vmul.f32 %v299, %v311
      %v320 = vmul.f32 %v300, %v312
      %v321 = vmul.f32 %v301, %v313
      %322 = vst [vmem:[#allocation2 + $0x20] sm:$0xff] %v318
      %323 = vst [vmem:[#allocation2 + $0x28] sm:$0xff] %v319
      %324 = vst [vmem:[#allocation2 + $0x30] sm:$0xff] %v320
      %325 = vst [vmem:[#allocation2 + $0x38] sm:$0xff] %v321
      %326 = vrot.lane.b32.xlu0 %v242, 71
      %v327 = vpop.permute.xlu0 %326
      %329 = vrot.lane.b32.xlu0 %v239, 71
      %v330 = vpop.permute.xlu0 %329
      %331 = vrot.lane.b32.xlu0 %v240, 71
      %v332 = vpop.permute.xlu0 %331
      %333 = vrot.lane.b32.xlu0 %v241, 71
      %v334 = vpop.permute.xlu0 %333
      %vm335 = vcmask 580608
      %v336 = vsel %vm335, %v330, %v332
      %v337 = vsel %vm335, %v332, %v334
      %v338 = vsel %vm335, %v334, %v327
      %v343 = vsel %vm335, %v327, %v330
      %s344 = scalar_lea.vmem %s2, 34
      %v345 = vld [vmem:[%s344] ss:$8 sm:$0xf]
      %v347 = vperm.slane %v345, 0
      %v348 = vperm.slane %v345, 1
      %v349 = vperm.slane %v345, 2
      %v350 = vperm.slane %v345, 3
      %v355 = vmul.f32 %v343, %v347
      %v356 = vmul.f32 %v336, %v348
      %v357 = vmul.f32 %v337, %v349
      %v358 = vmul.f32 %v338, %v350
      %359 = vst [vmem:[#allocation2 + $0x40] sm:$0xff] %v355
      %360 = vst [vmem:[#allocation2 + $0x48] sm:$0xff] %v356
      %361 = vst [vmem:[#allocation2 + $0x50] sm:$0xff] %v357
      %362 = vst [vmem:[#allocation2 + $0x58] sm:$0xff] %v358
      %363 = vrot.lane.b32.xlu0 %v242, 65
      %v364 = vpop.permute.xlu0 %363
      %366 = vrot.lane.b32.xlu0 %v239, 65
      %v367 = vpop.permute.xlu0 %366
      %368 = vrot.lane.b32.xlu0 %v240, 65
      %v369 = vpop.permute.xlu0 %368
      %370 = vrot.lane.b32.xlu0 %v241, 65
      %v371 = vpop.permute.xlu0 %370
      %vm372 = vcmask 531456
      %v373 = vsel %vm372, %v367, %v369
      %v374 = vsel %vm372, %v369, %v371
      %v375 = vsel %vm372, %v371, %v364
      %v380 = vsel %vm372, %v364, %v367
      %s381 = scalar_lea.vmem %s2, 35
      %v382 = vld [vmem:[%s381] ss:$8 sm:$0xf]
      %v384 = vperm.slane %v382, 0
      %v385 = vperm.slane %v382, 1
      %v386 = vperm.slane %v382, 2
      %v387 = vperm.slane %v382, 3
      %v392 = vmul.f32 %v380, %v384
      %v393 = vmul.f32 %v373, %v385
      %v394 = vmul.f32 %v374, %v386
      %v395 = vmul.f32 %v375, %v387
      %396 = vst [vmem:[#allocation2 + $0x60] sm:$0xff] %v392
      %397 = vst [vmem:[#allocation2 + $0x68] sm:$0xff] %v393
      %398 = vst [vmem:[#allocation2 + $0x70] sm:$0xff] %v394
      %399 = vst [vmem:[#allocation2 + $0x78] sm:$0xff] %v395
      %400 = vrot.lane.b32.xlu0 %v242, 64
      %v401 = vpop.permute.xlu0 %400
      %403 = vrot.lane.b32.xlu0 %v239, 64
      %v404 = vpop.permute.xlu0 %403
      %405 = vrot.lane.b32.xlu0 %v240, 64
      %v406 = vpop.permute.xlu0 %405
      %407 = vrot.lane.b32.xlu0 %v241, 64
      %v408 = vpop.permute.xlu0 %407
      %vm409 = vcmask 523264
      %v410 = vsel %vm409, %v404, %v406
      %v411 = vsel %vm409, %v406, %v408
      %v412 = vsel %vm409, %v408, %v401
      %v417 = vsel %vm409, %v401, %v404
      %s418 = scalar_lea.vmem %s2, 36
      %v419 = vld [vmem:[%s418] ss:$8 sm:$0xf]
      %v421 = vperm.slane %v419, 0
      %v422 = vperm.slane %v419, 1
      %v423 = vperm.slane %v419, 2
      %v424 = vperm.slane %v419, 3
      %v429 = vmul.f32 %v417, %v421
      %v430 = vmul.f32 %v410, %v422
      %v431 = vmul.f32 %v411, %v423
      %v432 = vmul.f32 %v412, %v424
      %433 = vst [vmem:[#allocation2 + $0x80] sm:$0xff] %v429
      %434 = vst [vmem:[#allocation2 + $0x88] sm:$0xff] %v430
      %435 = vst [vmem:[#allocation2 + $0x90] sm:$0xff] %v431
      %436 = vst [vmem:[#allocation2 + $0x98] sm:$0xff] %v432
      %437 = vrot.lane.b32.xlu0 %v242, 63
      %v438 = vpop.permute.xlu0 %437
      %440 = vrot.lane.b32.xlu0 %v239, 63
      %v441 = vpop.permute.xlu0 %440
      %442 = vrot.lane.b32.xlu0 %v240, 63
      %v443 = vpop.permute.xlu0 %442
      %444 = vrot.lane.b32.xlu0 %v241, 63
      %v445 = vpop.permute.xlu0 %444
      %vm446 = vcmask 515072
      %v447 = vsel %vm446, %v441, %v443
      %v448 = vsel %vm446, %v443, %v445
      %v449 = vsel %vm446, %v445, %v438
      %v454 = vsel %vm446, %v438, %v441
      %s455 = scalar_lea.vmem %s2, 37
      %v456 = vld [vmem:[%s455] ss:$8 sm:$0xf]
      %v458 = vperm.slane %v456, 0
      %v459 = vperm.slane %v456, 1
      %v460 = vperm.slane %v456, 2
      %v461 = vperm.slane %v456, 3
      %v466 = vmul.f32 %v454, %v458
      %v467 = vmul.f32 %v447, %v459
      %v468 = vmul.f32 %v448, %v460
      %v469 = vmul.f32 %v449, %v461
      %470 = vst [vmem:[#allocation2 + $0xa0] sm:$0xff] %v466
      %471 = vst [vmem:[#allocation2 + $0xa8] sm:$0xff] %v467
      %472 = vst [vmem:[#allocation2 + $0xb0] sm:$0xff] %v468
      %473 = vst [vmem:[#allocation2 + $0xb8] sm:$0xff] %v469
      %474 = vrot.lane.b32.xlu0 %v242, 57
      %v475 = vpop.permute.xlu0 %474
      %477 = vrot.lane.b32.xlu0 %v239, 57
      %v478 = vpop.permute.xlu0 %477
      %479 = vrot.lane.b32.xlu0 %v240, 57
      %v480 = vpop.permute.xlu0 %479
      %481 = vrot.lane.b32.xlu0 %v241, 57
      %v482 = vpop.permute.xlu0 %481
      %vm483 = vcmask 465920
      %v484 = vsel %vm483, %v478, %v480
      %v485 = vsel %vm483, %v480, %v482
      %v486 = vsel %vm483, %v482, %v475
      %v491 = vsel %vm483, %v475, %v478
      %s492 = scalar_lea.vmem %s2, 38
      %v493 = vld [vmem:[%s492] ss:$8 sm:$0xf]
      %v495 = vperm.slane %v493, 0
      %v496 = vperm.slane %v493, 1
      %v497 = vperm.slane %v493, 2
      %v498 = vperm.slane %v493, 3
      %v503 = vmul.f32 %v491, %v495
      %v504 = vmul.f32 %v484, %v496
      %v505 = vmul.f32 %v485, %v497
      %v506 = vmul.f32 %v486, %v498
      %507 = vst [vmem:[#allocation2 + $0xc0] sm:$0xff] %v503
      %508 = vst [vmem:[#allocation2 + $0xc8] sm:$0xff] %v504
      %509 = vst [vmem:[#allocation2 + $0xd0] sm:$0xff] %v505
      %510 = vst [vmem:[#allocation2 + $0xd8] sm:$0xff] %v506
      %511 = vrot.lane.b32.xlu0 %v242, 56
      %v512 = vpop.permute.xlu0 %511
      %514 = vrot.lane.b32.xlu0 %v239, 56
      %v515 = vpop.permute.xlu0 %514
      %516 = vrot.lane.b32.xlu0 %v240, 56
      %v517 = vpop.permute.xlu0 %516
      %518 = vrot.lane.b32.xlu0 %v241, 56
      %v519 = vpop.permute.xlu0 %518
      %vm520 = vcmask 457728
      %v521 = vsel %vm520, %v515, %v517
      %v522 = vsel %vm520, %v517, %v519
      %v523 = vsel %vm520, %v519, %v512
      %v528 = vsel %vm520, %v512, %v515
      %s529 = scalar_lea.vmem %s2, 39
      %v530 = vld [vmem:[%s529] ss:$8 sm:$0xf]
      %v532 = vperm.slane %v530, 0
      %v533 = vperm.slane %v530, 1
      %v534 = vperm.slane %v530, 2
      %v535 = vperm.slane %v530, 3
      %v540 = vmul.f32 %v528, %v532
      %v541 = vmul.f32 %v521, %v533
      %v542 = vmul.f32 %v522, %v534
      %v543 = vmul.f32 %v523, %v535
      %544 = vst [vmem:[#allocation2 + $0xe0] sm:$0xff] %v540
      %545 = vst [vmem:[#allocation2 + $0xe8] sm:$0xff] %v541
      %546 = vst [vmem:[#allocation2 + $0xf0] sm:$0xff] %v542
      %547 = vst [vmem:[#allocation2 + $0xf8] sm:$0xff] %v543
      %548 = vrot.lane.b32.xlu0 %v242, 55
      %v549 = vpop.permute.xlu0 %548
      %551 = vrot.lane.b32.xlu0 %v239, 55
      %v552 = vpop.permute.xlu0 %551
      %553 = vrot.lane.b32.xlu0 %v240, 55
      %v554 = vpop.permute.xlu0 %553
      %555 = vrot.lane.b32.xlu0 %v241, 55
      %v556 = vpop.permute.xlu0 %555
      %vm557 = vcmask 449536
      %v558 = vsel %vm557, %v552, %v554
      %v559 = vsel %vm557, %v554, %v556
      %v560 = vsel %vm557, %v556, %v549
      %v565 = vsel %vm557, %v549, %v552
      %s566 = scalar_lea.vmem %s2, 64
      %v567 = vld [vmem:[%s566] ss:$8 sm:$0xf]
      %v569 = vperm.slane %v567, 0
      %v570 = vperm.slane %v567, 1
      %v571 = vperm.slane %v567, 2
      %v572 = vperm.slane %v567, 3
      %v577 = vmul.f32 %v565, %v569
      %v578 = vmul.f32 %v558, %v570
      %v579 = vmul.f32 %v559, %v571
      %v580 = vmul.f32 %v560, %v572
      %581 = vst [vmem:[#allocation2 + $0x100] sm:$0xff] %v577
      %582 = vst [vmem:[#allocation2 + $0x108] sm:$0xff] %v578
      %583 = vst [vmem:[#allocation2 + $0x110] sm:$0xff] %v579
      %584 = vst [vmem:[#allocation2 + $0x118] sm:$0xff] %v580
      %585 = vrot.lane.b32.xlu0 %v242, 9
      %v586 = vpop.permute.xlu0 %585
      %588 = vrot.lane.b32.xlu0 %v239, 9
      %v589 = vpop.permute.xlu0 %588
      %590 = vrot.lane.b32.xlu0 %v240, 9
      %v591 = vpop.permute.xlu0 %590
      %592 = vrot.lane.b32.xlu0 %v241, 9
      %v593 = vpop.permute.xlu0 %592
      %vm594 = vcmask 72704
      %v595 = vsel %vm594, %v589, %v591
      %v596 = vsel %vm594, %v591, %v593
      %v597 = vsel %vm594, %v593, %v586
      %v602 = vsel %vm594, %v586, %v589
      %s603 = scalar_lea.vmem %s2, 65
      %v604 = vld [vmem:[%s603] ss:$8 sm:$0xf]
      %v606 = vperm.slane %v604, 0
      %v607 = vperm.slane %v604, 1
      %v608 = vperm.slane %v604, 2
      %v609 = vperm.slane %v604, 3
      %v614 = vmul.f32 %v602, %v606
      %v615 = vmul.f32 %v595, %v607
      %v616 = vmul.f32 %v596, %v608
      %v617 = vmul.f32 %v597, %v609
      %618 = vst [vmem:[#allocation2 + $0x120] sm:$0xff] %v614
      %619 = vst [vmem:[#allocation2 + $0x128] sm:$0xff] %v615
      %620 = vst [vmem:[#allocation2 + $0x130] sm:$0xff] %v616
      %621 = vst [vmem:[#allocation2 + $0x138] sm:$0xff] %v617
      %622 = vrot.lane.b32.xlu0 %v242, 8
      %v623 = vpop.permute.xlu0 %622
      %625 = vrot.lane.b32.xlu0 %v239, 8
      %v626 = vpop.permute.xlu0 %625
      %627 = vrot.lane.b32.xlu0 %v240, 8
      %v628 = vpop.permute.xlu0 %627
      %629 = vrot.lane.b32.xlu0 %v241, 8
      %v630 = vpop.permute.xlu0 %629
      %vm631 = vcmask 64512
      %v632 = vsel %vm631, %v626, %v628
      %v633 = vsel %vm631, %v628, %v630
      %v634 = vsel %vm631, %v630, %v623
      %v639 = vsel %vm631, %v623, %v626
      %s640 = scalar_lea.vmem %s2, 66
      %v641 = vld [vmem:[%s640] ss:$8 sm:$0xf]
      %v643 = vperm.slane %v641, 0
      %v644 = vperm.slane %v641, 1
      %v645 = vperm.slane %v641, 2
      %v646 = vperm.slane %v641, 3
      %v651 = vmul.f32 %v639, %v643
      %v652 = vmul.f32 %v632, %v644
      %v653 = vmul.f32 %v633, %v645
      %v654 = vmul.f32 %v634, %v646
      %655 = vst [vmem:[#allocation2 + $0x140] sm:$0xff] %v651
      %656 = vst [vmem:[#allocation2 + $0x148] sm:$0xff] %v652
      %657 = vst [vmem:[#allocation2 + $0x150] sm:$0xff] %v653
      %658 = vst [vmem:[#allocation2 + $0x158] sm:$0xff] %v654
      %659 = vrot.lane.b32.xlu0 %v242, 7
      %v660 = vpop.permute.xlu0 %659
      %662 = vrot.lane.b32.xlu0 %v239, 7
      %v663 = vpop.permute.xlu0 %662
      %664 = vrot.lane.b32.xlu0 %v240, 7
      %v665 = vpop.permute.xlu0 %664
      %666 = vrot.lane.b32.xlu0 %v241, 7
      %v667 = vpop.permute.xlu0 %666
      %vm668 = vcmask 56320
      %v669 = vsel %vm668, %v663, %v665
      %v670 = vsel %vm668, %v665, %v667
      %v671 = vsel %vm668, %v667, %v660
      %v676 = vsel %vm668, %v660, %v663
      %s677 = scalar_lea.vmem %s2, 67
      %v678 = vld [vmem:[%s677] ss:$8 sm:$0xf]
      %v680 = vperm.slane %v678, 0
      %v681 = vperm.slane %v678, 1
      %v682 = vperm.slane %v678, 2
      %v683 = vperm.slane %v678, 3
      %v688 = vmul.f32 %v676, %v680
      %v689 = vmul.f32 %v669, %v681
      %v690 = vmul.f32 %v670, %v682
      %v691 = vmul.f32 %v671, %v683
      %692 = vst [vmem:[#allocation2 + $0x160] sm:$0xff] %v688
      %693 = vst [vmem:[#allocation2 + $0x168] sm:$0xff] %v689
      %694 = vst [vmem:[#allocation2 + $0x170] sm:$0xff] %v690
      %695 = vst [vmem:[#allocation2 + $0x178] sm:$0xff] %v691
      %696 = vrot.lane.b32.xlu0 %v242, 1
      %v697 = vpop.permute.xlu0 %696
      %699 = vrot.lane.b32.xlu0 %v239, 1
      %v700 = vpop.permute.xlu0 %699
      %701 = vrot.lane.b32.xlu0 %v240, 1
      %v702 = vpop.permute.xlu0 %701
      %703 = vrot.lane.b32.xlu0 %v241, 1
      %v704 = vpop.permute.xlu0 %703
      %vm705 = vcmask 7168
      %v706 = vsel %vm705, %v700, %v702
      %v707 = vsel %vm705, %v702, %v704
      %v708 = vsel %vm705, %v704, %v697
      %v713 = vsel %vm705, %v697, %v700
      %s714 = scalar_lea.vmem %s2, 68
      %v715 = vld [vmem:[%s714] ss:$8 sm:$0xf]
      %v717 = vperm.slane %v715, 0
      %v718 = vperm.slane %v715, 1
      %v719 = vperm.slane %v715, 2
      %v720 = vperm.slane %v715, 3
      %v725 = vmul.f32 %v713, %v717
      %v726 = vmul.f32 %v706, %v718
      %v727 = vmul.f32 %v707, %v719
      %v728 = vmul.f32 %v708, %v720
      %729 = vst [vmem:[#allocation2 + $0x180] sm:$0xff] %v725
      %730 = vst [vmem:[#allocation2 + $0x188] sm:$0xff] %v726
      %731 = vst [vmem:[#allocation2 + $0x190] sm:$0xff] %v727
      %732 = vst [vmem:[#allocation2 + $0x198] sm:$0xff] %v728
      %733 = vst [vmem:[#allocation2 + $0x1a0] sm:$0xff] %v239
      %734 = vst [vmem:[#allocation2 + $0x1a8] sm:$0xff] %v240
      %735 = vst [vmem:[#allocation2 + $0x1b0] sm:$0xff] %v241
      %736 = vst [vmem:[#allocation2 + $0x1b8] sm:$0xff] %v242
      %737 = vrot.lane.b32.xlu0 %v239, 127
      %v738 = vpop.permute.xlu0 %737
      %739 = vrot.lane.b32.xlu0 %v240, 127
      %v740 = vpop.permute.xlu0 %739
      %741 = vrot.lane.b32.xlu0 %v241, 127
      %v742 = vpop.permute.xlu0 %741
      %743 = vrot.lane.b32.xlu0 %v242, 127
      %v744 = vpop.permute.xlu0 %743
      %vm745 = vcmask 1039360
      %v746 = vsel %vm745, %v738, %v740
      %v747 = vsel %vm745, %v740, %v742
      %v748 = vsel %vm745, %v742, %v744
      %v754 = vsel %vm745, %v744, %v738
      %s755 = scalar_lea.vmem %s2, 70
      %v756 = vld [vmem:[%s755] ss:$8 sm:$0xf]
      %v758 = vperm.slane %v756, 0
      %v759 = vperm.slane %v756, 1
      %v760 = vperm.slane %v756, 2
      %v761 = vperm.slane %v756, 3
      %v766 = vmul.f32 %v746, %v758
      %v767 = vmul.f32 %v747, %v759
      %v768 = vmul.f32 %v748, %v760
      %v769 = vmul.f32 %v754, %v761
      %770 = vst [vmem:[#allocation2 + $0x1c0] sm:$0xff] %v766
      %771 = vst [vmem:[#allocation2 + $0x1c8] sm:$0xff] %v767
      %772 = vst [vmem:[#allocation2 + $0x1d0] sm:$0xff] %v768
      %773 = vst [vmem:[#allocation2 + $0x1d8] sm:$0xff] %v769
      %774 = vrot.lane.b32.xlu0 %v239, 121
      %v775 = vpop.permute.xlu0 %774
      %776 = vrot.lane.b32.xlu0 %v240, 121
      %v777 = vpop.permute.xlu0 %776
      %778 = vrot.lane.b32.xlu0 %v241, 121
      %v779 = vpop.permute.xlu0 %778
      %780 = vrot.lane.b32.xlu0 %v242, 121
      %v781 = vpop.permute.xlu0 %780
      %vm782 = vcmask 990208
      %v783 = vsel %vm782, %v775, %v777
      %v784 = vsel %vm782, %v777, %v779
      %v785 = vsel %vm782, %v779, %v781
      %v791 = vsel %vm782, %v781, %v775
      %s792 = scalar_lea.vmem %s2, 71
      %v793 = vld [vmem:[%s792] ss:$8 sm:$0xf]
      %v795 = vperm.slane %v793, 0
      %v796 = vperm.slane %v793, 1
      %v797 = vperm.slane %v793, 2
      %v798 = vperm.slane %v793, 3
      %v803 = vmul.f32 %v783, %v795
      %v804 = vmul.f32 %v784, %v796
      %v805 = vmul.f32 %v785, %v797
      %v806 = vmul.f32 %v791, %v798
      %807 = vst [vmem:[#allocation2 + $0x1e0] sm:$0xff] %v803
      %808 = vst [vmem:[#allocation2 + $0x1e8] sm:$0xff] %v804
      %809 = vst [vmem:[#allocation2 + $0x1f0] sm:$0xff] %v805
      %810 = vst [vmem:[#allocation2 + $0x1f8] sm:$0xff] %v806
      %811 = vrot.lane.b32.xlu0 %v239, 120
      %v812 = vpop.permute.xlu0 %811
      %813 = vrot.lane.b32.xlu0 %v240, 120
      %v814 = vpop.permute.xlu0 %813
      %815 = vrot.lane.b32.xlu0 %v241, 120
      %v816 = vpop.permute.xlu0 %815
      %817 = vrot.lane.b32.xlu0 %v242, 120
      %v818 = vpop.permute.xlu0 %817
      %vm819 = vcmask 982016
      %v820 = vsel %vm819, %v812, %v814
      %v821 = vsel %vm819, %v814, %v816
      %v822 = vsel %vm819, %v816, %v818
      %v828 = vsel %vm819, %v818, %v812
      %s829 = scalar_lea.vmem %s2, 96
      %v830 = vld [vmem:[%s829] ss:$8 sm:$0xf]
      %v832 = vperm.slane %v830, 0
      %v833 = vperm.slane %v830, 1
      %v834 = vperm.slane %v830, 2
      %v835 = vperm.slane %v830, 3
      %v840 = vmul.f32 %v820, %v832
      %v841 = vmul.f32 %v821, %v833
      %v842 = vmul.f32 %v822, %v834
      %v843 = vmul.f32 %v828, %v835
      %844 = vst [vmem:[#allocation2 + $0x200] sm:$0xff] %v840
      %845 = vst [vmem:[#allocation2 + $0x208] sm:$0xff] %v841
      %846 = vst [vmem:[#allocation2 + $0x210] sm:$0xff] %v842
      %847 = vst [vmem:[#allocation2 + $0x218] sm:$0xff] %v843
      %848 = vrot.lane.b32.xlu0 %v239, 119
      %v849 = vpop.permute.xlu0 %848
      %850 = vrot.lane.b32.xlu0 %v240, 119
      %v851 = vpop.permute.xlu0 %850
      %852 = vrot.lane.b32.xlu0 %v241, 119
      %v853 = vpop.permute.xlu0 %852
      %854 = vrot.lane.b32.xlu0 %v242, 119
      %v855 = vpop.permute.xlu0 %854
      %vm856 = vcmask 973824
      %v857 = vsel %vm856, %v849, %v851
      %v858 = vsel %vm856, %v851, %v853
      %v859 = vsel %vm856, %v853, %v855
      %v865 = vsel %vm856, %v855, %v849
      %s866 = scalar_lea.vmem %s2, 97
      %v867 = vld [vmem:[%s866] ss:$8 sm:$0xf]
      %v869 = vperm.slane %v867, 0
      %v870 = vperm.slane %v867, 1
      %v871 = vperm.slane %v867, 2
      %v872 = vperm.slane %v867, 3
      %v877 = vmul.f32 %v857, %v869
      %v878 = vmul.f32 %v858, %v870
      %v879 = vmul.f32 %v859, %v871
      %v880 = vmul.f32 %v865, %v872
      %881 = vst [vmem:[#allocation2 + $0x220] sm:$0xff] %v877
      %882 = vst [vmem:[#allocation2 + $0x228] sm:$0xff] %v878
      %883 = vst [vmem:[#allocation2 + $0x230] sm:$0xff] %v879
      %884 = vst [vmem:[#allocation2 + $0x238] sm:$0xff] %v880
      %s885 = scalar_lea.vmem %s2, 98
      %v886 = vld [vmem:[%s885] ss:$8 sm:$0xf]
      %v888 = vperm.slane %v886, 0
      %v889 = vperm.slane %v886, 1
      %v890 = vperm.slane %v886, 2
      %v891 = vperm.slane %v886, 3
      %v896 = vmul.f32 %v262, %v888
      %v897 = vmul.f32 %v263, %v889
      %v898 = vmul.f32 %v264, %v890
      %v899 = vmul.f32 %v269, %v891
      %900 = vst [vmem:[#allocation2 + $0x240] sm:$0xff] %v896
      %901 = vst [vmem:[#allocation2 + $0x248] sm:$0xff] %v897
      %902 = vst [vmem:[#allocation2 + $0x250] sm:$0xff] %v898
      %903 = vst [vmem:[#allocation2 + $0x258] sm:$0xff] %v899
      %s904 = scalar_lea.vmem %s2, 99
      %v905 = vld [vmem:[%s904] ss:$8 sm:$0xf]
      %v907 = vperm.slane %v905, 0
      %v908 = vperm.slane %v905, 1
      %v909 = vperm.slane %v905, 2
      %v910 = vperm.slane %v905, 3
      %v915 = vmul.f32 %v299, %v907
      %v916 = vmul.f32 %v300, %v908
      %v917 = vmul.f32 %v301, %v909
      %v918 = vmul.f32 %v306, %v910
      %919 = vst [vmem:[#allocation2 + $0x260] sm:$0xff] %v915
      %920 = vst [vmem:[#allocation2 + $0x268] sm:$0xff] %v916
      %921 = vst [vmem:[#allocation2 + $0x270] sm:$0xff] %v917
      %922 = vst [vmem:[#allocation2 + $0x278] sm:$0xff] %v918
      %s923 = scalar_lea.vmem %s2, 100
      %v924 = vld [vmem:[%s923] ss:$8 sm:$0xf]
      %v926 = vperm.slane %v924, 0
      %v927 = vperm.slane %v924, 1
      %v928 = vperm.slane %v924, 2
      %v929 = vperm.slane %v924, 3
      %v934 = vmul.f32 %v336, %v926
      %v935 = vmul.f32 %v337, %v927
      %v936 = vmul.f32 %v338, %v928
      %v937 = vmul.f32 %v343, %v929
      %938 = vst [vmem:[#allocation2 + $0x280] sm:$0xff] %v934
      %939 = vst [vmem:[#allocation2 + $0x288] sm:$0xff] %v935
      %940 = vst [vmem:[#allocation2 + $0x290] sm:$0xff] %v936
      %941 = vst [vmem:[#allocation2 + $0x298] sm:$0xff] %v937
      %s942 = scalar_lea.vmem %s2, 101
      %v943 = vld [vmem:[%s942] ss:$8 sm:$0xf]
      %v945 = vperm.slane %v943, 0
      %v946 = vperm.slane %v943, 1
      %v947 = vperm.slane %v943, 2
      %v948 = vperm.slane %v943, 3
      %v953 = vmul.f32 %v373, %v945
      %v954 = vmul.f32 %v374, %v946
      %v955 = vmul.f32 %v375, %v947
      %v956 = vmul.f32 %v380, %v948
      %957 = vst [vmem:[#allocation2 + $0x2a0] sm:$0xff] %v953
      %958 = vst [vmem:[#allocation2 + $0x2a8] sm:$0xff] %v954
      %959 = vst [vmem:[#allocation2 + $0x2b0] sm:$0xff] %v955
      %960 = vst [vmem:[#allocation2 + $0x2b8] sm:$0xff] %v956
      %s961 = scalar_lea.vmem %s2, 102
      %v962 = vld [vmem:[%s961] ss:$8 sm:$0xf]
      %v964 = vperm.slane %v962, 0
      %v965 = vperm.slane %v962, 1
      %v966 = vperm.slane %v962, 2
      %v967 = vperm.slane %v962, 3
      %v972 = vmul.f32 %v410, %v964
      %v973 = vmul.f32 %v411, %v965
      %v974 = vmul.f32 %v412, %v966
      %v975 = vmul.f32 %v417, %v967
      %976 = vst [vmem:[#allocation2 + $0x2c0] sm:$0xff] %v972
      %977 = vst [vmem:[#allocation2 + $0x2c8] sm:$0xff] %v973
      %978 = vst [vmem:[#allocation2 + $0x2d0] sm:$0xff] %v974
      %979 = vst [vmem:[#allocation2 + $0x2d8] sm:$0xff] %v975
      %s980 = scalar_lea.vmem %s2, 103
      %v981 = vld [vmem:[%s980] ss:$8 sm:$0xf]
      %v983 = vperm.slane %v981, 0
      %v984 = vperm.slane %v981, 1
      %v985 = vperm.slane %v981, 2
      %v986 = vperm.slane %v981, 3
      %v991 = vmul.f32 %v447, %v983
      %v992 = vmul.f32 %v448, %v984
      %v993 = vmul.f32 %v449, %v985
      %v994 = vmul.f32 %v454, %v986
      %995 = vst [vmem:[#allocation2 + $0x2e0] sm:$0xff] %v991
      %996 = vst [vmem:[#allocation2 + $0x2e8] sm:$0xff] %v992
      %997 = vst [vmem:[#allocation2 + $0x2f0] sm:$0xff] %v993
      %998 = vst [vmem:[#allocation2 + $0x2f8] sm:$0xff] %v994
      %s999 = scalar_lea.vmem %s2, 128
      %v1000 = vld [vmem:[%s999] ss:$8 sm:$0xf]
      %v1002 = vperm.slane %v1000, 0
      %v1003 = vperm.slane %v1000, 1
      %v1004 = vperm.slane %v1000, 2
      %v1005 = vperm.slane %v1000, 3
      %v1010 = vmul.f32 %v484, %v1002
      %v1011 = vmul.f32 %v485, %v1003
      %v1012 = vmul.f32 %v486, %v1004
      %v1013 = vmul.f32 %v491, %v1005
      %1014 = vst [vmem:[#allocation2 + $0x300] sm:$0xff] %v1010
      %1015 = vst [vmem:[#allocation2 + $0x308] sm:$0xff] %v1011
      %1016 = vst [vmem:[#allocation2 + $0x310] sm:$0xff] %v1012
      %1017 = vst [vmem:[#allocation2 + $0x318] sm:$0xff] %v1013
      %s1018 = scalar_lea.vmem %s2, 129
      %v1019 = vld [vmem:[%s1018] ss:$8 sm:$0xf]
      %v1021 = vperm.slane %v1019, 0
      %v1022 = vperm.slane %v1019, 1
      %v1023 = vperm.slane %v1019, 2
      %v1024 = vperm.slane %v1019, 3
      %v1029 = vmul.f32 %v521, %v1021
      %v1030 = vmul.f32 %v522, %v1022
      %v1031 = vmul.f32 %v523, %v1023
      %v1032 = vmul.f32 %v528, %v1024
      %1033 = vst [vmem:[#allocation2 + $0x320] sm:$0xff] %v1029
      %1034 = vst [vmem:[#allocation2 + $0x328] sm:$0xff] %v1030
      %1035 = vst [vmem:[#allocation2 + $0x330] sm:$0xff] %v1031
      %1036 = vst [vmem:[#allocation2 + $0x338] sm:$0xff] %v1032
      %s1037 = scalar_lea.vmem %s2, 130
      %v1038 = vld [vmem:[%s1037] ss:$8 sm:$0xf]
      %v1040 = vperm.slane %v1038, 0
      %v1041 = vperm.slane %v1038, 1
      %v1042 = vperm.slane %v1038, 2
      %v1043 = vperm.slane %v1038, 3
      %v1048 = vmul.f32 %v558, %v1040
      %v1049 = vmul.f32 %v559, %v1041
      %v1050 = vmul.f32 %v560, %v1042
      %v1051 = vmul.f32 %v565, %v1043
      %1052 = vst [vmem:[#allocation2 + $0x340] sm:$0xff] %v1048
      %1053 = vst [vmem:[#allocation2 + $0x348] sm:$0xff] %v1049
      %1054 = vst [vmem:[#allocation2 + $0x350] sm:$0xff] %v1050
      %1055 = vst [vmem:[#allocation2 + $0x358] sm:$0xff] %v1051
      %v1056 = vld [vmem:[%s3] sm:$0xff]
      %v1057 = vld [vmem:[%s3 + $0x8] sm:$0xff]
      %v1058 = vld [vmem:[#allocation2] sm:$0xff]
      %v1059 = vld [vmem:[#allocation2 + $0x8] sm:$0xff]
      %v1060 = vld [vmem:[#allocation2 + $0x10] sm:$0xff]
      %v1061 = vld [vmem:[#allocation2 + $0x18] sm:$0xff]
      %v1062 = vld [vmem:[#allocation2 + $0x20] sm:$0xff]
      %v1063 = vld [vmem:[#allocation2 + $0x28] sm:$0xff]
      %v1064 = vld [vmem:[#allocation2 + $0x30] sm:$0xff]
      %v1065 = vld [vmem:[#allocation2 + $0x38] sm:$0xff]
      %v1066 = vld [vmem:[#allocation2 + $0x40] sm:$0xff]
      %v1067 = vld [vmem:[#allocation2 + $0x48] sm:$0xff]
      %v1068 = vld [vmem:[#allocation2 + $0x50] sm:$0xff]
      %v1069 = vld [vmem:[#allocation2 + $0x58] sm:$0xff]
      %v1070 = vld [vmem:[#allocation2 + $0x60] sm:$0xff]
      %v1071 = vld [vmem:[#allocation2 + $0x68] sm:$0xff]
      %v1072 = vld [vmem:[#allocation2 + $0x70] sm:$0xff]
      %v1073 = vld [vmem:[#allocation2 + $0x78] sm:$0xff]
      %v1074 = vld [vmem:[#allocation2 + $0x80] sm:$0xff]
      %v1075 = vld [vmem:[#allocation2 + $0x88] sm:$0xff]
      %v1076 = vld [vmem:[#allocation2 + $0x90] sm:$0xff]
      %v1077 = vld [vmem:[#allocation2 + $0x98] sm:$0xff]
      %v1078 = vld [vmem:[#allocation2 + $0xa0] sm:$0xff]
      %v1079 = vld [vmem:[#allocation2 + $0xa8] sm:$0xff]
      %v1080 = vld [vmem:[#allocation2 + $0xb0] sm:$0xff]
      %v1081 = vld [vmem:[#allocation2 + $0xb8] sm:$0xff]
      %v1082 = vld [vmem:[#allocation2 + $0xc0] sm:$0xff]
      %v1083 = vld [vmem:[#allocation2 + $0xc8] sm:$0xff]
      %v1084 = vld [vmem:[#allocation2 + $0xd0] sm:$0xff]
      %v1085 = vld [vmem:[#allocation2 + $0xd8] sm:$0xff]
      %v1086 = vld [vmem:[#allocation2 + $0xe0] sm:$0xff]
      %v1087 = vld [vmem:[#allocation2 + $0xe8] sm:$0xff]
      %v1088 = vld [vmem:[#allocation2 + $0xf0] sm:$0xff]
      %v1089 = vld [vmem:[#allocation2 + $0xf8] sm:$0xff]
      %v1090 = vld [vmem:[#allocation2 + $0x100] sm:$0xff]
      %v1091 = vld [vmem:[#allocation2 + $0x108] sm:$0xff]
      %v1092 = vld [vmem:[#allocation2 + $0x110] sm:$0xff]
      %v1093 = vld [vmem:[#allocation2 + $0x118] sm:$0xff]
      %v1094 = vld [vmem:[#allocation2 + $0x120] sm:$0xff]
      %v1095 = vld [vmem:[#allocation2 + $0x128] sm:$0xff]
      %v1096 = vld [vmem:[#allocation2 + $0x130] sm:$0xff]
      %v1097 = vld [vmem:[#allocation2 + $0x138] sm:$0xff]
      %v1098 = vld [vmem:[#allocation2 + $0x140] sm:$0xff]
      %v1099 = vld [vmem:[#allocation2 + $0x148] sm:$0xff]
      %v1100 = vld [vmem:[#allocation2 + $0x150] sm:$0xff]
      %v1101 = vld [vmem:[#allocation2 + $0x158] sm:$0xff]
      %v1102 = vld [vmem:[#allocation2 + $0x160] sm:$0xff]
      %v1103 = vld [vmem:[#allocation2 + $0x168] sm:$0xff]
      %v1104 = vld [vmem:[#allocation2 + $0x170] sm:$0xff]
      %v1105 = vld [vmem:[#allocation2 + $0x178] sm:$0xff]
      %v1106 = vld [vmem:[#allocation2 + $0x180] sm:$0xff]
      %v1107 = vld [vmem:[#allocation2 + $0x188] sm:$0xff]
      %v1108 = vld [vmem:[#allocation2 + $0x190] sm:$0xff]
      %v1109 = vld [vmem:[#allocation2 + $0x198] sm:$0xff]
      %v1110 = vld [vmem:[#allocation2 + $0x1a0] sm:$0xff]
      %v1111 = vld [vmem:[#allocation2 + $0x1a8] sm:$0xff]
      %v1112 = vld [vmem:[#allocation2 + $0x1b0] sm:$0xff]
      %v1113 = vld [vmem:[#allocation2 + $0x1b8] sm:$0xff]
      %v1114 = vld [vmem:[#allocation2 + $0x1c0] sm:$0xff]
      %v1115 = vld [vmem:[#allocation2 + $0x1c8] sm:$0xff]
      %v1116 = vld [vmem:[#allocation2 + $0x1d0] sm:$0xff]
      %v1117 = vld [vmem:[#allocation2 + $0x1d8] sm:$0xff]
      %v1118 = vld [vmem:[#allocation2 + $0x1e0] sm:$0xff]
      %v1119 = vld [vmem:[#allocation2 + $0x1e8] sm:$0xff]
      %v1120 = vld [vmem:[#allocation2 + $0x1f0] sm:$0xff]
      %v1121 = vld [vmem:[#allocation2 + $0x1f8] sm:$0xff]
      %v1122 = vld [vmem:[#allocation2 + $0x200] sm:$0xff]
      %v1123 = vld [vmem:[#allocation2 + $0x208] sm:$0xff]
      %v1124 = vld [vmem:[#allocation2 + $0x210] sm:$0xff]
      %v1125 = vld [vmem:[#allocation2 + $0x218] sm:$0xff]
      %v1126 = vld [vmem:[#allocation2 + $0x220] sm:$0xff]
      %v1127 = vld [vmem:[#allocation2 + $0x228] sm:$0xff]
      %v1128 = vld [vmem:[#allocation2 + $0x230] sm:$0xff]
      %v1129 = vld [vmem:[#allocation2 + $0x238] sm:$0xff]
      %v1130 = vld [vmem:[#allocation2 + $0x240] sm:$0xff]
      %v1131 = vld [vmem:[#allocation2 + $0x248] sm:$0xff]
      %v1132 = vld [vmem:[#allocation2 + $0x250] sm:$0xff]
      %v1133 = vld [vmem:[#allocation2 + $0x258] sm:$0xff]
      %v1134 = vld [vmem:[#allocation2 + $0x260] sm:$0xff]
      %v1135 = vld [vmem:[#allocation2 + $0x268] sm:$0xff]
      %v1136 = vld [vmem:[#allocation2 + $0x270] sm:$0xff]
      %v1137 = vld [vmem:[#allocation2 + $0x278] sm:$0xff]
      %v1138 = vld [vmem:[#allocation2 + $0x280] sm:$0xff]
      %v1139 = vld [vmem:[#allocation2 + $0x288] sm:$0xff]
      %v1140 = vld [vmem:[#allocation2 + $0x290] sm:$0xff]
      %v1141 = vld [vmem:[#allocation2 + $0x298] sm:$0xff]
      %v1142 = vld [vmem:[#allocation2 + $0x2a0] sm:$0xff]
      %v1143 = vld [vmem:[#allocation2 + $0x2a8] sm:$0xff]
      %v1144 = vld [vmem:[#allocation2 + $0x2b0] sm:$0xff]
      %v1145 = vld [vmem:[#allocation2 + $0x2b8] sm:$0xff]
      %v1146 = vld [vmem:[#allocation2 + $0x2c0] sm:$0xff]
      %v1147 = vld [vmem:[#allocation2 + $0x2c8] sm:$0xff]
      %v1148 = vld [vmem:[#allocation2 + $0x2d0] sm:$0xff]
      %v1149 = vld [vmem:[#allocation2 + $0x2d8] sm:$0xff]
      %v1150 = vld [vmem:[#allocation2 + $0x2e0] sm:$0xff]
      %v1151 = vld [vmem:[#allocation2 + $0x2e8] sm:$0xff]
      %v1152 = vld [vmem:[#allocation2 + $0x2f0] sm:$0xff]
      %v1153 = vld [vmem:[#allocation2 + $0x2f8] sm:$0xff]
      %v1154 = vld [vmem:[#allocation2 + $0x300] sm:$0xff]
      %v1155 = vld [vmem:[#allocation2 + $0x308] sm:$0xff]
      %v1156 = vld [vmem:[#allocation2 + $0x310] sm:$0xff]
      %v1157 = vld [vmem:[#allocation2 + $0x318] sm:$0xff]
      %v1158 = vld [vmem:[#allocation2 + $0x320] sm:$0xff]
      %v1159 = vld [vmem:[#allocation2 + $0x328] sm:$0xff]
      %v1160 = vld [vmem:[#allocation2 + $0x330] sm:$0xff]
      %v1161 = vld [vmem:[#allocation2 + $0x338] sm:$0xff]
      %v1162 = vld [vmem:[#allocation2 + $0x340] sm:$0xff]
      %v1163 = vld [vmem:[#allocation2 + $0x348] sm:$0xff]
      %v1164 = vld [vmem:[#allocation2 + $0x350] sm:$0xff]
      %v1165 = vld [vmem:[#allocation2 + $0x358] sm:$0xff]
      %1167 = vset.pattern.permute.xlu0 0
      %1168 = vperm.xlu0 %1167, %v247
      %v1169 = vpop.permute.xlu0 %1168
      %vm1171 = vcmask 719872
      %v1173 = vsel %vm1171, %v1057, 0
      %1175 = vmatpush.msra.mxu0 %v1118
      %1176 = vmatpush.msra.mxu0 %v1114
      %1177 = vmatpush.msra.mxu0 %v1110
      %1178 = vmatpush.msra.mxu0 %v1106
      %1179 = vmatpush.msra.mxu0 %v1102
      %1180 = vmatpush.msra.mxu0 %v1098
      %1181 = vmatpush.msra.mxu0 %v1094
      %1182 = vmatpush.msra.mxu0 %v1090
      %1183 = vmatpush.msra.mxu0 %v1086
      %1184 = vmatpush.msra.mxu0 %v1082
      %1185 = vmatpush.msra.mxu0 %v1078
      %1186 = vmatpush.msra.mxu0 %v1074
      %1187 = vmatpush.msra.mxu0 %v1070
      %1188 = vmatpush.msra.mxu0 %v1066
      %1189 = vmatpush.msra.mxu0 %v1062
      %1190 = vmatpush.msra.mxu0 %v1058
      %1191 = vmatmul.f32.gmra.mxu0 %v1056
      %v1192 = vpop.f32.mrf.mxu0
      %v1193 = vadd.f32 %v1169, %v1192
      %1194 = vdwg.mxu0
      %1195 = vmatpush.msra.mxu0 0.0
      %1196 = vmatpush.msra.mxu0 0.0
      %1197 = vmatpush.msra.mxu0 0.0
      %1198 = vmatpush.msra.mxu0 0.0
      %1199 = vmatpush.msra.mxu0 0.0
      %1200 = vmatpush.msra.mxu0 %v1162
      %1201 = vmatpush.msra.mxu0 %v1158
      %1202 = vmatpush.msra.mxu0 %v1154
      %1203 = vmatpush.msra.mxu0 %v1150
      %1204 = vmatpush.msra.mxu0 %v1146
      %1205 = vmatpush.msra.mxu0 %v1142
      %1206 = vmatpush.msra.mxu0 %v1138
      %1207 = vmatpush.msra.mxu0 %v1134
      %1208 = vmatpush.msra.mxu0 %v1130
      %1209 = vmatpush.msra.mxu0 %v1126
      %1210 = vmatpush.msra.mxu0 %v1122
      %1211 = vmatmul.f32.gmra.mxu0 %v1173
      %v1212 = vpop.f32.mrf.mxu0
      %v1213 = vadd.f32 %v1193, %v1212
      %1214 = vdwg.mxu0
      %1215 = vmatpush.msra.mxu0 %v1119
      %1216 = vmatpush.msra.mxu0 %v1115
      %1217 = vmatpush.msra.mxu0 %v1111
      %1218 = vmatpush.msra.mxu0 %v1107
      %1219 = vmatpush.msra.mxu0 %v1103
      %1220 = vmatpush.msra.mxu0 %v1099
      %1221 = vmatpush.msra.mxu0 %v1095
      %1222 = vmatpush.msra.mxu0 %v1091
      %1223 = vmatpush.msra.mxu0 %v1087
      %1224 = vmatpush.msra.mxu0 %v1083
      %1225 = vmatpush.msra.mxu0 %v1079
      %1226 = vmatpush.msra.mxu0 %v1075
      %1227 = vmatpush.msra.mxu0 %v1071
      %1228 = vmatpush.msra.mxu0 %v1067
      %1229 = vmatpush.msra.mxu0 %v1063
      %1230 = vmatpush.msra.mxu0 %v1059
      %1231 = vmatmul.f32.gmra.mxu0 %v1056
      %v1232 = vpop.f32.mrf.mxu0
      %v1233 = vadd.f32 %v1169, %v1232
      %1234 = vdwg.mxu0
      %1235 = vmatpush.msra.mxu0 0.0
      %1236 = vmatpush.msra.mxu0 0.0
      %1237 = vmatpush.msra.mxu0 0.0
      %1238 = vmatpush.msra.mxu0 0.0
      %1239 = vmatpush.msra.mxu0 0.0
      %1240 = vmatpush.msra.mxu0 %v1163
      %1241 = vmatpush.msra.mxu0 %v1159
      %1242 = vmatpush.msra.mxu0 %v1155
      %1243 = vmatpush.msra.mxu0 %v1151
      %1244 = vmatpush.msra.mxu0 %v1147
      %1245 = vmatpush.msra.mxu0 %v1143
      %1246 = vmatpush.msra.mxu0 %v1139
      %1247 = vmatpush.msra.mxu0 %v1135
      %1248 = vmatpush.msra.mxu0 %v1131
      %1249 = vmatpush.msra.mxu0 %v1127
      %1250 = vmatpush.msra.mxu0 %v1123
      %1251 = vmatmul.f32.gmra.mxu0 %v1173
      %v1252 = vpop.f32.mrf.mxu0
      %v1253 = vadd.f32 %v1233, %v1252
      %1254 = vdwg.mxu0
      %1255 = vmatpush.msra.mxu0 %v1120
      %1256 = vmatpush.msra.mxu0 %v1116
      %1257 = vmatpush.msra.mxu0 %v1112
      %1258 = vmatpush.msra.mxu0 %v1108
      %1259 = vmatpush.msra.mxu0 %v1104
      %1260 = vmatpush.msra.mxu0 %v1100
      %1261 = vmatpush.msra.mxu0 %v1096
      %1262 = vmatpush.msra.mxu0 %v1092
      %1263 = vmatpush.msra.mxu0 %v1088
      %1264 = vmatpush.msra.mxu0 %v1084
      %1265 = vmatpush.msra.mxu0 %v1080
      %1266 = vmatpush.msra.mxu0 %v1076
      %1267 = vmatpush.msra.mxu0 %v1072
      %1268 = vmatpush.msra.mxu0 %v1068
      %1269 = vmatpush.msra.mxu0 %v1064
      %1270 = vmatpush.msra.mxu0 %v1060
      %1271 = vmatmul.f32.gmra.mxu0 %v1056
      %v1272 = vpop.f32.mrf.mxu0
      %v1273 = vadd.f32 %v1169, %v1272
      %1274 = vdwg.mxu0
      %1275 = vmatpush.msra.mxu0 0.0
      %1276 = vmatpush.msra.mxu0 0.0
      %1277 = vmatpush.msra.mxu0 0.0
      %1278 = vmatpush.msra.mxu0 0.0
      %1279 = vmatpush.msra.mxu0 0.0
      %1280 = vmatpush.msra.mxu0 %v1164
      %1281 = vmatpush.msra.mxu0 %v1160
      %1282 = vmatpush.msra.mxu0 %v1156
      %1283 = vmatpush.msra.mxu0 %v1152
      %1284 = vmatpush.msra.mxu0 %v1148
      %1285 = vmatpush.msra.mxu0 %v1144
      %1286 = vmatpush.msra.mxu0 %v1140
      %1287 = vmatpush.msra.mxu0 %v1136
      %1288 = vmatpush.msra.mxu0 %v1132
      %1289 = vmatpush.msra.mxu0 %v1128
      %1290 = vmatpush.msra.mxu0 %v1124
      %1291 = vmatmul.f32.gmra.mxu0 %v1173
      %v1292 = vpop.f32.mrf.mxu0
      %v1293 = vadd.f32 %v1273, %v1292
      %1294 = vdwg.mxu0
      %1295 = vmatpush.msra.mxu0 %v1121
      %1296 = vmatpush.msra.mxu0 %v1117
      %1297 = vmatpush.msra.mxu0 %v1113
      %1298 = vmatpush.msra.mxu0 %v1109
      %1299 = vmatpush.msra.mxu0 %v1105
      %1300 = vmatpush.msra.mxu0 %v1101
      %1301 = vmatpush.msra.mxu0 %v1097
      %1302 = vmatpush.msra.mxu0 %v1093
      %1303 = vmatpush.msra.mxu0 %v1089
      %1304 = vmatpush.msra.mxu0 %v1085
      %1305 = vmatpush.msra.mxu0 %v1081
      %1306 = vmatpush.msra.mxu0 %v1077
      %1307 = vmatpush.msra.mxu0 %v1073
      %1308 = vmatpush.msra.mxu0 %v1069
      %1309 = vmatpush.msra.mxu0 %v1065
      %1310 = vmatpush.msra.mxu0 %v1061
      %1311 = vmatmul.f32.gmra.mxu0 %v1056
      %v1312 = vpop.f32.mrf.mxu0
      %v1313 = vadd.f32 %v1169, %v1312
      %1314 = vdwg.mxu0
      %1315 = vmatpush.msra.mxu0 0.0
      %1316 = vmatpush.msra.mxu0 0.0
      %1317 = vmatpush.msra.mxu0 0.0
      %1318 = vmatpush.msra.mxu0 0.0
      %1319 = vmatpush.msra.mxu0 0.0
      %1320 = vmatpush.msra.mxu0 %v1165
      %1321 = vmatpush.msra.mxu0 %v1161
      %1322 = vmatpush.msra.mxu0 %v1157
      %1323 = vmatpush.msra.mxu0 %v1153
      %1324 = vmatpush.msra.mxu0 %v1149
      %1325 = vmatpush.msra.mxu0 %v1145
      %1326 = vmatpush.msra.mxu0 %v1141
      %1327 = vmatpush.msra.mxu0 %v1137
      %1328 = vmatpush.msra.mxu0 %v1133
      %1329 = vmatpush.msra.mxu0 %v1129
      %1330 = vmatpush.msra.mxu0 %v1125
      %1331 = vmatmul.f32.gmra.mxu0 %v1173
      %v1332 = vpop.f32.mrf.mxu0
      %v1333 = vadd.f32 %v1313, %v1332
      %1334 = vdwg.mxu0
      %v1335 = vmax.f32 %v1213, 0.0
      %v1336 = vmax.f32 %v1253, 0.0
      %v1337 = vmax.f32 %v1293, 0.0
      %v1338 = vmax.f32 %v1333, 0.0
      %v1339 = vrot.slane %v1335, 4
      %v1340 = vadd.f32 %v1335, %v1339
      %v1341 = vrot.slane %v1340, 2
      %v1342 = vadd.f32 %v1340, %v1341
      %v1343 = vrot.slane %v1342, 1
      %v1344 = vadd.f32 %v1342, %v1343
      %v1345 = vrot.slane %v1336, 4
      %v1346 = vadd.f32 %v1336, %v1345
      %v1347 = vrot.slane %v1346, 2
      %v1348 = vadd.f32 %v1346, %v1347
      %v1349 = vrot.slane %v1348, 1
      %v1350 = vadd.f32 %v1348, %v1349
      %v1351 = vrot.slane %v1337, 4
      %v1352 = vadd.f32 %v1337, %v1351
      %v1353 = vrot.slane %v1352, 2
      %v1354 = vadd.f32 %v1352, %v1353
      %v1355 = vrot.slane %v1354, 1
      %v1356 = vadd.f32 %v1354, %v1355
      %v1357 = vrot.slane %v1338, 4
      %v1358 = vadd.f32 %v1338, %v1357
      %v1359 = vrot.slane %v1358, 2
      %v1360 = vadd.f32 %v1358, %v1359
      %v1361 = vrot.slane %v1360, 1
      %v1362 = vadd.f32 %v1360, %v1361
      %v1363 = vrot.slane %v1335, 4
      %v1364 = vmax.f32 %v1335, %v1363
      %v1365 = vrot.slane %v1364, 2
      %v1366 = vmax.f32 %v1364, %v1365
      %v1367 = vrot.slane %v1366, 1
      %v1368 = vmax.f32 %v1366, %v1367
      %v1369 = vrot.slane %v1336, 4
      %v1370 = vmax.f32 %v1336, %v1369
      %v1371 = vrot.slane %v1370, 2
      %v1372 = vmax.f32 %v1370, %v1371
      %v1373 = vrot.slane %v1372, 1
      %v1374 = vmax.f32 %v1372, %v1373
      %v1375 = vrot.slane %v1337, 4
      %v1376 = vmax.f32 %v1337, %v1375
      %v1377 = vrot.slane %v1376, 2
      %v1378 = vmax.f32 %v1376, %v1377
      %v1379 = vrot.slane %v1378, 1
      %v1380 = vmax.f32 %v1378, %v1379
      %v1381 = vrot.slane %v1338, 4
      %v1382 = vmax.f32 %v1338, %v1381
      %v1383 = vrot.slane %v1382, 2
      %v1384 = vmax.f32 %v1382, %v1383
      %v1385 = vrot.slane %v1384, 1
      %v1386 = vmax.f32 %v1384, %v1385
      %v1387 = vmul.f32 %v243, %v1344
      %v1388 = vmul.f32 %v244, %v1350
      %v1389 = vmul.f32 %v245, %v1356
      %v1390 = vmul.f32 %v246, %v1362
      %v1391 = vadd.f32 %v1387, %v1388
      %v1392 = vadd.f32 %v1391, %v1389
      %v1393 = vadd.f32 %v1392, %v1390
      %1394 = vadd.xlane.f32.xlu0 %v1393
      %v1395 = vpop.xlane.xlu0 %1394
      %v1396 = vmul.f32 %v1395, 0.001953125
      %vm1397 = vcmp.gt.f32.partialorder %v243, 0.5
      %vm1398 = vcmp.gt.f32.partialorder %v244, 0.5
      %vm1399 = vcmp.gt.f32.partialorder %v245, 0.5
      %vm1400 = vcmp.gt.f32.partialorder %v246, 0.5
      %v1401 = vsel %vm1397, %v1368, -inf
      %v1402 = vsel %vm1398, %v1374, -inf
      %v1403 = vsel %vm1399, %v1380, -inf
      %v1404 = vsel %vm1400, %v1386, -inf
      %v1405 = vmax.f32 %v1401, %v1402
      %v1406 = vmax.f32 %v1403, %v1404
      %v1407 = vmax.f32 %v1405, %v1406
      %1408 = vmax.xlane.f32.xlu0 %v1407
      %v1409 = vpop.xlane.xlu0 %1408
      %v1410 = vld [vmem:[%s4] sm:$0xff]
      %v1411 = vld [vmem:[%s233] sm:$0x1]
      %v1413 = vperm.slane %v1411, 0
      %1414 = vrot.lane.b32.xlu0 %v1413, 2
      %v1415 = vpop.permute.xlu0 %1414
      %v1417 = vmul.f32 %v1410, %v1415
      %1419 = vrot.lane.b32.xlu0 %v1417, 126
      %v1420 = vpop.permute.xlu0 %1419
      %vm1422 = vcmask 130048
      %v1423 = vsel %vm1422, %v1420, 0.0
      %1424 = vadd.xlane.f32.xlu0 %v1423
      %v1425 = vpop.xlane.xlu0 %1424
      %v1426 = vadd.f32 %v1425, %v1410
      %v1427 = vmax.f32 %v1426, 0.0
      %v1428 = vld [vmem:[%s4] sm:$0x7]
      %v1429 = vld [vmem:[%s4] sm:$0x1]
      %v1430 = vld [vmem:[%s4] sm:$0xf]
      %v1431 = vperm.slane %v1428, 0
      %v1432 = vmul.f32 %v1396, %v1431
      %v1433 = vperm.slane %v1428, 1
      %v1434 = vmul.f32 %v1409, %v1433
      %v1435 = vadd.f32 %v1432, %v1434
      %1437 = vset.pattern.permute.xlu0 18
      %1438 = vperm.xlu0 %1437, %v1427
      %v1439 = vpop.permute.xlu0 %1438
      %v1441 = vperm.slane %v1428, 2
      %v1442 = vmul.f32 %v1439, %v1441
      %v1443 = vadd.f32 %v1435, %v1442
      %v1444 = vperm.slane %v1429, 0
      %1446 = vrot.lane.b32.xlu0 %v1444, 120
      %v1447 = vpop.permute.xlu0 %1446
      %v1449 = vadd.f32 %v1443, %v1447
      %v1450 = vmul.f32 %v1396, %v247
      %vm1451 = vcmask 490912
      %v1452 = vsel %vm1451, %v1450, 0.0
      %v1453 = vrot.slane %v1452, 4
      %v1454 = vadd.f32 %v1452, %v1453
      %v1455 = vrot.slane %v1454, 2
      %v1456 = vadd.f32 %v1454, %v1455
      %v1457 = vrot.slane %v1456, 1
      %v1458 = vadd.f32 %v1456, %v1457
      %1460 = vset.pattern.permute.xlu0 35
      %1461 = vperm.xlu0 %1460, %v1430
      %v1462 = vpop.permute.xlu0 %1461
      %v1464 = vmul.f32 %v1462, %v1458
      %v1465 = vmul.f32 %v1409, %v247
      %v1466 = vsel %vm1451, %v1465, 0.0
      %v1467 = vrot.slane %v1466, 4
      %v1468 = vadd.f32 %v1466, %v1467
      %v1469 = vrot.slane %v1468, 2
      %v1470 = vadd.f32 %v1468, %v1469
      %v1471 = vrot.slane %v1470, 1
      %v1472 = vadd.f32 %v1470, %v1471
      %1473 = vset.pattern.permute.xlu0 36
      %1474 = vperm.xlu0 %1473, %v1430
      %v1475 = vpop.permute.xlu0 %1474
      %v1477 = vmul.f32 %v1475, %v1472
      %v1478 = vadd.f32 %v1464, %v1477
      %v1479 = vmul.f32 %v1439, %v247
      %v1480 = vsel %vm1451, %v1479, 0.0
      %v1481 = vrot.slane %v1480, 4
      %v1482 = vadd.f32 %v1480, %v1481
      %v1483 = vrot.slane %v1482, 2
      %v1484 = vadd.f32 %v1482, %v1483
      %v1485 = vrot.slane %v1484, 1
      %v1486 = vadd.f32 %v1484, %v1485
      %1487 = vset.pattern.permute.xlu0 37
      %1488 = vperm.xlu0 %1487, %v1430
      %v1489 = vpop.permute.xlu0 %1488
      %v1491 = vmul.f32 %v1489, %v1486
      %v1492 = vadd.f32 %v1478, %v1491
      %1493 = vset.pattern.permute.xlu0 38
      %1494 = vperm.xlu0 %1493, %v1430
      %v1495 = vpop.permute.xlu0 %1494
      %v1497 = vadd.f32 %v1492, %v1495
      %1498 = vrot.lane.b32.xlu0 %v1444, 13
      %v1499 = vpop.permute.xlu0 %1498
      %v1501 = vadd.f32 %v1497, %v1499
      %1503 = vset.pattern.permute.xlu0 19
      %1504 = vperm.xlu0 %1503, %v1449
      %v1505 = vpop.permute.xlu0 %1504
      %v1507 = vperm.slane %v1501, 0
      %v1508 = vmul.f32 %v1505, %v1507
      %1509 = vset.pattern.permute.xlu0 20
      %1510 = vperm.xlu0 %1509, %v1449
      %v1511 = vpop.permute.xlu0 %1510
      %v1513 = vperm.slane %v1501, 1
      %v1514 = vmul.f32 %v1511, %v1513
      %v1515 = vadd.f32 %v1508, %v1514
      %v1516 = vmul.f32 %v1515, 0.70710677
      %vm1517 = vcmp.gt.f32.partialorder %v247, 0.5
      %1519 = vrot.lane.b32.xlu0 %v1516, 8
      %v1520 = vpop.permute.xlu0 %1519
      %v1522 = vsel %vm1517, %v1520, -1e+30
      %vm1523 = vcmask 556512
      %v1524 = vsel %vm1523, %v1522, -inf
      %1525 = vmax.xlane.f32.xlu0 %v1524
      %v1526 = vpop.xlane.xlu0 %1525
      %v1527 = vsub.f32 %v1522, %v1526
      %v1528 = vmul.f32 %v1527, 1.442695
      %v1529 = vpow.pop %v1528
      %1531 = vrot.lane.b32.xlu0 %v1529, 68
      %v1532 = vpop.permute.xlu0 %1531
      %v1534 = vsel %vm631, %v1532, 0.0
      %1535 = vadd.xlane.f32.xlu0 %v1534
      %v1536 = vpop.xlane.xlu0 %1535
      %v1537 = vrcp.pop %v1536
      %v1538 = vmul.f32 %v1536, %v1537
      %v1539 = vsub.f32 1.0, %v1538
      %v1540 = vmul.f32 %v1537, %v1539
      %v1541 = vadd.f32 %v1537, %v1540
      %vm1542 = vweird.f32 %v1536
      %vm1543 = vweird.f32 %v1537
      %vm1544 = vmor %vm1542, %vm1543
      %v1545 = vsel %vm1544, %v1537, %v1541
      %v1546 = vand.u32 2147483647, %v1536
      %vm1547 = vcmp.eq.f32.partialorder %v1546, 8.507059e+37
      %v1548 = vand.u32 %v1536, 2147483648
      %v1549 = vor.u32 1.1754944e-38, %v1548
      %v1550 = vsel %vm1547, %v1549, %v1545
      %v1551 = vmul.f32 %v1529, %v1550
      %1552 = vset.pattern.permute.xlu0 21
      %1553 = vperm.xlu0 %1552, %v1449
      %v1554 = vpop.permute.xlu0 %1553
      %v1556 = vmul.f32 %v1554, %v247
      %v1557 = vsel %vm1451, %v1556, 0.0
      %v1558 = vrot.slane %v1557, 4
      %v1559 = vadd.f32 %v1557, %v1558
      %v1560 = vrot.slane %v1559, 2
      %v1561 = vadd.f32 %v1559, %v1560
      %v1562 = vrot.slane %v1561, 1
      %v1563 = vadd.f32 %v1561, %v1562
      %1565 = vrot.lane.b32.xlu0 %v1563, 8
      %v1566 = vpop.permute.xlu0 %1565
      %v1568 = vmul.f32 %v1551, %v1566
      %1570 = vrot.lane.b32.xlu0 %v1568, 68
      %v1571 = vpop.permute.xlu0 %1570
      %v1573 = vsel %vm631, %v1571, 0.0
      %1574 = vadd.xlane.f32.xlu0 %v1573
      %v1575 = vpop.xlane.xlu0 %1574
      %1576 = vset.pattern.permute.xlu0 22
      %1577 = vperm.xlu0 %1576, %v1449
      %v1578 = vpop.permute.xlu0 %1577
      %v1580 = vmul.f32 %v1578, %v247
      %v1581 = vsel %vm1451, %v1580, 0.0
      %v1582 = vrot.slane %v1581, 4
      %v1583 = vadd.f32 %v1581, %v1582
      %v1584 = vrot.slane %v1583, 2
      %v1585 = vadd.f32 %v1583, %v1584
      %v1586 = vrot.slane %v1585, 1
      %v1587 = vadd.f32 %v1585, %v1586
      %1589 = vrot.lane.b32.xlu0 %v1587, 8
      %v1590 = vpop.permute.xlu0 %1589
      %v1592 = vmul.f32 %v1551, %v1590
      %1594 = vrot.lane.b32.xlu0 %v1592, 68
      %v1595 = vpop.permute.xlu0 %1594
      %v1597 = vsel %vm631, %v1595, 0.0
      %1598 = vadd.xlane.f32.xlu0 %v1597
      %v1599 = vpop.xlane.xlu0 %1598
      %v1600 = vmul.f32 %v1575, %v1444
      %v1601 = vadd.f32 %v1600, 0.0
      %v1602 = vmul.f32 %v1599, %v1444
      %1604 = vrot.lane.b32.xlu0 %v1602, 127
      %v1605 = vpop.permute.xlu0 %1604
      %v1607 = vadd.f32 %v1601, %v1605
      %1608 = vset.pattern.permute.xlu0 23
      %1609 = vperm.xlu0 %1608, %v1449
      %v1610 = vpop.permute.xlu0 %1609
      %v1612 = vperm.slane %v1501, 2
      %v1613 = vmul.f32 %v1610, %v1612
      %1614 = vset.pattern.permute.xlu0 24
      %1615 = vperm.xlu0 %1614, %v1449
      %v1616 = vpop.permute.xlu0 %1615
      %v1618 = vperm.slane %v1501, 3
      %v1619 = vmul.f32 %v1616, %v1618
      %v1620 = vadd.f32 %v1613, %v1619
      %v1621 = vmul.f32 %v1620, 0.70710677
      %1623 = vrot.lane.b32.xlu0 %v1621, 8
      %v1624 = vpop.permute.xlu0 %1623
      %v1626 = vsel %vm1517, %v1624, -1e+30
      %v1627 = vsel %vm1523, %v1626, -inf
      %1628 = vmax.xlane.f32.xlu0 %v1627
      %v1629 = vpop.xlane.xlu0 %1628
      %v1630 = vsub.f32 %v1626, %v1629
      %v1631 = vmul.f32 %v1630, 1.442695
      %v1632 = vpow.pop %v1631
      %1634 = vrot.lane.b32.xlu0 %v1632, 68
      %v1635 = vpop.permute.xlu0 %1634
      %v1637 = vsel %vm631, %v1635, 0.0
      %1638 = vadd.xlane.f32.xlu0 %v1637
      %v1639 = vpop.xlane.xlu0 %1638
      %v1640 = vrcp.pop %v1639
      %v1641 = vmul.f32 %v1639, %v1640
      %v1642 = vsub.f32 1.0, %v1641
      %v1643 = vmul.f32 %v1640, %v1642
      %v1644 = vadd.f32 %v1640, %v1643
      %vm1645 = vweird.f32 %v1639
      %vm1646 = vweird.f32 %v1640
      %vm1647 = vmor %vm1645, %vm1646
      %v1648 = vsel %vm1647, %v1640, %v1644
      %v1649 = vand.u32 2147483647, %v1639
      %vm1650 = vcmp.eq.f32.partialorder %v1649, 8.507059e+37
      %v1651 = vand.u32 %v1639, 2147483648
      %v1652 = vor.u32 1.1754944e-38, %v1651
      %v1653 = vsel %vm1650, %v1652, %v1648
      %v1654 = vmul.f32 %v1632, %v1653
      %1655 = vset.pattern.permute.xlu0 25
      %1656 = vperm.xlu0 %1655, %v1449
      %v1657 = vpop.permute.xlu0 %1656
      %v1659 = vmul.f32 %v1657, %v247
      %v1660 = vsel %vm1451, %v1659, 0.0
      %v1661 = vrot.slane %v1660, 4
      %v1662 = vadd.f32 %v1660, %v1661
      %v1663 = vrot.slane %v1662, 2
      %v1664 = vadd.f32 %v1662, %v1663
      %v1665 = vrot.slane %v1664, 1
      %v1666 = vadd.f32 %v1664, %v1665
      %1668 = vrot.lane.b32.xlu0 %v1666, 8
      %v1669 = vpop.permute.xlu0 %1668
      %v1671 = vmul.f32 %v1654, %v1669
      %1673 = vrot.lane.b32.xlu0 %v1671, 68
      %v1674 = vpop.permute.xlu0 %1673
      %v1676 = vsel %vm631, %v1674, 0.0
      %1677 = vadd.xlane.f32.xlu0 %v1676
      %v1678 = vpop.xlane.xlu0 %1677
      %1679 = vset.pattern.permute.xlu0 26
      %1680 = vperm.xlu0 %1679, %v1449
      %v1681 = vpop.permute.xlu0 %1680
      %v1683 = vmul.f32 %v1681, %v247
      %v1684 = vsel %vm1451, %v1683, 0.0
      %v1685 = vrot.slane %v1684, 4
      %v1686 = vadd.f32 %v1684, %v1685
      %v1687 = vrot.slane %v1686, 2
      %v1688 = vadd.f32 %v1686, %v1687
      %v1689 = vrot.slane %v1688, 1
      %v1690 = vadd.f32 %v1688, %v1689
      %1692 = vrot.lane.b32.xlu0 %v1690, 8
      %v1693 = vpop.permute.xlu0 %1692
      %v1695 = vmul.f32 %v1654, %v1693
      %1697 = vrot.lane.b32.xlu0 %v1695, 68
      %v1698 = vpop.permute.xlu0 %1697
      %v1700 = vsel %vm631, %v1698, 0.0
      %1701 = vadd.xlane.f32.xlu0 %v1700
      %v1702 = vpop.xlane.xlu0 %1701
      %v1703 = vmul.f32 %v1678, %v1444
      %1705 = vrot.lane.b32.xlu0 %v1703, 126
      %v1706 = vpop.permute.xlu0 %1705
      %v1708 = vadd.f32 %v1607, %v1706
      %v1709 = vmul.f32 %v1702, %v1444
      %1711 = vrot.lane.b32.xlu0 %v1709, 125
      %v1712 = vpop.permute.xlu0 %1711
      %v1714 = vadd.f32 %v1708, %v1712
      %1715 = vrot.lane.b32.xlu0 %v1444, 124
      %v1716 = vpop.permute.xlu0 %1715
      %v1718 = vadd.f32 %v1714, %v1716
      %v1719 = vxor.u32 %v1718, 2147483648
      %v1720 = vmul.f32 %v1719, 1.442695
      %v1721 = vpow.pop %v1720
      %v1722 = vadd.f32 %v1721, 1.0
      %v1723 = vrcp.pop %v1722
      %v1724 = vmul.f32 %v1722, %v1723
      %v1725 = vsub.f32 1.0, %v1724
      %v1726 = vmul.f32 %v1723, %v1725
      %v1727 = vadd.f32 %v1723, %v1726
      %vm1728 = vweird.f32 %v1722
      %vm1729 = vweird.f32 %v1723
      %vm1730 = vmor %vm1728, %vm1729
      %v1731 = vsel %vm1730, %v1723, %v1727
      %v1732 = vand.u32 2147483647, %v1722
      %vm1733 = vcmp.eq.f32.partialorder %v1732, 8.507059e+37
      %v1734 = vand.u32 %v1722, 2147483648
      %v1735 = vor.u32 1.1754944e-38, %v1734
      %v1736 = vsel %vm1733, %v1735, %v1731
      %v1737 = vmul.f32 1.0, %v1736
      %1739 = vset.pattern.permute.xlu0 47
      %1740 = vperm.xlu0 %1739, %v1737
      %v1741 = vpop.permute.xlu0 %1740
      %v1743 = vmul.f32 %v1741, %v243
      %v1744 = vmul.f32 %v1741, %v244
      %v1745 = vmul.f32 %v1741, %v245
      %v1746 = vmul.f32 %v1741, %v246
      %v1747 = vrot.slane %v1743, 4
      %v1748 = vadd.f32 %v1743, %v1747
      %v1749 = vrot.slane %v1748, 2
      %v1750 = vadd.f32 %v1748, %v1749
      %v1751 = vrot.slane %v1750, 1
      %v1752 = vadd.f32 %v1750, %v1751
      %v1753 = vrot.slane %v1744, 4
      %v1754 = vadd.f32 %v1744, %v1753
      %v1755 = vrot.slane %v1754, 2
      %v1756 = vadd.f32 %v1754, %v1755
      %v1757 = vrot.slane %v1756, 1
      %v1758 = vadd.f32 %v1756, %v1757
      %v1759 = vrot.slane %v1745, 4
      %v1760 = vadd.f32 %v1745, %v1759
      %v1761 = vrot.slane %v1760, 2
      %v1762 = vadd.f32 %v1760, %v1761
      %v1763 = vrot.slane %v1762, 1
      %v1764 = vadd.f32 %v1762, %v1763
      %v1765 = vrot.slane %v1746, 4
      %v1766 = vadd.f32 %v1746, %v1765
      %v1767 = vrot.slane %v1766, 2
      %v1768 = vadd.f32 %v1766, %v1767
      %v1769 = vrot.slane %v1768, 1
      %v1770 = vadd.f32 %v1768, %v1769
      %v1771 = vmul.f32 %v1335, %v1752
      %v1772 = vmul.f32 %v1336, %v1758
      %v1773 = vmul.f32 %v1337, %v1764
      %v1774 = vmul.f32 %v1338, %v1770
      %1776 = vrot.lane.b32.xlu0 %v1774, 73
      %v1777 = vpop.permute.xlu0 %1776
      %1782 = vrot.lane.b32.xlu0 %v1771, 73
      %v1783 = vpop.permute.xlu0 %1782
      %1784 = vrot.lane.b32.xlu0 %v1772, 73
      %v1785 = vpop.permute.xlu0 %1784
      %1786 = vrot.lane.b32.xlu0 %v1773, 73
      %v1787 = vpop.permute.xlu0 %1786
      %v1788 = vsel %vm261, %v1783, %v1785
      %v1789 = vsel %vm261, %v1785, %v1787
      %v1790 = vsel %vm261, %v1787, %v1777
      %v1795 = vsel %vm261, %v1777, %v1783
      %v1796 = vld [vmem:[%s270] ss:$8 sm:$0xf]
      %v1798 = vperm.slane %v1796, 0
      %v1799 = vperm.slane %v1796, 1
      %v1800 = vperm.slane %v1796, 2
      %v1801 = vperm.slane %v1796, 3
      %v1806 = vmul.f32 %v1795, %v1798
      %v1807 = vmul.f32 %v1788, %v1799
      %v1808 = vmul.f32 %v1789, %v1800
      %v1809 = vmul.f32 %v1790, %v1801
      %1810 = vst [vmem:[#allocation2] sm:$0xff] %v1806
      %1811 = vst [vmem:[#allocation2 + $0x8] sm:$0xff] %v1807
      %1812 = vst [vmem:[#allocation2 + $0x10] sm:$0xff] %v1808
      %1813 = vst [vmem:[#allocation2 + $0x18] sm:$0xff] %v1809
      %1814 = vrot.lane.b32.xlu0 %v1774, 72
      %v1815 = vpop.permute.xlu0 %1814
      %1817 = vrot.lane.b32.xlu0 %v1771, 72
      %v1818 = vpop.permute.xlu0 %1817
      %1819 = vrot.lane.b32.xlu0 %v1772, 72
      %v1820 = vpop.permute.xlu0 %1819
      %1821 = vrot.lane.b32.xlu0 %v1773, 72
      %v1822 = vpop.permute.xlu0 %1821
      %v1823 = vsel %vm298, %v1818, %v1820
      %v1824 = vsel %vm298, %v1820, %v1822
      %v1825 = vsel %vm298, %v1822, %v1815
      %v1830 = vsel %vm298, %v1815, %v1818
      %v1831 = vld [vmem:[%s307] ss:$8 sm:$0xf]
      %v1833 = vperm.slane %v1831, 0
      %v1834 = vperm.slane %v1831, 1
      %v1835 = vperm.slane %v1831, 2
      %v1836 = vperm.slane %v1831, 3
      %v1841 = vmul.f32 %v1830, %v1833
      %v1842 = vmul.f32 %v1823, %v1834
      %v1843 = vmul.f32 %v1824, %v1835
      %v1844 = vmul.f32 %v1825, %v1836
      %1845 = vst [vmem:[#allocation2 + $0x20] sm:$0xff] %v1841
      %1846 = vst [vmem:[#allocation2 + $0x28] sm:$0xff] %v1842
      %1847 = vst [vmem:[#allocation2 + $0x30] sm:$0xff] %v1843
      %1848 = vst [vmem:[#allocation2 + $0x38] sm:$0xff] %v1844
      %1849 = vrot.lane.b32.xlu0 %v1774, 71
      %v1850 = vpop.permute.xlu0 %1849
      %1852 = vrot.lane.b32.xlu0 %v1771, 71
      %v1853 = vpop.permute.xlu0 %1852
      %1854 = vrot.lane.b32.xlu0 %v1772, 71
      %v1855 = vpop.permute.xlu0 %1854
      %1856 = vrot.lane.b32.xlu0 %v1773, 71
      %v1857 = vpop.permute.xlu0 %1856
      %v1858 = vsel %vm335, %v1853, %v1855
      %v1859 = vsel %vm335, %v1855, %v1857
      %v1860 = vsel %vm335, %v1857, %v1850
      %v1865 = vsel %vm335, %v1850, %v1853
      %v1866 = vld [vmem:[%s344] ss:$8 sm:$0xf]
      %v1868 = vperm.slane %v1866, 0
      %v1869 = vperm.slane %v1866, 1
      %v1870 = vperm.slane %v1866, 2
      %v1871 = vperm.slane %v1866, 3
      %v1876 = vmul.f32 %v1865, %v1868
      %v1877 = vmul.f32 %v1858, %v1869
      %v1878 = vmul.f32 %v1859, %v1870
      %v1879 = vmul.f32 %v1860, %v1871
      %1880 = vst [vmem:[#allocation2 + $0x40] sm:$0xff] %v1876
      %1881 = vst [vmem:[#allocation2 + $0x48] sm:$0xff] %v1877
      %1882 = vst [vmem:[#allocation2 + $0x50] sm:$0xff] %v1878
      %1883 = vst [vmem:[#allocation2 + $0x58] sm:$0xff] %v1879
      %1884 = vrot.lane.b32.xlu0 %v1774, 65
      %v1885 = vpop.permute.xlu0 %1884
      %1887 = vrot.lane.b32.xlu0 %v1771, 65
      %v1888 = vpop.permute.xlu0 %1887
      %1889 = vrot.lane.b32.xlu0 %v1772, 65
      %v1890 = vpop.permute.xlu0 %1889
      %1891 = vrot.lane.b32.xlu0 %v1773, 65
      %v1892 = vpop.permute.xlu0 %1891
      %v1893 = vsel %vm372, %v1888, %v1890
      %v1894 = vsel %vm372, %v1890, %v1892
      %v1895 = vsel %vm372, %v1892, %v1885
      %v1900 = vsel %vm372, %v1885, %v1888
      %v1901 = vld [vmem:[%s381] ss:$8 sm:$0xf]
      %v1903 = vperm.slane %v1901, 0
      %v1904 = vperm.slane %v1901, 1
      %v1905 = vperm.slane %v1901, 2
      %v1906 = vperm.slane %v1901, 3
      %v1911 = vmul.f32 %v1900, %v1903
      %v1912 = vmul.f32 %v1893, %v1904
      %v1913 = vmul.f32 %v1894, %v1905
      %v1914 = vmul.f32 %v1895, %v1906
      %1915 = vst [vmem:[#allocation2 + $0x60] sm:$0xff] %v1911
      %1916 = vst [vmem:[#allocation2 + $0x68] sm:$0xff] %v1912
      %1917 = vst [vmem:[#allocation2 + $0x70] sm:$0xff] %v1913
      %1918 = vst [vmem:[#allocation2 + $0x78] sm:$0xff] %v1914
      %1919 = vrot.lane.b32.xlu0 %v1774, 64
      %v1920 = vpop.permute.xlu0 %1919
      %1922 = vrot.lane.b32.xlu0 %v1771, 64
      %v1923 = vpop.permute.xlu0 %1922
      %1924 = vrot.lane.b32.xlu0 %v1772, 64
      %v1925 = vpop.permute.xlu0 %1924
      %1926 = vrot.lane.b32.xlu0 %v1773, 64
      %v1927 = vpop.permute.xlu0 %1926
      %v1928 = vsel %vm409, %v1923, %v1925
      %v1929 = vsel %vm409, %v1925, %v1927
      %v1930 = vsel %vm409, %v1927, %v1920
      %v1935 = vsel %vm409, %v1920, %v1923
      %v1936 = vld [vmem:[%s418] ss:$8 sm:$0xf]
      %v1938 = vperm.slane %v1936, 0
      %v1939 = vperm.slane %v1936, 1
      %v1940 = vperm.slane %v1936, 2
      %v1941 = vperm.slane %v1936, 3
      %v1946 = vmul.f32 %v1935, %v1938
      %v1947 = vmul.f32 %v1928, %v1939
      %v1948 = vmul.f32 %v1929, %v1940
      %v1949 = vmul.f32 %v1930, %v1941
      %1950 = vst [vmem:[#allocation2 + $0x80] sm:$0xff] %v1946
      %1951 = vst [vmem:[#allocation2 + $0x88] sm:$0xff] %v1947
      %1952 = vst [vmem:[#allocation2 + $0x90] sm:$0xff] %v1948
      %1953 = vst [vmem:[#allocation2 + $0x98] sm:$0xff] %v1949
      %1954 = vrot.lane.b32.xlu0 %v1774, 63
      %v1955 = vpop.permute.xlu0 %1954
      %1957 = vrot.lane.b32.xlu0 %v1771, 63
      %v1958 = vpop.permute.xlu0 %1957
      %1959 = vrot.lane.b32.xlu0 %v1772, 63
      %v1960 = vpop.permute.xlu0 %1959
      %1961 = vrot.lane.b32.xlu0 %v1773, 63
      %v1962 = vpop.permute.xlu0 %1961
      %v1963 = vsel %vm446, %v1958, %v1960
      %v1964 = vsel %vm446, %v1960, %v1962
      %v1965 = vsel %vm446, %v1962, %v1955
      %v1970 = vsel %vm446, %v1955, %v1958
      %v1971 = vld [vmem:[%s455] ss:$8 sm:$0xf]
      %v1973 = vperm.slane %v1971, 0
      %v1974 = vperm.slane %v1971, 1
      %v1975 = vperm.slane %v1971, 2
      %v1976 = vperm.slane %v1971, 3
      %v1981 = vmul.f32 %v1970, %v1973
      %v1982 = vmul.f32 %v1963, %v1974
      %v1983 = vmul.f32 %v1964, %v1975
      %v1984 = vmul.f32 %v1965, %v1976
      %1985 = vst [vmem:[#allocation2 + $0xa0] sm:$0xff] %v1981
      %1986 = vst [vmem:[#allocation2 + $0xa8] sm:$0xff] %v1982
      %1987 = vst [vmem:[#allocation2 + $0xb0] sm:$0xff] %v1983
      %1988 = vst [vmem:[#allocation2 + $0xb8] sm:$0xff] %v1984
      %1989 = vrot.lane.b32.xlu0 %v1774, 57
      %v1990 = vpop.permute.xlu0 %1989
      %1992 = vrot.lane.b32.xlu0 %v1771, 57
      %v1993 = vpop.permute.xlu0 %1992
      %1994 = vrot.lane.b32.xlu0 %v1772, 57
      %v1995 = vpop.permute.xlu0 %1994
      %1996 = vrot.lane.b32.xlu0 %v1773, 57
      %v1997 = vpop.permute.xlu0 %1996
      %v1998 = vsel %vm483, %v1993, %v1995
      %v1999 = vsel %vm483, %v1995, %v1997
      %v2000 = vsel %vm483, %v1997, %v1990
      %v2005 = vsel %vm483, %v1990, %v1993
      %v2006 = vld [vmem:[%s492] ss:$8 sm:$0xf]
      %v2008 = vperm.slane %v2006, 0
      %v2009 = vperm.slane %v2006, 1
      %v2010 = vperm.slane %v2006, 2
      %v2011 = vperm.slane %v2006, 3
      %v2016 = vmul.f32 %v2005, %v2008
      %v2017 = vmul.f32 %v1998, %v2009
      %v2018 = vmul.f32 %v1999, %v2010
      %v2019 = vmul.f32 %v2000, %v2011
      %2020 = vst [vmem:[#allocation2 + $0xc0] sm:$0xff] %v2016
      %2021 = vst [vmem:[#allocation2 + $0xc8] sm:$0xff] %v2017
      %2022 = vst [vmem:[#allocation2 + $0xd0] sm:$0xff] %v2018
      %2023 = vst [vmem:[#allocation2 + $0xd8] sm:$0xff] %v2019
      %2024 = vrot.lane.b32.xlu0 %v1774, 56
      %v2025 = vpop.permute.xlu0 %2024
      %2027 = vrot.lane.b32.xlu0 %v1771, 56
      %v2028 = vpop.permute.xlu0 %2027
      %2029 = vrot.lane.b32.xlu0 %v1772, 56
      %v2030 = vpop.permute.xlu0 %2029
      %2031 = vrot.lane.b32.xlu0 %v1773, 56
      %v2032 = vpop.permute.xlu0 %2031
      %v2033 = vsel %vm520, %v2028, %v2030
      %v2034 = vsel %vm520, %v2030, %v2032
      %v2035 = vsel %vm520, %v2032, %v2025
      %v2040 = vsel %vm520, %v2025, %v2028
      %v2041 = vld [vmem:[%s529] ss:$8 sm:$0xf]
      %v2043 = vperm.slane %v2041, 0
      %v2044 = vperm.slane %v2041, 1
      %v2045 = vperm.slane %v2041, 2
      %v2046 = vperm.slane %v2041, 3
      %v2051 = vmul.f32 %v2040, %v2043
      %v2052 = vmul.f32 %v2033, %v2044
      %v2053 = vmul.f32 %v2034, %v2045
      %v2054 = vmul.f32 %v2035, %v2046
      %2055 = vst [vmem:[#allocation2 + $0xe0] sm:$0xff] %v2051
      %2056 = vst [vmem:[#allocation2 + $0xe8] sm:$0xff] %v2052
      %2057 = vst [vmem:[#allocation2 + $0xf0] sm:$0xff] %v2053
      %2058 = vst [vmem:[#allocation2 + $0xf8] sm:$0xff] %v2054
      %2059 = vrot.lane.b32.xlu0 %v1774, 55
      %v2060 = vpop.permute.xlu0 %2059
      %2062 = vrot.lane.b32.xlu0 %v1771, 55
      %v2063 = vpop.permute.xlu0 %2062
      %2064 = vrot.lane.b32.xlu0 %v1772, 55
      %v2065 = vpop.permute.xlu0 %2064
      %2066 = vrot.lane.b32.xlu0 %v1773, 55
      %v2067 = vpop.permute.xlu0 %2066
      %v2068 = vsel %vm557, %v2063, %v2065
      %v2069 = vsel %vm557, %v2065, %v2067
      %v2070 = vsel %vm557, %v2067, %v2060
      %v2075 = vsel %vm557, %v2060, %v2063
      %v2076 = vld [vmem:[%s566] ss:$8 sm:$0xf]
      %v2078 = vperm.slane %v2076, 0
      %v2079 = vperm.slane %v2076, 1
      %v2080 = vperm.slane %v2076, 2
      %v2081 = vperm.slane %v2076, 3
      %v2086 = vmul.f32 %v2075, %v2078
      %v2087 = vmul.f32 %v2068, %v2079
      %v2088 = vmul.f32 %v2069, %v2080
      %v2089 = vmul.f32 %v2070, %v2081
      %2090 = vst [vmem:[#allocation2 + $0x100] sm:$0xff] %v2086
      %2091 = vst [vmem:[#allocation2 + $0x108] sm:$0xff] %v2087
      %2092 = vst [vmem:[#allocation2 + $0x110] sm:$0xff] %v2088
      %2093 = vst [vmem:[#allocation2 + $0x118] sm:$0xff] %v2089
      %2094 = vrot.lane.b32.xlu0 %v1774, 9
      %v2095 = vpop.permute.xlu0 %2094
      %2097 = vrot.lane.b32.xlu0 %v1771, 9
      %v2098 = vpop.permute.xlu0 %2097
      %2099 = vrot.lane.b32.xlu0 %v1772, 9
      %v2100 = vpop.permute.xlu0 %2099
      %2101 = vrot.lane.b32.xlu0 %v1773, 9
      %v2102 = vpop.permute.xlu0 %2101
      %v2103 = vsel %vm594, %v2098, %v2100
      %v2104 = vsel %vm594, %v2100, %v2102
      %v2105 = vsel %vm594, %v2102, %v2095
      %v2110 = vsel %vm594, %v2095, %v2098
      %v2111 = vld [vmem:[%s603] ss:$8 sm:$0xf]
      %v2113 = vperm.slane %v2111, 0
      %v2114 = vperm.slane %v2111, 1
      %v2115 = vperm.slane %v2111, 2
      %v2116 = vperm.slane %v2111, 3
      %v2121 = vmul.f32 %v2110, %v2113
      %v2122 = vmul.f32 %v2103, %v2114
      %v2123 = vmul.f32 %v2104, %v2115
      %v2124 = vmul.f32 %v2105, %v2116
      %2125 = vst [vmem:[#allocation2 + $0x120] sm:$0xff] %v2121
      %2126 = vst [vmem:[#allocation2 + $0x128] sm:$0xff] %v2122
      %2127 = vst [vmem:[#allocation2 + $0x130] sm:$0xff] %v2123
      %2128 = vst [vmem:[#allocation2 + $0x138] sm:$0xff] %v2124
      %2129 = vrot.lane.b32.xlu0 %v1774, 8
      %v2130 = vpop.permute.xlu0 %2129
      %2132 = vrot.lane.b32.xlu0 %v1771, 8
      %v2133 = vpop.permute.xlu0 %2132
      %2134 = vrot.lane.b32.xlu0 %v1772, 8
      %v2135 = vpop.permute.xlu0 %2134
      %2136 = vrot.lane.b32.xlu0 %v1773, 8
      %v2137 = vpop.permute.xlu0 %2136
      %v2138 = vsel %vm631, %v2133, %v2135
      %v2139 = vsel %vm631, %v2135, %v2137
      %v2140 = vsel %vm631, %v2137, %v2130
      %v2145 = vsel %vm631, %v2130, %v2133
      %v2146 = vld [vmem:[%s640] ss:$8 sm:$0xf]
      %v2148 = vperm.slane %v2146, 0
      %v2149 = vperm.slane %v2146, 1
      %v2150 = vperm.slane %v2146, 2
      %v2151 = vperm.slane %v2146, 3
      %v2156 = vmul.f32 %v2145, %v2148
      %v2157 = vmul.f32 %v2138, %v2149
      %v2158 = vmul.f32 %v2139, %v2150
      %v2159 = vmul.f32 %v2140, %v2151
      %2160 = vst [vmem:[#allocation2 + $0x140] sm:$0xff] %v2156
      %2161 = vst [vmem:[#allocation2 + $0x148] sm:$0xff] %v2157
      %2162 = vst [vmem:[#allocation2 + $0x150] sm:$0xff] %v2158
      %2163 = vst [vmem:[#allocation2 + $0x158] sm:$0xff] %v2159
      %2164 = vrot.lane.b32.xlu0 %v1774, 7
      %v2165 = vpop.permute.xlu0 %2164
      %2167 = vrot.lane.b32.xlu0 %v1771, 7
      %v2168 = vpop.permute.xlu0 %2167
      %2169 = vrot.lane.b32.xlu0 %v1772, 7
      %v2170 = vpop.permute.xlu0 %2169
      %2171 = vrot.lane.b32.xlu0 %v1773, 7
      %v2172 = vpop.permute.xlu0 %2171
      %v2173 = vsel %vm668, %v2168, %v2170
      %v2174 = vsel %vm668, %v2170, %v2172
      %v2175 = vsel %vm668, %v2172, %v2165
      %v2180 = vsel %vm668, %v2165, %v2168
      %v2181 = vld [vmem:[%s677] ss:$8 sm:$0xf]
      %v2183 = vperm.slane %v2181, 0
      %v2184 = vperm.slane %v2181, 1
      %v2185 = vperm.slane %v2181, 2
      %v2186 = vperm.slane %v2181, 3
      %v2191 = vmul.f32 %v2180, %v2183
      %v2192 = vmul.f32 %v2173, %v2184
      %v2193 = vmul.f32 %v2174, %v2185
      %v2194 = vmul.f32 %v2175, %v2186
      %2195 = vst [vmem:[#allocation2 + $0x160] sm:$0xff] %v2191
      %2196 = vst [vmem:[#allocation2 + $0x168] sm:$0xff] %v2192
      %2197 = vst [vmem:[#allocation2 + $0x170] sm:$0xff] %v2193
      %2198 = vst [vmem:[#allocation2 + $0x178] sm:$0xff] %v2194
      %2199 = vrot.lane.b32.xlu0 %v1774, 1
      %v2200 = vpop.permute.xlu0 %2199
      %2202 = vrot.lane.b32.xlu0 %v1771, 1
      %v2203 = vpop.permute.xlu0 %2202
      %2204 = vrot.lane.b32.xlu0 %v1772, 1
      %v2205 = vpop.permute.xlu0 %2204
      %2206 = vrot.lane.b32.xlu0 %v1773, 1
      %v2207 = vpop.permute.xlu0 %2206
      %v2208 = vsel %vm705, %v2203, %v2205
      %v2209 = vsel %vm705, %v2205, %v2207
      %v2210 = vsel %vm705, %v2207, %v2200
      %v2215 = vsel %vm705, %v2200, %v2203
      %v2216 = vld [vmem:[%s714] ss:$8 sm:$0xf]
      %v2218 = vperm.slane %v2216, 0
      %v2219 = vperm.slane %v2216, 1
      %v2220 = vperm.slane %v2216, 2
      %v2221 = vperm.slane %v2216, 3
      %v2226 = vmul.f32 %v2215, %v2218
      %v2227 = vmul.f32 %v2208, %v2219
      %v2228 = vmul.f32 %v2209, %v2220
      %v2229 = vmul.f32 %v2210, %v2221
      %2230 = vst [vmem:[#allocation2 + $0x180] sm:$0xff] %v2226
      %2231 = vst [vmem:[#allocation2 + $0x188] sm:$0xff] %v2227
      %2232 = vst [vmem:[#allocation2 + $0x190] sm:$0xff] %v2228
      %2233 = vst [vmem:[#allocation2 + $0x198] sm:$0xff] %v2229
      %2234 = vst [vmem:[#allocation2 + $0x1a0] sm:$0xff] %v1771
      %2235 = vst [vmem:[#allocation2 + $0x1a8] sm:$0xff] %v1772
      %2236 = vst [vmem:[#allocation2 + $0x1b0] sm:$0xff] %v1773
      %2237 = vst [vmem:[#allocation2 + $0x1b8] sm:$0xff] %v1774
      %2238 = vrot.lane.b32.xlu0 %v1771, 127
      %v2239 = vpop.permute.xlu0 %2238
      %2240 = vrot.lane.b32.xlu0 %v1772, 127
      %v2241 = vpop.permute.xlu0 %2240
      %2242 = vrot.lane.b32.xlu0 %v1773, 127
      %v2243 = vpop.permute.xlu0 %2242
      %2244 = vrot.lane.b32.xlu0 %v1774, 127
      %v2245 = vpop.permute.xlu0 %2244
      %v2246 = vsel %vm745, %v2239, %v2241
      %v2247 = vsel %vm745, %v2241, %v2243
      %v2248 = vsel %vm745, %v2243, %v2245
      %v2254 = vsel %vm745, %v2245, %v2239
      %v2255 = vld [vmem:[%s755] ss:$8 sm:$0xf]
      %v2257 = vperm.slane %v2255, 0
      %v2258 = vperm.slane %v2255, 1
      %v2259 = vperm.slane %v2255, 2
      %v2260 = vperm.slane %v2255, 3
      %v2265 = vmul.f32 %v2246, %v2257
      %v2266 = vmul.f32 %v2247, %v2258
      %v2267 = vmul.f32 %v2248, %v2259
      %v2268 = vmul.f32 %v2254, %v2260
      %2269 = vst [vmem:[#allocation2 + $0x1c0] sm:$0xff] %v2265
      %2270 = vst [vmem:[#allocation2 + $0x1c8] sm:$0xff] %v2266
      %2271 = vst [vmem:[#allocation2 + $0x1d0] sm:$0xff] %v2267
      %2272 = vst [vmem:[#allocation2 + $0x1d8] sm:$0xff] %v2268
      %2273 = vrot.lane.b32.xlu0 %v1771, 121
      %v2274 = vpop.permute.xlu0 %2273
      %2275 = vrot.lane.b32.xlu0 %v1772, 121
      %v2276 = vpop.permute.xlu0 %2275
      %2277 = vrot.lane.b32.xlu0 %v1773, 121
      %v2278 = vpop.permute.xlu0 %2277
      %2279 = vrot.lane.b32.xlu0 %v1774, 121
      %v2280 = vpop.permute.xlu0 %2279
      %v2281 = vsel %vm782, %v2274, %v2276
      %v2282 = vsel %vm782, %v2276, %v2278
      %v2283 = vsel %vm782, %v2278, %v2280
      %v2289 = vsel %vm782, %v2280, %v2274
      %v2290 = vld [vmem:[%s792] ss:$8 sm:$0xf]
      %v2292 = vperm.slane %v2290, 0
      %v2293 = vperm.slane %v2290, 1
      %v2294 = vperm.slane %v2290, 2
      %v2295 = vperm.slane %v2290, 3
      %v2300 = vmul.f32 %v2281, %v2292
      %v2301 = vmul.f32 %v2282, %v2293
      %v2302 = vmul.f32 %v2283, %v2294
      %v2303 = vmul.f32 %v2289, %v2295
      %2304 = vst [vmem:[#allocation2 + $0x1e0] sm:$0xff] %v2300
      %2305 = vst [vmem:[#allocation2 + $0x1e8] sm:$0xff] %v2301
      %2306 = vst [vmem:[#allocation2 + $0x1f0] sm:$0xff] %v2302
      %2307 = vst [vmem:[#allocation2 + $0x1f8] sm:$0xff] %v2303
      %2308 = vrot.lane.b32.xlu0 %v1771, 120
      %v2309 = vpop.permute.xlu0 %2308
      %2310 = vrot.lane.b32.xlu0 %v1772, 120
      %v2311 = vpop.permute.xlu0 %2310
      %2312 = vrot.lane.b32.xlu0 %v1773, 120
      %v2313 = vpop.permute.xlu0 %2312
      %2314 = vrot.lane.b32.xlu0 %v1774, 120
      %v2315 = vpop.permute.xlu0 %2314
      %v2316 = vsel %vm819, %v2309, %v2311
      %v2317 = vsel %vm819, %v2311, %v2313
      %v2318 = vsel %vm819, %v2313, %v2315
      %v2324 = vsel %vm819, %v2315, %v2309
      %v2325 = vld [vmem:[%s829] ss:$8 sm:$0xf]
      %v2327 = vperm.slane %v2325, 0
      %v2328 = vperm.slane %v2325, 1
      %v2329 = vperm.slane %v2325, 2
      %v2330 = vperm.slane %v2325, 3
      %v2335 = vmul.f32 %v2316, %v2327
      %v2336 = vmul.f32 %v2317, %v2328
      %v2337 = vmul.f32 %v2318, %v2329
      %v2338 = vmul.f32 %v2324, %v2330
      %2339 = vst [vmem:[#allocation2 + $0x200] sm:$0xff] %v2335
      %2340 = vst [vmem:[#allocation2 + $0x208] sm:$0xff] %v2336
      %2341 = vst [vmem:[#allocation2 + $0x210] sm:$0xff] %v2337
      %2342 = vst [vmem:[#allocation2 + $0x218] sm:$0xff] %v2338
      %2343 = vrot.lane.b32.xlu0 %v1771, 119
      %v2344 = vpop.permute.xlu0 %2343
      %2345 = vrot.lane.b32.xlu0 %v1772, 119
      %v2346 = vpop.permute.xlu0 %2345
      %2347 = vrot.lane.b32.xlu0 %v1773, 119
      %v2348 = vpop.permute.xlu0 %2347
      %2349 = vrot.lane.b32.xlu0 %v1774, 119
      %v2350 = vpop.permute.xlu0 %2349
      %v2351 = vsel %vm856, %v2344, %v2346
      %v2352 = vsel %vm856, %v2346, %v2348
      %v2353 = vsel %vm856, %v2348, %v2350
      %v2359 = vsel %vm856, %v2350, %v2344
      %v2360 = vld [vmem:[%s866] ss:$8 sm:$0xf]
      %v2362 = vperm.slane %v2360, 0
      %v2363 = vperm.slane %v2360, 1
      %v2364 = vperm.slane %v2360, 2
      %v2365 = vperm.slane %v2360, 3
      %v2370 = vmul.f32 %v2351, %v2362
      %v2371 = vmul.f32 %v2352, %v2363
      %v2372 = vmul.f32 %v2353, %v2364
      %v2373 = vmul.f32 %v2359, %v2365
      %2374 = vst [vmem:[#allocation2 + $0x220] sm:$0xff] %v2370
      %2375 = vst [vmem:[#allocation2 + $0x228] sm:$0xff] %v2371
      %2376 = vst [vmem:[#allocation2 + $0x230] sm:$0xff] %v2372
      %2377 = vst [vmem:[#allocation2 + $0x238] sm:$0xff] %v2373
      %v2378 = vld [vmem:[%s885] ss:$8 sm:$0xf]
      %v2380 = vperm.slane %v2378, 0
      %v2381 = vperm.slane %v2378, 1
      %v2382 = vperm.slane %v2378, 2
      %v2383 = vperm.slane %v2378, 3
      %v2388 = vmul.f32 %v1788, %v2380
      %v2389 = vmul.f32 %v1789, %v2381
      %v2390 = vmul.f32 %v1790, %v2382
      %v2391 = vmul.f32 %v1795, %v2383
      %2392 = vst [vmem:[#allocation2 + $0x240] sm:$0xff] %v2388
      %2393 = vst [vmem:[#allocation2 + $0x248] sm:$0xff] %v2389
      %2394 = vst [vmem:[#allocation2 + $0x250] sm:$0xff] %v2390
      %2395 = vst [vmem:[#allocation2 + $0x258] sm:$0xff] %v2391
      %v2396 = vld [vmem:[%s904] ss:$8 sm:$0xf]
      %v2398 = vperm.slane %v2396, 0
      %v2399 = vperm.slane %v2396, 1
      %v2400 = vperm.slane %v2396, 2
      %v2401 = vperm.slane %v2396, 3
      %v2406 = vmul.f32 %v1823, %v2398
      %v2407 = vmul.f32 %v1824, %v2399
      %v2408 = vmul.f32 %v1825, %v2400
      %v2409 = vmul.f32 %v1830, %v2401
      %2410 = vst [vmem:[#allocation2 + $0x260] sm:$0xff] %v2406
      %2411 = vst [vmem:[#allocation2 + $0x268] sm:$0xff] %v2407
      %2412 = vst [vmem:[#allocation2 + $0x270] sm:$0xff] %v2408
      %2413 = vst [vmem:[#allocation2 + $0x278] sm:$0xff] %v2409
      %v2414 = vld [vmem:[%s923] ss:$8 sm:$0xf]
      %v2416 = vperm.slane %v2414, 0
      %v2417 = vperm.slane %v2414, 1
      %v2418 = vperm.slane %v2414, 2
      %v2419 = vperm.slane %v2414, 3
      %v2424 = vmul.f32 %v1858, %v2416
      %v2425 = vmul.f32 %v1859, %v2417
      %v2426 = vmul.f32 %v1860, %v2418
      %v2427 = vmul.f32 %v1865, %v2419
      %2428 = vst [vmem:[#allocation2 + $0x280] sm:$0xff] %v2424
      %2429 = vst [vmem:[#allocation2 + $0x288] sm:$0xff] %v2425
      %2430 = vst [vmem:[#allocation2 + $0x290] sm:$0xff] %v2426
      %2431 = vst [vmem:[#allocation2 + $0x298] sm:$0xff] %v2427
      %v2432 = vld [vmem:[%s942] ss:$8 sm:$0xf]
      %v2434 = vperm.slane %v2432, 0
      %v2435 = vperm.slane %v2432, 1
      %v2436 = vperm.slane %v2432, 2
      %v2437 = vperm.slane %v2432, 3
      %v2442 = vmul.f32 %v1893, %v2434
      %v2443 = vmul.f32 %v1894, %v2435
      %v2444 = vmul.f32 %v1895, %v2436
      %v2445 = vmul.f32 %v1900, %v2437
      %2446 = vst [vmem:[#allocation2 + $0x2a0] sm:$0xff] %v2442
      %2447 = vst [vmem:[#allocation2 + $0x2a8] sm:$0xff] %v2443
      %2448 = vst [vmem:[#allocation2 + $0x2b0] sm:$0xff] %v2444
      %2449 = vst [vmem:[#allocation2 + $0x2b8] sm:$0xff] %v2445
      %v2450 = vld [vmem:[%s961] ss:$8 sm:$0xf]
      %v2452 = vperm.slane %v2450, 0
      %v2453 = vperm.slane %v2450, 1
      %v2454 = vperm.slane %v2450, 2
      %v2455 = vperm.slane %v2450, 3
      %v2460 = vmul.f32 %v1928, %v2452
      %v2461 = vmul.f32 %v1929, %v2453
      %v2462 = vmul.f32 %v1930, %v2454
      %v2463 = vmul.f32 %v1935, %v2455
      %2464 = vst [vmem:[#allocation2 + $0x2c0] sm:$0xff] %v2460
      %2465 = vst [vmem:[#allocation2 + $0x2c8] sm:$0xff] %v2461
      %2466 = vst [vmem:[#allocation2 + $0x2d0] sm:$0xff] %v2462
      %2467 = vst [vmem:[#allocation2 + $0x2d8] sm:$0xff] %v2463
      %v2468 = vld [vmem:[%s980] ss:$8 sm:$0xf]
      %v2470 = vperm.slane %v2468, 0
      %v2471 = vperm.slane %v2468, 1
      %v2472 = vperm.slane %v2468, 2
      %v2473 = vperm.slane %v2468, 3
      %v2478 = vmul.f32 %v1963, %v2470
      %v2479 = vmul.f32 %v1964, %v2471
      %v2480 = vmul.f32 %v1965, %v2472
      %v2481 = vmul.f32 %v1970, %v2473
      %2482 = vst [vmem:[#allocation2 + $0x2e0] sm:$0xff] %v2478
      %2483 = vst [vmem:[#allocation2 + $0x2e8] sm:$0xff] %v2479
      %2484 = vst [vmem:[#allocation2 + $0x2f0] sm:$0xff] %v2480
      %2485 = vst [vmem:[#allocation2 + $0x2f8] sm:$0xff] %v2481
      %v2486 = vld [vmem:[%s999] ss:$8 sm:$0xf]
      %v2488 = vperm.slane %v2486, 0
      %v2489 = vperm.slane %v2486, 1
      %v2490 = vperm.slane %v2486, 2
      %v2491 = vperm.slane %v2486, 3
      %v2496 = vmul.f32 %v1998, %v2488
      %v2497 = vmul.f32 %v1999, %v2489
      %v2498 = vmul.f32 %v2000, %v2490
      %v2499 = vmul.f32 %v2005, %v2491
      %2500 = vst [vmem:[#allocation2 + $0x300] sm:$0xff] %v2496
      %2501 = vst [vmem:[#allocation2 + $0x308] sm:$0xff] %v2497
      %2502 = vst [vmem:[#allocation2 + $0x310] sm:$0xff] %v2498
      %2503 = vst [vmem:[#allocation2 + $0x318] sm:$0xff] %v2499
      %v2504 = vld [vmem:[%s1018] ss:$8 sm:$0xf]
      %v2506 = vperm.slane %v2504, 0
      %v2507 = vperm.slane %v2504, 1
      %v2508 = vperm.slane %v2504, 2
      %v2509 = vperm.slane %v2504, 3
      %v2514 = vmul.f32 %v2033, %v2506
      %v2515 = vmul.f32 %v2034, %v2507
      %v2516 = vmul.f32 %v2035, %v2508
      %v2517 = vmul.f32 %v2040, %v2509
      %2518 = vst [vmem:[#allocation2 + $0x320] sm:$0xff] %v2514
      %2519 = vst [vmem:[#allocation2 + $0x328] sm:$0xff] %v2515
      %2520 = vst [vmem:[#allocation2 + $0x330] sm:$0xff] %v2516
      %2521 = vst [vmem:[#allocation2 + $0x338] sm:$0xff] %v2517
      %v2522 = vld [vmem:[%s1037] ss:$8 sm:$0xf]
      %v2524 = vperm.slane %v2522, 0
      %v2525 = vperm.slane %v2522, 1
      %v2526 = vperm.slane %v2522, 2
      %v2527 = vperm.slane %v2522, 3
      %v2532 = vmul.f32 %v2068, %v2524
      %v2533 = vmul.f32 %v2069, %v2525
      %v2534 = vmul.f32 %v2070, %v2526
      %v2535 = vmul.f32 %v2075, %v2527
      %2536 = vst [vmem:[#allocation2 + $0x340] sm:$0xff] %v2532
      %2537 = vst [vmem:[#allocation2 + $0x348] sm:$0xff] %v2533
      %2538 = vst [vmem:[#allocation2 + $0x350] sm:$0xff] %v2534
      %2539 = vst [vmem:[#allocation2 + $0x358] sm:$0xff] %v2535
      %v2540 = vld [vmem:[%s3 + $0x10] sm:$0xff]
      %v2541 = vld [vmem:[%s3 + $0x18] sm:$0xff]
      %v2542 = vld [vmem:[#allocation2] sm:$0xff]
      %v2543 = vld [vmem:[#allocation2 + $0x8] sm:$0xff]
      %v2544 = vld [vmem:[#allocation2 + $0x10] sm:$0xff]
      %v2545 = vld [vmem:[#allocation2 + $0x18] sm:$0xff]
      %v2546 = vld [vmem:[#allocation2 + $0x20] sm:$0xff]
      %v2547 = vld [vmem:[#allocation2 + $0x28] sm:$0xff]
      %v2548 = vld [vmem:[#allocation2 + $0x30] sm:$0xff]
      %v2549 = vld [vmem:[#allocation2 + $0x38] sm:$0xff]
      %v2550 = vld [vmem:[#allocation2 + $0x40] sm:$0xff]
      %v2551 = vld [vmem:[#allocation2 + $0x48] sm:$0xff]
      %v2552 = vld [vmem:[#allocation2 + $0x50] sm:$0xff]
      %v2553 = vld [vmem:[#allocation2 + $0x58] sm:$0xff]
      %v2554 = vld [vmem:[#allocation2 + $0x60] sm:$0xff]
      %v2555 = vld [vmem:[#allocation2 + $0x68] sm:$0xff]
      %v2556 = vld [vmem:[#allocation2 + $0x70] sm:$0xff]
      %v2557 = vld [vmem:[#allocation2 + $0x78] sm:$0xff]
      %v2558 = vld [vmem:[#allocation2 + $0x80] sm:$0xff]
      %v2559 = vld [vmem:[#allocation2 + $0x88] sm:$0xff]
      %v2560 = vld [vmem:[#allocation2 + $0x90] sm:$0xff]
      %v2561 = vld [vmem:[#allocation2 + $0x98] sm:$0xff]
      %v2562 = vld [vmem:[#allocation2 + $0xa0] sm:$0xff]
      %v2563 = vld [vmem:[#allocation2 + $0xa8] sm:$0xff]
      %v2564 = vld [vmem:[#allocation2 + $0xb0] sm:$0xff]
      %v2565 = vld [vmem:[#allocation2 + $0xb8] sm:$0xff]
      %v2566 = vld [vmem:[#allocation2 + $0xc0] sm:$0xff]
      %v2567 = vld [vmem:[#allocation2 + $0xc8] sm:$0xff]
      %v2568 = vld [vmem:[#allocation2 + $0xd0] sm:$0xff]
      %v2569 = vld [vmem:[#allocation2 + $0xd8] sm:$0xff]
      %v2570 = vld [vmem:[#allocation2 + $0xe0] sm:$0xff]
      %v2571 = vld [vmem:[#allocation2 + $0xe8] sm:$0xff]
      %v2572 = vld [vmem:[#allocation2 + $0xf0] sm:$0xff]
      %v2573 = vld [vmem:[#allocation2 + $0xf8] sm:$0xff]
      %v2574 = vld [vmem:[#allocation2 + $0x100] sm:$0xff]
      %v2575 = vld [vmem:[#allocation2 + $0x108] sm:$0xff]
      %v2576 = vld [vmem:[#allocation2 + $0x110] sm:$0xff]
      %v2577 = vld [vmem:[#allocation2 + $0x118] sm:$0xff]
      %v2578 = vld [vmem:[#allocation2 + $0x120] sm:$0xff]
      %v2579 = vld [vmem:[#allocation2 + $0x128] sm:$0xff]
      %v2580 = vld [vmem:[#allocation2 + $0x130] sm:$0xff]
      %v2581 = vld [vmem:[#allocation2 + $0x138] sm:$0xff]
      %v2582 = vld [vmem:[#allocation2 + $0x140] sm:$0xff]
      %v2583 = vld [vmem:[#allocation2 + $0x148] sm:$0xff]
      %v2584 = vld [vmem:[#allocation2 + $0x150] sm:$0xff]
      %v2585 = vld [vmem:[#allocation2 + $0x158] sm:$0xff]
      %v2586 = vld [vmem:[#allocation2 + $0x160] sm:$0xff]
      %v2587 = vld [vmem:[#allocation2 + $0x168] sm:$0xff]
      %v2588 = vld [vmem:[#allocation2 + $0x170] sm:$0xff]
      %v2589 = vld [vmem:[#allocation2 + $0x178] sm:$0xff]
      %v2590 = vld [vmem:[#allocation2 + $0x180] sm:$0xff]
      %v2591 = vld [vmem:[#allocation2 + $0x188] sm:$0xff]
      %v2592 = vld [vmem:[#allocation2 + $0x190] sm:$0xff]
      %v2593 = vld [vmem:[#allocation2 + $0x198] sm:$0xff]
      %v2594 = vld [vmem:[#allocation2 + $0x1a0] sm:$0xff]
      %v2595 = vld [vmem:[#allocation2 + $0x1a8] sm:$0xff]
      %v2596 = vld [vmem:[#allocation2 + $0x1b0] sm:$0xff]
      %v2597 = vld [vmem:[#allocation2 + $0x1b8] sm:$0xff]
      %v2598 = vld [vmem:[#allocation2 + $0x1c0] sm:$0xff]
      %v2599 = vld [vmem:[#allocation2 + $0x1c8] sm:$0xff]
      %v2600 = vld [vmem:[#allocation2 + $0x1d0] sm:$0xff]
      %v2601 = vld [vmem:[#allocation2 + $0x1d8] sm:$0xff]
      %v2602 = vld [vmem:[#allocation2 + $0x1e0] sm:$0xff]
      %v2603 = vld [vmem:[#allocation2 + $0x1e8] sm:$0xff]
      %v2604 = vld [vmem:[#allocation2 + $0x1f0] sm:$0xff]
      %v2605 = vld [vmem:[#allocation2 + $0x1f8] sm:$0xff]
      %v2606 = vld [vmem:[#allocation2 + $0x200] sm:$0xff]
      %v2607 = vld [vmem:[#allocation2 + $0x208] sm:$0xff]
      %v2608 = vld [vmem:[#allocation2 + $0x210] sm:$0xff]
      %v2609 = vld [vmem:[#allocation2 + $0x218] sm:$0xff]
      %v2610 = vld [vmem:[#allocation2 + $0x220] sm:$0xff]
      %v2611 = vld [vmem:[#allocation2 + $0x228] sm:$0xff]
      %v2612 = vld [vmem:[#allocation2 + $0x230] sm:$0xff]
      %v2613 = vld [vmem:[#allocation2 + $0x238] sm:$0xff]
      %v2614 = vld [vmem:[#allocation2 + $0x240] sm:$0xff]
      %v2615 = vld [vmem:[#allocation2 + $0x248] sm:$0xff]
      %v2616 = vld [vmem:[#allocation2 + $0x250] sm:$0xff]
      %v2617 = vld [vmem:[#allocation2 + $0x258] sm:$0xff]
      %v2618 = vld [vmem:[#allocation2 + $0x260] sm:$0xff]
      %v2619 = vld [vmem:[#allocation2 + $0x268] sm:$0xff]
      %v2620 = vld [vmem:[#allocation2 + $0x270] sm:$0xff]
      %v2621 = vld [vmem:[#allocation2 + $0x278] sm:$0xff]
      %v2622 = vld [vmem:[#allocation2 + $0x280] sm:$0xff]
      %v2623 = vld [vmem:[#allocation2 + $0x288] sm:$0xff]
      %v2624 = vld [vmem:[#allocation2 + $0x290] sm:$0xff]
      %v2625 = vld [vmem:[#allocation2 + $0x298] sm:$0xff]
      %v2626 = vld [vmem:[#allocation2 + $0x2a0] sm:$0xff]
      %v2627 = vld [vmem:[#allocation2 + $0x2a8] sm:$0xff]
      %v2628 = vld [vmem:[#allocation2 + $0x2b0] sm:$0xff]
      %v2629 = vld [vmem:[#allocation2 + $0x2b8] sm:$0xff]
      %v2630 = vld [vmem:[#allocation2 + $0x2c0] sm:$0xff]
      %v2631 = vld [vmem:[#allocation2 + $0x2c8] sm:$0xff]
      %v2632 = vld [vmem:[#allocation2 + $0x2d0] sm:$0xff]
      %v2633 = vld [vmem:[#allocation2 + $0x2d8] sm:$0xff]
      %v2634 = vld [vmem:[#allocation2 + $0x2e0] sm:$0xff]
      %v2635 = vld [vmem:[#allocation2 + $0x2e8] sm:$0xff]
      %v2636 = vld [vmem:[#allocation2 + $0x2f0] sm:$0xff]
      %v2637 = vld [vmem:[#allocation2 + $0x2f8] sm:$0xff]
      %v2638 = vld [vmem:[#allocation2 + $0x300] sm:$0xff]
      %v2639 = vld [vmem:[#allocation2 + $0x308] sm:$0xff]
      %v2640 = vld [vmem:[#allocation2 + $0x310] sm:$0xff]
      %v2641 = vld [vmem:[#allocation2 + $0x318] sm:$0xff]
      %v2642 = vld [vmem:[#allocation2 + $0x320] sm:$0xff]
      %v2643 = vld [vmem:[#allocation2 + $0x328] sm:$0xff]
      %v2644 = vld [vmem:[#allocation2 + $0x330] sm:$0xff]
      %v2645 = vld [vmem:[#allocation2 + $0x338] sm:$0xff]
      %v2646 = vld [vmem:[#allocation2 + $0x340] sm:$0xff]
      %v2647 = vld [vmem:[#allocation2 + $0x348] sm:$0xff]
      %v2648 = vld [vmem:[#allocation2 + $0x350] sm:$0xff]
      %v2649 = vld [vmem:[#allocation2 + $0x358] sm:$0xff]
      %2651 = vset.pattern.permute.xlu0 1
      %2652 = vperm.xlu0 %2651, %v1410
      %v2653 = vpop.permute.xlu0 %2652
      %v2656 = vsel %vm1171, %v2541, 0
      %2658 = vmatpush.msra.mxu0 %v2602
      %2659 = vmatpush.msra.mxu0 %v2598
      %2660 = vmatpush.msra.mxu0 %v2594
      %2661 = vmatpush.msra.mxu0 %v2590
      %2662 = vmatpush.msra.mxu0 %v2586
      %2663 = vmatpush.msra.mxu0 %v2582
      %2664 = vmatpush.msra.mxu0 %v2578
      %2665 = vmatpush.msra.mxu0 %v2574
      %2666 = vmatpush.msra.mxu0 %v2570
      %2667 = vmatpush.msra.mxu0 %v2566
      %2668 = vmatpush.msra.mxu0 %v2562
      %2669 = vmatpush.msra.mxu0 %v2558
      %2670 = vmatpush.msra.mxu0 %v2554
      %2671 = vmatpush.msra.mxu0 %v2550
      %2672 = vmatpush.msra.mxu0 %v2546
      %2673 = vmatpush.msra.mxu0 %v2542
      %2674 = vmatmul.f32.gmra.mxu0 %v2540
      %v2675 = vpop.f32.mrf.mxu0
      %v2676 = vadd.f32 %v2653, %v2675
      %2677 = vdwg.mxu0
      %2678 = vmatpush.msra.mxu0 0.0
      %2679 = vmatpush.msra.mxu0 0.0
      %2680 = vmatpush.msra.mxu0 0.0
      %2681 = vmatpush.msra.mxu0 0.0
      %2682 = vmatpush.msra.mxu0 0.0
      %2683 = vmatpush.msra.mxu0 %v2646
      %2684 = vmatpush.msra.mxu0 %v2642
      %2685 = vmatpush.msra.mxu0 %v2638
      %2686 = vmatpush.msra.mxu0 %v2634
      %2687 = vmatpush.msra.mxu0 %v2630
      %2688 = vmatpush.msra.mxu0 %v2626
      %2689 = vmatpush.msra.mxu0 %v2622
      %2690 = vmatpush.msra.mxu0 %v2618
      %2691 = vmatpush.msra.mxu0 %v2614
      %2692 = vmatpush.msra.mxu0 %v2610
      %2693 = vmatpush.msra.mxu0 %v2606
      %2694 = vmatmul.f32.gmra.mxu0 %v2656
      %v2695 = vpop.f32.mrf.mxu0
      %v2696 = vadd.f32 %v2676, %v2695
      %2697 = vdwg.mxu0
      %2698 = vmatpush.msra.mxu0 %v2603
      %2699 = vmatpush.msra.mxu0 %v2599
      %2700 = vmatpush.msra.mxu0 %v2595
      %2701 = vmatpush.msra.mxu0 %v2591
      %2702 = vmatpush.msra.mxu0 %v2587
      %2703 = vmatpush.msra.mxu0 %v2583
      %2704 = vmatpush.msra.mxu0 %v2579
      %2705 = vmatpush.msra.mxu0 %v2575
      %2706 = vmatpush.msra.mxu0 %v2571
      %2707 = vmatpush.msra.mxu0 %v2567
      %2708 = vmatpush.msra.mxu0 %v2563
      %2709 = vmatpush.msra.mxu0 %v2559
      %2710 = vmatpush.msra.mxu0 %v2555
      %2711 = vmatpush.msra.mxu0 %v2551
      %2712 = vmatpush.msra.mxu0 %v2547
      %2713 = vmatpush.msra.mxu0 %v2543
      %2714 = vmatmul.f32.gmra.mxu0 %v2540
      %v2715 = vpop.f32.mrf.mxu0
      %v2716 = vadd.f32 %v2653, %v2715
      %2717 = vdwg.mxu0
      %2718 = vmatpush.msra.mxu0 0.0
      %2719 = vmatpush.msra.mxu0 0.0
      %2720 = vmatpush.msra.mxu0 0.0
      %2721 = vmatpush.msra.mxu0 0.0
      %2722 = vmatpush.msra.mxu0 0.0
      %2723 = vmatpush.msra.mxu0 %v2647
      %2724 = vmatpush.msra.mxu0 %v2643
      %2725 = vmatpush.msra.mxu0 %v2639
      %2726 = vmatpush.msra.mxu0 %v2635
      %2727 = vmatpush.msra.mxu0 %v2631
      %2728 = vmatpush.msra.mxu0 %v2627
      %2729 = vmatpush.msra.mxu0 %v2623
      %2730 = vmatpush.msra.mxu0 %v2619
      %2731 = vmatpush.msra.mxu0 %v2615
      %2732 = vmatpush.msra.mxu0 %v2611
      %2733 = vmatpush.msra.mxu0 %v2607
      %2734 = vmatmul.f32.gmra.mxu0 %v2656
      %v2735 = vpop.f32.mrf.mxu0
      %v2736 = vadd.f32 %v2716, %v2735
      %2737 = vdwg.mxu0
      %2738 = vmatpush.msra.mxu0 %v2604
      %2739 = vmatpush.msra.mxu0 %v2600
      %2740 = vmatpush.msra.mxu0 %v2596
      %2741 = vmatpush.msra.mxu0 %v2592
      %2742 = vmatpush.msra.mxu0 %v2588
      %2743 = vmatpush.msra.mxu0 %v2584
      %2744 = vmatpush.msra.mxu0 %v2580
      %2745 = vmatpush.msra.mxu0 %v2576
      %2746 = vmatpush.msra.mxu0 %v2572
      %2747 = vmatpush.msra.mxu0 %v2568
      %2748 = vmatpush.msra.mxu0 %v2564
      %2749 = vmatpush.msra.mxu0 %v2560
      %2750 = vmatpush.msra.mxu0 %v2556
      %2751 = vmatpush.msra.mxu0 %v2552
      %2752 = vmatpush.msra.mxu0 %v2548
      %2753 = vmatpush.msra.mxu0 %v2544
      %2754 = vmatmul.f32.gmra.mxu0 %v2540
      %v2755 = vpop.f32.mrf.mxu0
      %v2756 = vadd.f32 %v2653, %v2755
      %2757 = vdwg.mxu0
      %2758 = vmatpush.msra.mxu0 0.0
      %2759 = vmatpush.msra.mxu0 0.0
      %2760 = vmatpush.msra.mxu0 0.0
      %2761 = vmatpush.msra.mxu0 0.0
      %2762 = vmatpush.msra.mxu0 0.0
      %2763 = vmatpush.msra.mxu0 %v2648
      %2764 = vmatpush.msra.mxu0 %v2644
      %2765 = vmatpush.msra.mxu0 %v2640
      %2766 = vmatpush.msra.mxu0 %v2636
      %2767 = vmatpush.msra.mxu0 %v2632
      %2768 = vmatpush.msra.mxu0 %v2628
      %2769 = vmatpush.msra.mxu0 %v2624
      %2770 = vmatpush.msra.mxu0 %v2620
      %2771 = vmatpush.msra.mxu0 %v2616
      %2772 = vmatpush.msra.mxu0 %v2612
      %2773 = vmatpush.msra.mxu0 %v2608
      %2774 = vmatmul.f32.gmra.mxu0 %v2656
      %v2775 = vpop.f32.mrf.mxu0
      %v2776 = vadd.f32 %v2756, %v2775
      %2777 = vdwg.mxu0
      %2778 = vmatpush.msra.mxu0 %v2605
      %2779 = vmatpush.msra.mxu0 %v2601
      %2780 = vmatpush.msra.mxu0 %v2597
      %2781 = vmatpush.msra.mxu0 %v2593
      %2782 = vmatpush.msra.mxu0 %v2589
      %2783 = vmatpush.msra.mxu0 %v2585
      %2784 = vmatpush.msra.mxu0 %v2581
      %2785 = vmatpush.msra.mxu0 %v2577
      %2786 = vmatpush.msra.mxu0 %v2573
      %2787 = vmatpush.msra.mxu0 %v2569
      %2788 = vmatpush.msra.mxu0 %v2565
      %2789 = vmatpush.msra.mxu0 %v2561
      %2790 = vmatpush.msra.mxu0 %v2557
      %2791 = vmatpush.msra.mxu0 %v2553
      %2792 = vmatpush.msra.mxu0 %v2549
      %2793 = vmatpush.msra.mxu0 %v2545
      %2794 = vmatmul.f32.gmra.mxu0 %v2540
      %v2795 = vpop.f32.mrf.mxu0
      %v2796 = vadd.f32 %v2653, %v2795
      %2797 = vdwg.mxu0
      %2798 = vmatpush.msra.mxu0 0.0
      %2799 = vmatpush.msra.mxu0 0.0
      %2800 = vmatpush.msra.mxu0 0.0
      %2801 = vmatpush.msra.mxu0 0.0
      %2802 = vmatpush.msra.mxu0 0.0
      %2803 = vmatpush.msra.mxu0 %v2649
      %2804 = vmatpush.msra.mxu0 %v2645
      %2805 = vmatpush.msra.mxu0 %v2641
      %2806 = vmatpush.msra.mxu0 %v2637
      %2807 = vmatpush.msra.mxu0 %v2633
      %2808 = vmatpush.msra.mxu0 %v2629
      %2809 = vmatpush.msra.mxu0 %v2625
      %2810 = vmatpush.msra.mxu0 %v2621
      %2811 = vmatpush.msra.mxu0 %v2617
      %2812 = vmatpush.msra.mxu0 %v2613
      %2813 = vmatpush.msra.mxu0 %v2609
      %2814 = vmatmul.f32.gmra.mxu0 %v2656
      %v2815 = vpop.f32.mrf.mxu0
      %v2816 = vadd.f32 %v2796, %v2815
      %2817 = vdwg.mxu0
      %v2818 = vadd.f32 %v2696, %v239
      %v2819 = vadd.f32 %v2736, %v240
      %v2820 = vadd.f32 %v2776, %v241
      %v2821 = vadd.f32 %v2816, %v242
      %v2822 = vmax.f32 %v2818, 0.0
      %v2823 = vmax.f32 %v2819, 0.0
      %v2824 = vmax.f32 %v2820, 0.0
      %v2825 = vmax.f32 %v2821, 0.0
      %2826 = vst [vmem:[%s238] sm:$0xff] %v2822
      %2827 = vst [vmem:[%s238 + $0x8] sm:$0xff] %v2823
      %2828 = vst [vmem:[%s238 + $0x10] sm:$0xff] %v2824
      %2829 = vst [vmem:[%s238 + $0x18] sm:$0xff] %v2825
      %p2830 = scmp.lt.s32.totalorder %s16, 1
      %s2831 = scalar_select %p2830, %s16, 1
      %s2832 = smul.addr %s2831, 4
      %s2833 = smul.addr %s2832, 8
      %s2834 = scalar_lea.vmem %s5, %s2833
      // Predicated region
      $region41: #{basic_block_forward.1} parent=39 // pred_check
        %p2835 = pneg %p149
      $region42: #{basic_block_forward.1} parent=39 // pred_check_branch
        %2837 = sbr.rel (%p2835) target = $region44
      $region43: #{basic_block_forward.1} parent=39 // pred_region
        _
      $region44: #{basic_block_forward.1} parent=39 // pred_fallthru
        _
    $region40: #{basic_block_forward.1} parent=5 // pred_fallthru
      _
    %p2838 = scmp.le.s32.totalorder 2, %s11
    // Predicated region
    $region45: #{basic_block_forward.1} parent=5 // pred_check
      %p2839 = pneg %p2838
    $region46: #{basic_block_forward.1} parent=5 // pred_check_branch
      %2841 = sbr.rel (%p2839) target = $region48
    $region47: #{basic_block_forward.1} parent=5 // pred_region
      %s2842 = ssub.s32 %s11, 2
      // Predicated region
      $region49: #{basic_block_forward.1} parent=47 // pred_check
        %p2843 = pneg %p155
      $region50: #{basic_block_forward.1} parent=47 // pred_check_branch
        %2845 = sbr.rel (%p2843) target = $region52
      $region51: #{basic_block_forward.1} parent=47 // pred_region
        %p2846 = scmp.lt.s32.totalorder %s17, 1
        %s2847 = scalar_select %p2846, %s17, 1
        %s2848 = smul.addr %s2847, 4
        %s2849 = smul.addr %s2848, 8
        %s2850 = scalar_lea.vmem %s5, %s2849
      $region52: #{basic_block_forward.1} parent=47 // pred_fallthru
        _
    $region48: #{basic_block_forward.1} parent=5 // pred_fallthru
      _
  $region6: #{basic_block_forward.1} parent=0 // loop_footer
    %s15 = sadd.s32 1, %s11
  $region7: #{basic_block_forward.1} parent=0 // loop_footer_branch
    %10 = sbr.rel target = $region3
  $region8: #{basic_block_forward.1} parent=0 // loop_exit
    _

</llo_original>
